<compile_context>
chip_gen: v7x
topology: tpu7x:2x2x1
jax: 0.10.0
libtpu: 0.0.40
codegen_flags: <defaults>
</compile_context>

<pallas_src>
import math
import jax
import jax.numpy as jnp
from jax import lax
from jax.experimental import pallas as pl
from jax.experimental.pallas import tpu as pltpu


def _round_up(x, m):
    return ((x + m - 1) // m) * m


# ----------------------------------------------------------------------------
# Fused multi-layer LSTM kernel factory.
#   grid = (seq_pad // TS,)  -- sequential ("arbitrary") recurrence axis.
#   x_ref   : (TS*B, IN_P)        bf16   time-major input block (flat rows)
#   wih_ref : (L, IN_MAX, 4*H_P)  bf16   W_ih^T per layer (gate-slot aligned)
#   whh_ref : (L, H_P, 4*H_P)     bf16   W_hh^T per layer
#   b_ref   : (L, 1, 4*H_P)       f32    b_ih + b_hh per layer
#   out_ref : (TS*B, H_P)         f32    last-layer h_t block
#   hN/cN   : (L, B, H_P)         f32    resident; written on last grid step
#   h_sc/c_sc : (L, B, H_P) f32 carries across grid steps
#   act_sc  : (TS*B, H_P) bf16 inter-layer activation buffer
#   ihg_sc  : (TS*B, 4*H_P) f32 precomputed input-to-hidden gates (+bias)
# ----------------------------------------------------------------------------
def make_encoder_kernel(num_layers, TS, B, IN_P, H_P, seq_real, seq_pad):
    need_mask = (seq_pad != seq_real)
    H = H_P

    def kernel(x_ref, wih_ref, whh_ref, b_ref, out_ref, hN_ref, cN_ref,
               h_sc, c_sc, act_sc, ihg_sc):
        t = pl.program_id(0)

        @pl.when(t == 0)
        def _():
            h_sc[...] = jnp.zeros_like(h_sc)
            c_sc[...] = jnp.zeros_like(c_sc)

        for l in range(num_layers):
            # ---- batched input-to-hidden gates for all TS timesteps --------
            if l == 0:
                xin = x_ref[...]                       # (TS*B, IN_P) bf16
                k_rows = IN_P
            else:
                xin = act_sc[...]                      # (TS*B, H_P) bf16
                k_rows = H_P
            w_in = wih_ref[l, :k_rows, :]              # (k_rows, 4H_P) bf16
            ihg_sc[...] = (jnp.dot(xin, w_in,
                                   preferred_element_type=jnp.float32)
                           + b_ref[l])                 # bias folded in once

            # ---- serial recurrence: only the small W_hh matmul remains -----
            whh = whh_ref[l]                           # (H_P, 4H_P) bf16
            h = h_sc[l]                                # f32 register carries
            c = c_sc[l]
            for ts in range(TS):                       # fully unrolled
                gates = ihg_sc[pl.ds(ts * B, B), :] + jnp.dot(
                    h.astype(whh.dtype), whh,
                    preferred_element_type=jnp.float32)

                i = jax.nn.sigmoid(gates[:, 0 * H:1 * H])
                f = jax.nn.sigmoid(gates[:, 1 * H:2 * H])
                g = jnp.tanh(gates[:, 2 * H:3 * H])
                o = jax.nn.sigmoid(gates[:, 3 * H:4 * H])

                c_new = f * c + i * g
                h_new = o * jnp.tanh(c_new)

                if need_mask:                          # static: only if seq padded
                    valid = (t * TS + ts) < seq_real
                    c_new = jnp.where(valid, c_new, c)
                    h_new = jnp.where(valid, h_new, h)

                c = c_new
                h = h_new

                if l == num_layers - 1:
                    out_ref[pl.ds(ts * B, B), :] = h_new.astype(out_ref.dtype)
                else:
                    act_sc[pl.ds(ts * B, B), :] = h_new.astype(act_sc.dtype)

            h_sc[l] = h                                # one write per layer
            c_sc[l] = c

        # hN/cN blocks are resident (constant index_map): write only at the end.
        @pl.when(t == pl.num_programs(0) - 1)
        def _():
            hN_ref[...] = h_sc[...]
            cN_ref[...] = c_sc[...]

    return kernel


# ----------------------------------------------------------------------------
# Parameter packing: separate W_ih / W_hh, padded, gate-slot-aligned, bf16.
# Padded rows/cols and bias lanes are zero => padding is numerically inert.
# ----------------------------------------------------------------------------
def pack_params(params, input_size, hidden_size):
    H = hidden_size
    IN_P = _round_up(input_size, 128)
    H_P = _round_up(H, 128)
    IN_MAX = max(IN_P, H_P)
    G = 4 * H_P

    wih_blocks, whh_blocks, b_blocks = [], [], []
    for (w_ih, w_hh, b) in params:
        in_l = w_ih.shape[1]               # input_size for layer 0, else H
        wih_t = jnp.transpose(w_ih)        # (in_l, 4H)
        whh_t = jnp.transpose(w_hh)        # (H,   4H)
        wi = jnp.zeros((IN_MAX, G), jnp.float32)
        wh = jnp.zeros((H_P, G), jnp.float32)
        bl = jnp.zeros((1, G), jnp.float32)
        for k in range(4):                 # place each gate at a 128-lane slot
            wi = wi.at[:in_l, k * H_P:k * H_P + H].set(wih_t[:, k * H:(k + 1) * H])
            wh = wh.at[:H, k * H_P:k * H_P + H].set(whh_t[:, k * H:(k + 1) * H])
            bl = bl.at[:, k * H_P:k * H_P + H].set(b[k * H:(k + 1) * H][None, :])
        wih_blocks.append(wi)
        whh_blocks.append(wh)
        b_blocks.append(bl)

    wih_all = jnp.stack(wih_blocks, axis=0).astype(jnp.bfloat16)   # (L, IN_MAX, G)
    whh_all = jnp.stack(whh_blocks, axis=0).astype(jnp.bfloat16)   # (L, H_P, G)
    b_all = jnp.stack(b_blocks, axis=0)                            # (L, 1, G) f32
    return wih_all, whh_all, b_all, IN_P, H_P, IN_MAX, G


# ----------------------------------------------------------------------------
# Encoder forward (mirrors Encoder.forward: zero h_0/c_0, stacked layers).
# ----------------------------------------------------------------------------
def encoder_forward(x, params, hidden_size, num_layers):
    # x: (batch, seq, input_size), batch_first like the PyTorch module.
    batch, seq, input_size = x.shape
    H = hidden_size
    B = _round_up(batch, 8)
    TS = min(seq, 32)                       # timesteps per grid step (cap 32)
    seq_pad = _round_up(seq, TS)            # pad tail instead of shrinking TS

    wih_all, whh_all, b_all, IN_P, H_P, IN_MAX, G = pack_params(
        params, input_size, H)

    # Pad + transpose to flat time-major bf16 rows (single fused XLA copy).
    x_tm = jnp.transpose(x, (1, 0, 2)).astype(jnp.bfloat16)        # (seq, batch, in)
    x_p = jnp.zeros((seq_pad, B, IN_P), jnp.bfloat16)
    x_p = x_p.at[:seq, :batch, :input_size].set(x_tm)
    x_p = x_p.reshape(seq_pad * B, IN_P)                           # flat rows

    kernel = make_encoder_kernel(num_layers, TS, B, IN_P, H_P, seq, seq_pad)

    grid_spec = pltpu.PrefetchScalarGridSpec(
        num_scalar_prefetch=0,
        grid=(seq_pad // TS,),
        in_specs=[
            pl.BlockSpec((TS * B, IN_P), lambda t: (t, 0)),            # input block
            pl.BlockSpec((num_layers, IN_MAX, G), lambda t: (0, 0, 0)),  # W_ih (resident)
            pl.BlockSpec((num_layers, H_P, G), lambda t: (0, 0, 0)),     # W_hh (resident)
            pl.BlockSpec((num_layers, 1, G), lambda t: (0, 0, 0)),       # bias (resident)
        ],
        out_specs=[
            pl.BlockSpec((TS * B, H_P), lambda t: (t, 0)),               # output block
            pl.BlockSpec((num_layers, B, H_P), lambda t: (0, 0, 0)),     # h_N (resident)
            pl.BlockSpec((num_layers, B, H_P), lambda t: (0, 0, 0)),     # c_N (resident)
        ],
        scratch_shapes=[
            pltpu.VMEM((num_layers, B, H_P), jnp.float32),   # h carry
            pltpu.VMEM((num_layers, B, H_P), jnp.float32),   # c carry
            pltpu.VMEM((TS * B, H_P), jnp.bfloat16),         # inter-layer activations
            pltpu.VMEM((TS * B, G), jnp.float32),            # batched ih gates (+bias)
        ],
    )

    out_shapes = (
        jax.ShapeDtypeStruct((seq_pad * B, H_P), jnp.float32),
        jax.ShapeDtypeStruct((num_layers, B, H_P), jnp.float32),
        jax.ShapeDtypeStruct((num_layers, B, H_P), jnp.float32),
    )

    out_flat, hN, cN = pl.pallas_call(
        kernel,
        out_shape=out_shapes,
        grid_spec=grid_spec,
        compiler_params=pltpu.CompilerParams(
            dimension_semantics=("arbitrary",)),   # sequential recurrence
    )(x_p, wih_all, whh_all, b_all)

    # TODO(synk): inter-layer dropout (train-mode nn.LSTM dropout) omitted; inference / drop_out=0.0 path.
    out_tm = out_flat.reshape(seq_pad, B, H_P)
    output = jnp.transpose(out_tm[:seq, :batch, :H], (1, 0, 2))    # (batch, seq, H)
    hidden = hN[:, :batch, :H]                                     # (L, batch, H)
    cell = cN[:, :batch, :H]
    return output, (hidden, cell)


# ----------------------------------------------------------------------------
# Deterministic parameter init matching Encoder.init_weights shapes/recipes.
# ----------------------------------------------------------------------------
def xavier_uniform(key, shape):
    fan_out, fan_in = shape
    bound = math.sqrt(6.0 / (fan_in + fan_out))
    return jax.random.uniform(key, shape, jnp.float32, -bound, bound)


def orthogonal(key, shape):
    rows, cols = shape
    a = jax.random.normal(key, (max(rows, cols), min(rows, cols)), jnp.float32)
    q, r = jnp.linalg.qr(a)
    q = q * jnp.sign(jnp.diag(r))[None, :]
    return q if rows >= cols else q.T


def init_encoder_params(key, input_size, hidden_size, num_layers):
    params = []
    for l in range(num_layers):
        in_size = input_size if l == 0 else hidden_size
        key, k1, k2 = jax.random.split(key, 3)
        w_ih = xavier_uniform(k1, (4 * hidden_size, in_size))     # weight_ih_l{l}
        w_hh = orthogonal(k2, (4 * hidden_size, hidden_size))     # weight_hh_l{l}
        b = jnp.zeros((4 * hidden_size,), jnp.float32)            # b_ih + b_hh == 0
        params.append((w_ih, w_hh, b))
    return params


# ----------------------------------------------------------------------------
# Pure-JAX reference (lax.scan).  matmul_dtype=bf16 matches the kernel's
# compute recipe; matmul_dtype=f32 matches the PyTorch semantics.
# ----------------------------------------------------------------------------
def lstm_layer_ref(x_tm, w_ih, w_hh, b, H, matmul_dtype):
    batch = x_tm.shape[1]
    w_ih_t = jnp.transpose(w_ih).astype(matmul_dtype)
    w_hh_t = jnp.transpose(w_hh).astype(matmul_dtype)

    def step(carry, x_t):
        h, c = carry
        gates = (jnp.dot(x_t.astype(matmul_dtype), w_ih_t,
                         preferred_element_type=jnp.float32)
                 + jnp.dot(h.astype(matmul_dtype), w_hh_t,
                           preferred_element_type=jnp.float32)
                 + b)
        i = jax.nn.sigmoid(gates[:, 0 * H:1 * H])
        f = jax.nn.sigmoid(gates[:, 1 * H:2 * H])
        g = jnp.tanh(gates[:, 2 * H:3 * H])
        o = jax.nn.sigmoid(gates[:, 3 * H:4 * H])
        c = f * c + i * g
        h = o * jnp.tanh(c)
        return (h, c), h

    init = (jnp.zeros((batch, H), jnp.float32), jnp.zeros((batch, H), jnp.float32))
    (hN, cN), outs = lax.scan(step, init, x_tm)
    return outs, hN, cN


def encoder_forward_ref(x, params, hidden_size, num_layers, matmul_dtype=jnp.float32):
    x_tm = jnp.transpose(x, (1, 0, 2))
    hs, cs = [], []
    layer_in = x_tm
    for l in range(num_layers):
        w_ih, w_hh, b = params[l]
        out_tm, hN, cN = lstm_layer_ref(layer_in, w_ih, w_hh, b, hidden_size, matmul_dtype)
        hs.append(hN)
        cs.append(cN)
        layer_in = out_tm
    return (jnp.transpose(layer_in, (1, 0, 2)),
            (jnp.stack(hs, axis=0), jnp.stack(cs, axis=0)))


if __name__ == "__main__":
    # Small shapes consistent with the module: encoder_input_size=16,
    # hidden_size=32, num_layers=2, drop_out=0.0, batch=2, seq=8.
    encoder_input_size = 16
    hidden_size = 32
    num_layers = 2
    batch, seq = 2, 8

    key = jax.random.PRNGKey(0)
    kx, kp = jax.random.split(key)
    x = jax.random.normal(kx, (batch, seq, encoder_input_size), jnp.float32)
    params = init_encoder_params(kp, encoder_input_size, hidden_size, num_layers)

    fwd = jax.jit(encoder_forward, static_argnums=(2, 3))
    output, (hidden, cell) = fwd(x, params, hidden_size, num_layers)
    jax.block_until_ready((output, hidden, cell))

    assert output.shape == (batch, seq, hidden_size)
    assert hidden.shape == (num_layers, batch, hidden_size)
    assert cell.shape == (num_layers, batch, hidden_size)

    # Tight check vs a reference that uses the same bf16-matmul / f32-accum recipe.
    out_bf, (hid_bf, cell_bf) = encoder_forward_ref(
        x, params, hidden_size, num_layers, matmul_dtype=jnp.bfloat16)
    assert jnp.allclose(output, out_bf, atol=1e-3, rtol=1e-3)
    assert jnp.allclose(hidden, hid_bf, atol=1e-3, rtol=1e-3)
    assert jnp.allclose(cell, cell_bf, atol=1e-3, rtol=1e-3)

    # Semantic check vs the full-f32 PyTorch-equivalent recipe (bf16 MXU tolerance).
    out_f32, (hid_f32, cell_f32) = encoder_forward_ref(
        x, params, hidden_size, num_layers, matmul_dtype=jnp.float32)
    assert jnp.allclose(output, out_f32, atol=5e-2, rtol=5e-2)
    assert jnp.allclose(hidden, hid_f32, atol=5e-2, rtol=5e-2)
    assert jnp.allclose(cell, cell_f32, atol=5e-2, rtol=5e-2)

    print("KERNEL_OK")
</pallas_src>

<mosaic_0001>
module attributes {stable_mosaic.version = 11 : i64} {
  func.func @kernel(%arg0: i32, %arg1: memref<64x128xbf16, #tpu.memory_space<vmem>>, %arg2: memref<2x128x512xbf16, #tpu.memory_space<vmem>>, %arg3: memref<2x128x512xbf16, #tpu.memory_space<vmem>>, %arg4: memref<2x1x512xf32, #tpu.memory_space<vmem>>, %arg5: memref<64x128xf32, #tpu.memory_space<vmem>>, %arg6: memref<2x8x128xf32, #tpu.memory_space<vmem>>, %arg7: memref<2x8x128xf32, #tpu.memory_space<vmem>>, %arg8: memref<2x8x128xf32, #tpu.memory_space<vmem>>, %arg9: memref<2x8x128xf32, #tpu.memory_space<vmem>>, %arg10: memref<64x128xbf16, #tpu.memory_space<vmem>>, %arg11: memref<64x512xf32, #tpu.memory_space<vmem>>) attributes {dimension_semantics = [#tpu.dimension_semantics<arbitrary>], iteration_bounds = array<i64: 1>, scalar_prefetch = 0 : i64, scratch_operands = 4 : i64, tpu.core_type = #tpu.core_type<tc>, window_params = [{transform_indices = @transform_0, window_bounds = array<i64: 64, 128>}, {pipeline_mode = #tpu.pipeline_mode<synchronous>, transform_indices = @transform_1, window_bounds = array<i64: 2, 128, 512>}, {pipeline_mode = #tpu.pipeline_mode<synchronous>, transform_indices = @transform_2, window_bounds = array<i64: 2, 128, 512>}, {pipeline_mode = #tpu.pipeline_mode<synchronous>, transform_indices = @transform_3, window_bounds = array<i64: 2, 1, 512>}, {transform_indices = @transform_4, window_bounds = array<i64: 64, 128>}, {pipeline_mode = #tpu.pipeline_mode<synchronous>, transform_indices = @transform_5, window_bounds = array<i64: 2, 8, 128>}, {pipeline_mode = #tpu.pipeline_mode<synchronous>, transform_indices = @transform_6, window_bounds = array<i64: 2, 8, 128>}]} {
    %c0_i32 = arith.constant 0 : i32
    %0 = arith.cmpi eq, %arg0, %c0_i32 : i32
    %1 = arith.extui %0 : i1 to i32
    %c0_i32_0 = arith.constant 0 : i32
    %2 = arith.cmpi ne, %1, %c0_i32_0 : i32
    scf.if %2 {
      %cst_173 = arith.constant 0.000000e+00 : f32
      %536 = vector.broadcast %cst_173 : f32 to vector<2x8x128xf32>
      %c0_174 = arith.constant 0 : index
      %c0_175 = arith.constant 0 : index
      %c0_176 = arith.constant 0 : index
      %537 = vector.load %arg8[%c0_174, %c0_175, %c0_176] : memref<2x8x128xf32, #tpu.memory_space<vmem>>, vector<2x8x128xf32>
      tpu.vector_store %arg8[%c0_174, %c0_175, %c0_176], %536 {strides = array<i32>} : memref<2x8x128xf32, #tpu.memory_space<vmem>>, vector<2x8x128xf32>,
      %cst_177 = arith.constant 0.000000e+00 : f32
      %538 = vector.broadcast %cst_177 : f32 to vector<2x8x128xf32>
      %c0_178 = arith.constant 0 : index
      %c0_179 = arith.constant 0 : index
      %c0_180 = arith.constant 0 : index
      %539 = vector.load %arg9[%c0_178, %c0_179, %c0_180] : memref<2x8x128xf32, #tpu.memory_space<vmem>>, vector<2x8x128xf32>
      tpu.vector_store %arg9[%c0_178, %c0_179, %c0_180], %538 {strides = array<i32>} : memref<2x8x128xf32, #tpu.memory_space<vmem>>, vector<2x8x128xf32>,
    } else {
    }
    %c0 = arith.constant 0 : index
    %c0_1 = arith.constant 0 : index
    %3 = vector.load %arg1[%c0, %c0_1] : memref<64x128xbf16, #tpu.memory_space<vmem>>, vector<64x128xbf16>
    %c0_2 = arith.constant 0 : index
    %c0_3 = arith.constant 0 : index
    %c0_4 = arith.constant 0 : index
    %4 = vector.load %arg2[%c0_2, %c0_3, %c0_4] : memref<2x128x512xbf16, #tpu.memory_space<vmem>>, vector<1x128x512xbf16>
    %5 = vector.shape_cast %4 : vector<1x128x512xbf16> to vector<128x512xbf16>
    %cst = arith.constant dense<0.000000e+00> : vector<64x512xf32>
    %6 = tpu.matmul %3, %5, %cst {dimension_numbers = #tpu.dot_dimension_numbers<[1], [0], [0], [1], [0, 0, 1, 1], [], []>} : vector<64x128xbf16>, vector<128x512xbf16>, vector<64x512xf32> -> vector<64x512xf32>
    %c0_5 = arith.constant 0 : index
    %c0_6 = arith.constant 0 : index
    %c0_7 = arith.constant 0 : index
    %7 = vector.load %arg4[%c0_5, %c0_6, %c0_7] : memref<2x1x512xf32, #tpu.memory_space<vmem>>, vector<1x1x512xf32>
    %8 = vector.shape_cast %7 : vector<1x1x512xf32> to vector<1x512xf32>
    %9 = vector.broadcast %8 : vector<1x512xf32> to vector<64x512xf32>
    %10 = arith.addf %6, %9 : vector<64x512xf32>
    %c0_8 = arith.constant 0 : index
    %c0_9 = arith.constant 0 : index
    %11 = vector.load %arg11[%c0_8, %c0_9] : memref<64x512xf32, #tpu.memory_space<vmem>>, vector<64x512xf32>
    tpu.vector_store %arg11[%c0_8, %c0_9], %10 {strides = array<i32>} : memref<64x512xf32, #tpu.memory_space<vmem>>, vector<64x512xf32>,
    %c0_10 = arith.constant 0 : index
    %c0_11 = arith.constant 0 : index
    %c0_12 = arith.constant 0 : index
    %12 = vector.load %arg3[%c0_10, %c0_11, %c0_12] : memref<2x128x512xbf16, #tpu.memory_space<vmem>>, vector<1x128x512xbf16>
    %13 = vector.shape_cast %12 : vector<1x128x512xbf16> to vector<128x512xbf16>
    %c0_13 = arith.constant 0 : index
    %c0_14 = arith.constant 0 : index
    %c0_15 = arith.constant 0 : index
    %14 = vector.load %arg8[%c0_13, %c0_14, %c0_15] : memref<2x8x128xf32, #tpu.memory_space<vmem>>, vector<1x8x128xf32>
    %15 = vector.shape_cast %14 : vector<1x8x128xf32> to vector<8x128xf32>
    %c0_16 = arith.constant 0 : index
    %c0_17 = arith.constant 0 : index
    %c0_18 = arith.constant 0 : index
    %16 = vector.load %arg9[%c0_16, %c0_17, %c0_18] : memref<2x8x128xf32, #tpu.memory_space<vmem>>, vector<1x8x128xf32>
    %17 = vector.shape_cast %16 : vector<1x8x128xf32> to vector<8x128xf32>
    %c0_19 = arith.constant 0 : index
    %c0_20 = arith.constant 0 : index
    %18 = vector.load %arg11[%c0_19, %c0_20] : memref<64x512xf32, #tpu.memory_space<vmem>>, vector<8x512xf32>
    %19 = arith.truncf %15 : vector<8x128xf32> to vector<8x128xbf16>
    %cst_21 = arith.constant dense<0.000000e+00> : vector<8x512xf32>
    %20 = tpu.matmul %19, %13, %cst_21 {dimension_numbers = #tpu.dot_dimension_numbers<[1], [0], [0], [1], [0, 0, 1, 1], [], []>} : vector<8x128xbf16>, vector<128x512xbf16>, vector<8x512xf32> -> vector<8x512xf32>
    %21 = arith.addf %18, %20 : vector<8x512xf32>
    %22 = vector.extract_strided_slice %21 {offsets = [0, 0], sizes = [8, 128], strides = [1, 1]} : vector<8x512xf32> to vector<8x128xf32>
    %23 = arith.negf %22 : vector<8x128xf32>
    %24 = math.exp %23 : vector<8x128xf32>
    %cst_22 = arith.constant 1.000000e+00 : f32
    %25 = vector.broadcast %cst_22 : f32 to vector<8x128xf32>
    %26 = arith.addf %25, %24 : vector<8x128xf32>
    %27 = arith.divf %25, %26 : vector<8x128xf32>
    %28 = vector.extract_strided_slice %21 {offsets = [0, 128], sizes = [8, 128], strides = [1, 1]} : vector<8x512xf32> to vector<8x128xf32>
    %29 = arith.negf %28 : vector<8x128xf32>
    %30 = math.exp %29 : vector<8x128xf32>
    %cst_23 = arith.constant 1.000000e+00 : f32
    %31 = vector.broadcast %cst_23 : f32 to vector<8x128xf32>
    %32 = arith.addf %31, %30 : vector<8x128xf32>
    %33 = arith.divf %31, %32 : vector<8x128xf32>
    %34 = vector.extract_strided_slice %21 {offsets = [0, 256], sizes = [8, 128], strides = [1, 1]} : vector<8x512xf32> to vector<8x128xf32>
    %35 = math.tanh %34 : vector<8x128xf32>
    %36 = vector.extract_strided_slice %21 {offsets = [0, 384], sizes = [8, 128], strides = [1, 1]} : vector<8x512xf32> to vector<8x128xf32>
    %37 = arith.negf %36 : vector<8x128xf32>
    %38 = math.exp %37 : vector<8x128xf32>
    %cst_24 = arith.constant 1.000000e+00 : f32
    %39 = vector.broadcast %cst_24 : f32 to vector<8x128xf32>
    %40 = arith.addf %39, %38 : vector<8x128xf32>
    %41 = arith.divf %39, %40 : vector<8x128xf32>
    %42 = arith.mulf %33, %17 : vector<8x128xf32>
    %43 = arith.mulf %27, %35 : vector<8x128xf32>
    %44 = arith.addf %42, %43 : vector<8x128xf32>
    %45 = math.tanh %44 : vector<8x128xf32>
    %46 = arith.mulf %41, %45 : vector<8x128xf32>
    %47 = arith.truncf %46 : vector<8x128xf32> to vector<8x128xbf16>
    %c0_25 = arith.constant 0 : index
    %c0_26 = arith.constant 0 : index
    %48 = vector.load %arg10[%c0_25, %c0_26] : memref<64x128xbf16, #tpu.memory_space<vmem>>, vector<8x128xbf16>
    tpu.vector_store %arg10[%c0_25, %c0_26], %47 {strides = array<i32>} : memref<64x128xbf16, #tpu.memory_space<vmem>>, vector<8x128xbf16>,
    %c8 = arith.constant 8 : index
    %c0_27 = arith.constant 0 : index
    %49 = vector.load %arg11[%c8, %c0_27] : memref<64x512xf32, #tpu.memory_space<vmem>>, vector<8x512xf32>
    %50 = arith.truncf %46 : vector<8x128xf32> to vector<8x128xbf16>
    %cst_28 = arith.constant dense<0.000000e+00> : vector<8x512xf32>
    %51 = tpu.matmul %50, %13, %cst_28 {dimension_numbers = #tpu.dot_dimension_numbers<[1], [0], [0], [1], [0, 0, 1, 1], [], []>} : vector<8x128xbf16>, vector<128x512xbf16>, vector<8x512xf32> -> vector<8x512xf32>
    %52 = arith.addf %49, %51 : vector<8x512xf32>
    %53 = vector.extract_strided_slice %52 {offsets = [0, 0], sizes = [8, 128], strides = [1, 1]} : vector<8x512xf32> to vector<8x128xf32>
    %54 = arith.negf %53 : vector<8x128xf32>
    %55 = math.exp %54 : vector<8x128xf32>
    %cst_29 = arith.constant 1.000000e+00 : f32
    %56 = vector.broadcast %cst_29 : f32 to vector<8x128xf32>
    %57 = arith.addf %56, %55 : vector<8x128xf32>
    %58 = arith.divf %56, %57 : vector<8x128xf32>
    %59 = vector.extract_strided_slice %52 {offsets = [0, 128], sizes = [8, 128], strides = [1, 1]} : vector<8x512xf32> to vector<8x128xf32>
    %60 = arith.negf %59 : vector<8x128xf32>
    %61 = math.exp %60 : vector<8x128xf32>
    %cst_30 = arith.constant 1.000000e+00 : f32
    %62 = vector.broadcast %cst_30 : f32 to vector<8x128xf32>
    %63 = arith.addf %62, %61 : vector<8x128xf32>
    %64 = arith.divf %62, %63 : vector<8x128xf32>
    %65 = vector.extract_strided_slice %52 {offsets = [0, 256], sizes = [8, 128], strides = [1, 1]} : vector<8x512xf32> to vector<8x128xf32>
    %66 = math.tanh %65 : vector<8x128xf32>
    %67 = vector.extract_strided_slice %52 {offsets = [0, 384], sizes = [8, 128], strides = [1, 1]} : vector<8x512xf32> to vector<8x128xf32>
    %68 = arith.negf %67 : vector<8x128xf32>
    %69 = math.exp %68 : vector<8x128xf32>
    %cst_31 = arith.constant 1.000000e+00 : f32
    %70 = vector.broadcast %cst_31 : f32 to vector<8x128xf32>
    %71 = arith.addf %70, %69 : vector<8x128xf32>
    %72 = arith.divf %70, %71 : vector<8x128xf32>
    %73 = arith.mulf %64, %44 : vector<8x128xf32>
    %74 = arith.mulf %58, %66 : vector<8x128xf32>
    %75 = arith.addf %73, %74 : vector<8x128xf32>
    %76 = math.tanh %75 : vector<8x128xf32>
    %77 = arith.mulf %72, %76 : vector<8x128xf32>
    %78 = arith.truncf %77 : vector<8x128xf32> to vector<8x128xbf16>
    %c8_32 = arith.constant 8 : index
    %c0_33 = arith.constant 0 : index
    %79 = vector.load %arg10[%c8_32, %c0_33] : memref<64x128xbf16, #tpu.memory_space<vmem>>, vector<8x128xbf16>
    tpu.vector_store %arg10[%c8_32, %c0_33], %78 {strides = array<i32>} : memref<64x128xbf16, #tpu.memory_space<vmem>>, vector<8x128xbf16>,
    %c16 = arith.constant 16 : index
    %c0_34 = arith.constant 0 : index
    %80 = vector.load %arg11[%c16, %c0_34] : memref<64x512xf32, #tpu.memory_space<vmem>>, vector<8x512xf32>
    %81 = arith.truncf %77 : vector<8x128xf32> to vector<8x128xbf16>
    %cst_35 = arith.constant dense<0.000000e+00> : vector<8x512xf32>
    %82 = tpu.matmul %81, %13, %cst_35 {dimension_numbers = #tpu.dot_dimension_numbers<[1], [0], [0], [1], [0, 0, 1, 1], [], []>} : vector<8x128xbf16>, vector<128x512xbf16>, vector<8x512xf32> -> vector<8x512xf32>
    %83 = arith.addf %80, %82 : vector<8x512xf32>
    %84 = vector.extract_strided_slice %83 {offsets = [0, 0], sizes = [8, 128], strides = [1, 1]} : vector<8x512xf32> to vector<8x128xf32>
    %85 = arith.negf %84 : vector<8x128xf32>
    %86 = math.exp %85 : vector<8x128xf32>
    %cst_36 = arith.constant 1.000000e+00 : f32
    %87 = vector.broadcast %cst_36 : f32 to vector<8x128xf32>
    %88 = arith.addf %87, %86 : vector<8x128xf32>
    %89 = arith.divf %87, %88 : vector<8x128xf32>
    %90 = vector.extract_strided_slice %83 {offsets = [0, 128], sizes = [8, 128], strides = [1, 1]} : vector<8x512xf32> to vector<8x128xf32>
    %91 = arith.negf %90 : vector<8x128xf32>
    %92 = math.exp %91 : vector<8x128xf32>
    %cst_37 = arith.constant 1.000000e+00 : f32
    %93 = vector.broadcast %cst_37 : f32 to vector<8x128xf32>
    %94 = arith.addf %93, %92 : vector<8x128xf32>
    %95 = arith.divf %93, %94 : vector<8x128xf32>
    %96 = vector.extract_strided_slice %83 {offsets = [0, 256], sizes = [8, 128], strides = [1, 1]} : vector<8x512xf32> to vector<8x128xf32>
    %97 = math.tanh %96 : vector<8x128xf32>
    %98 = vector.extract_strided_slice %83 {offsets = [0, 384], sizes = [8, 128], strides = [1, 1]} : vector<8x512xf32> to vector<8x128xf32>
    %99 = arith.negf %98 : vector<8x128xf32>
    %100 = math.exp %99 : vector<8x128xf32>
    %cst_38 = arith.constant 1.000000e+00 : f32
    %101 = vector.broadcast %cst_38 : f32 to vector<8x128xf32>
    %102 = arith.addf %101, %100 : vector<8x128xf32>
    %103 = arith.divf %101, %102 : vector<8x128xf32>
    %104 = arith.mulf %95, %75 : vector<8x128xf32>
    %105 = arith.mulf %89, %97 : vector<8x128xf32>
    %106 = arith.addf %104, %105 : vector<8x128xf32>
    %107 = math.tanh %106 : vector<8x128xf32>
    %108 = arith.mulf %103, %107 : vector<8x128xf32>
    %109 = arith.truncf %108 : vector<8x128xf32> to vector<8x128xbf16>
    %c16_39 = arith.constant 16 : index
    %c0_40 = arith.constant 0 : index
    %110 = vector.load %arg10[%c16_39, %c0_40] : memref<64x128xbf16, #tpu.memory_space<vmem>>, vector<8x128xbf16>
    tpu.vector_store %arg10[%c16_39, %c0_40], %109 {strides = array<i32>} : memref<64x128xbf16, #tpu.memory_space<vmem>>, vector<8x128xbf16>,
    %c24 = arith.constant 24 : index
    %c0_41 = arith.constant 0 : index
    %111 = vector.load %arg11[%c24, %c0_41] : memref<64x512xf32, #tpu.memory_space<vmem>>, vector<8x512xf32>
    %112 = arith.truncf %108 : vector<8x128xf32> to vector<8x128xbf16>
    %cst_42 = arith.constant dense<0.000000e+00> : vector<8x512xf32>
    %113 = tpu.matmul %112, %13, %cst_42 {dimension_numbers = #tpu.dot_dimension_numbers<[1], [0], [0], [1], [0, 0, 1, 1], [], []>} : vector<8x128xbf16>, vector<128x512xbf16>, vector<8x512xf32> -> vector<8x512xf32>
    %114 = arith.addf %111, %113 : vector<8x512xf32>
    %115 = vector.extract_strided_slice %114 {offsets = [0, 0], sizes = [8, 128], strides = [1, 1]} : vector<8x512xf32> to vector<8x128xf32>
    %116 = arith.negf %115 : vector<8x128xf32>
    %117 = math.exp %116 : vector<8x128xf32>
    %cst_43 = arith.constant 1.000000e+00 : f32
    %118 = vector.broadcast %cst_43 : f32 to vector<8x128xf32>
    %119 = arith.addf %118, %117 : vector<8x128xf32>
    %120 = arith.divf %118, %119 : vector<8x128xf32>
    %121 = vector.extract_strided_slice %114 {offsets = [0, 128], sizes = [8, 128], strides = [1, 1]} : vector<8x512xf32> to vector<8x128xf32>
    %122 = arith.negf %121 : vector<8x128xf32>
    %123 = math.exp %122 : vector<8x128xf32>
    %cst_44 = arith.constant 1.000000e+00 : f32
    %124 = vector.broadcast %cst_44 : f32 to vector<8x128xf32>
    %125 = arith.addf %124, %123 : vector<8x128xf32>
    %126 = arith.divf %124, %125 : vector<8x128xf32>
    %127 = vector.extract_strided_slice %114 {offsets = [0, 256], sizes = [8, 128], strides = [1, 1]} : vector<8x512xf32> to vector<8x128xf32>
    %128 = math.tanh %127 : vector<8x128xf32>
    %129 = vector.extract_strided_slice %114 {offsets = [0, 384], sizes = [8, 128], strides = [1, 1]} : vector<8x512xf32> to vector<8x128xf32>
    %130 = arith.negf %129 : vector<8x128xf32>
    %131 = math.exp %130 : vector<8x128xf32>
    %cst_45 = arith.constant 1.000000e+00 : f32
    %132 = vector.broadcast %cst_45 : f32 to vector<8x128xf32>
    %133 = arith.addf %132, %131 : vector<8x128xf32>
    %134 = arith.divf %132, %133 : vector<8x128xf32>
    %135 = arith.mulf %126, %106 : vector<8x128xf32>
    %136 = arith.mulf %120, %128 : vector<8x128xf32>
    %137 = arith.addf %135, %136 : vector<8x128xf32>
    %138 = math.tanh %137 : vector<8x128xf32>
    %139 = arith.mulf %134, %138 : vector<8x128xf32>
    %140 = arith.truncf %139 : vector<8x128xf32> to vector<8x128xbf16>
    %c24_46 = arith.constant 24 : index
    %c0_47 = arith.constant 0 : index
    %141 = vector.load %arg10[%c24_46, %c0_47] : memref<64x128xbf16, #tpu.memory_space<vmem>>, vector<8x128xbf16>
    tpu.vector_store %arg10[%c24_46, %c0_47], %140 {strides = array<i32>} : memref<64x128xbf16, #tpu.memory_space<vmem>>, vector<8x128xbf16>,
    %c32 = arith.constant 32 : index
    %c0_48 = arith.constant 0 : index
    %142 = vector.load %arg11[%c32, %c0_48] : memref<64x512xf32, #tpu.memory_space<vmem>>, vector<8x512xf32>
    %143 = arith.truncf %139 : vector<8x128xf32> to vector<8x128xbf16>
    %cst_49 = arith.constant dense<0.000000e+00> : vector<8x512xf32>
    %144 = tpu.matmul %143, %13, %cst_49 {dimension_numbers = #tpu.dot_dimension_numbers<[1], [0], [0], [1], [0, 0, 1, 1], [], []>} : vector<8x128xbf16>, vector<128x512xbf16>, vector<8x512xf32> -> vector<8x512xf32>
    %145 = arith.addf %142, %144 : vector<8x512xf32>
    %146 = vector.extract_strided_slice %145 {offsets = [0, 0], sizes = [8, 128], strides = [1, 1]} : vector<8x512xf32> to vector<8x128xf32>
    %147 = arith.negf %146 : vector<8x128xf32>
    %148 = math.exp %147 : vector<8x128xf32>
    %cst_50 = arith.constant 1.000000e+00 : f32
    %149 = vector.broadcast %cst_50 : f32 to vector<8x128xf32>
    %150 = arith.addf %149, %148 : vector<8x128xf32>
    %151 = arith.divf %149, %150 : vector<8x128xf32>
    %152 = vector.extract_strided_slice %145 {offsets = [0, 128], sizes = [8, 128], strides = [1, 1]} : vector<8x512xf32> to vector<8x128xf32>
    %153 = arith.negf %152 : vector<8x128xf32>
    %154 = math.exp %153 : vector<8x128xf32>
    %cst_51 = arith.constant 1.000000e+00 : f32
    %155 = vector.broadcast %cst_51 : f32 to vector<8x128xf32>
    %156 = arith.addf %155, %154 : vector<8x128xf32>
    %157 = arith.divf %155, %156 : vector<8x128xf32>
    %158 = vector.extract_strided_slice %145 {offsets = [0, 256], sizes = [8, 128], strides = [1, 1]} : vector<8x512xf32> to vector<8x128xf32>
    %159 = math.tanh %158 : vector<8x128xf32>
    %160 = vector.extract_strided_slice %145 {offsets = [0, 384], sizes = [8, 128], strides = [1, 1]} : vector<8x512xf32> to vector<8x128xf32>
    %161 = arith.negf %160 : vector<8x128xf32>
    %162 = math.exp %161 : vector<8x128xf32>
    %cst_52 = arith.constant 1.000000e+00 : f32
    %163 = vector.broadcast %cst_52 : f32 to vector<8x128xf32>
    %164 = arith.addf %163, %162 : vector<8x128xf32>
    %165 = arith.divf %163, %164 : vector<8x128xf32>
    %166 = arith.mulf %157, %137 : vector<8x128xf32>
    %167 = arith.mulf %151, %159 : vector<8x128xf32>
    %168 = arith.addf %166, %167 : vector<8x128xf32>
    %169 = math.tanh %168 : vector<8x128xf32>
    %170 = arith.mulf %165, %169 : vector<8x128xf32>
    %171 = arith.truncf %170 : vector<8x128xf32> to vector<8x128xbf16>
    %c32_53 = arith.constant 32 : index
    %c0_54 = arith.constant 0 : index
    %172 = vector.load %arg10[%c32_53, %c0_54] : memref<64x128xbf16, #tpu.memory_space<vmem>>, vector<8x128xbf16>
    tpu.vector_store %arg10[%c32_53, %c0_54], %171 {strides = array<i32>} : memref<64x128xbf16, #tpu.memory_space<vmem>>, vector<8x128xbf16>,
    %c40 = arith.constant 40 : index
    %c0_55 = arith.constant 0 : index
    %173 = vector.load %arg11[%c40, %c0_55] : memref<64x512xf32, #tpu.memory_space<vmem>>, vector<8x512xf32>
    %174 = arith.truncf %170 : vector<8x128xf32> to vector<8x128xbf16>
    %cst_56 = arith.constant dense<0.000000e+00> : vector<8x512xf32>
    %175 = tpu.matmul %174, %13, %cst_56 {dimension_numbers = #tpu.dot_dimension_numbers<[1], [0], [0], [1], [0, 0, 1, 1], [], []>} : vector<8x128xbf16>, vector<128x512xbf16>, vector<8x512xf32> -> vector<8x512xf32>
    %176 = arith.addf %173, %175 : vector<8x512xf32>
    %177 = vector.extract_strided_slice %176 {offsets = [0, 0], sizes = [8, 128], strides = [1, 1]} : vector<8x512xf32> to vector<8x128xf32>
    %178 = arith.negf %177 : vector<8x128xf32>
    %179 = math.exp %178 : vector<8x128xf32>
    %cst_57 = arith.constant 1.000000e+00 : f32
    %180 = vector.broadcast %cst_57 : f32 to vector<8x128xf32>
    %181 = arith.addf %180, %179 : vector<8x128xf32>
    %182 = arith.divf %180, %181 : vector<8x128xf32>
    %183 = vector.extract_strided_slice %176 {offsets = [0, 128], sizes = [8, 128], strides = [1, 1]} : vector<8x512xf32> to vector<8x128xf32>
    %184 = arith.negf %183 : vector<8x128xf32>
    %185 = math.exp %184 : vector<8x128xf32>
    %cst_58 = arith.constant 1.000000e+00 : f32
    %186 = vector.broadcast %cst_58 : f32 to vector<8x128xf32>
    %187 = arith.addf %186, %185 : vector<8x128xf32>
    %188 = arith.divf %186, %187 : vector<8x128xf32>
    %189 = vector.extract_strided_slice %176 {offsets = [0, 256], sizes = [8, 128], strides = [1, 1]} : vector<8x512xf32> to vector<8x128xf32>
    %190 = math.tanh %189 : vector<8x128xf32>
    %191 = vector.extract_strided_slice %176 {offsets = [0, 384], sizes = [8, 128], strides = [1, 1]} : vector<8x512xf32> to vector<8x128xf32>
    %192 = arith.negf %191 : vector<8x128xf32>
    %193 = math.exp %192 : vector<8x128xf32>
    %cst_59 = arith.constant 1.000000e+00 : f32
    %194 = vector.broadcast %cst_59 : f32 to vector<8x128xf32>
    %195 = arith.addf %194, %193 : vector<8x128xf32>
    %196 = arith.divf %194, %195 : vector<8x128xf32>
    %197 = arith.mulf %188, %168 : vector<8x128xf32>
    %198 = arith.mulf %182, %190 : vector<8x128xf32>
    %199 = arith.addf %197, %198 : vector<8x128xf32>
    %200 = math.tanh %199 : vector<8x128xf32>
    %201 = arith.mulf %196, %200 : vector<8x128xf32>
    %202 = arith.truncf %201 : vector<8x128xf32> to vector<8x128xbf16>
    %c40_60 = arith.constant 40 : index
    %c0_61 = arith.constant 0 : index
    %203 = vector.load %arg10[%c40_60, %c0_61] : memref<64x128xbf16, #tpu.memory_space<vmem>>, vector<8x128xbf16>
    tpu.vector_store %arg10[%c40_60, %c0_61], %202 {strides = array<i32>} : memref<64x128xbf16, #tpu.memory_space<vmem>>, vector<8x128xbf16>,
    %c48 = arith.constant 48 : index
    %c0_62 = arith.constant 0 : index
    %204 = vector.load %arg11[%c48, %c0_62] : memref<64x512xf32, #tpu.memory_space<vmem>>, vector<8x512xf32>
    %205 = arith.truncf %201 : vector<8x128xf32> to vector<8x128xbf16>
    %cst_63 = arith.constant dense<0.000000e+00> : vector<8x512xf32>
    %206 = tpu.matmul %205, %13, %cst_63 {dimension_numbers = #tpu.dot_dimension_numbers<[1], [0], [0], [1], [0, 0, 1, 1], [], []>} : vector<8x128xbf16>, vector<128x512xbf16>, vector<8x512xf32> -> vector<8x512xf32>
    %207 = arith.addf %204, %206 : vector<8x512xf32>
    %208 = vector.extract_strided_slice %207 {offsets = [0, 0], sizes = [8, 128], strides = [1, 1]} : vector<8x512xf32> to vector<8x128xf32>
    %209 = arith.negf %208 : vector<8x128xf32>
    %210 = math.exp %209 : vector<8x128xf32>
    %cst_64 = arith.constant 1.000000e+00 : f32
    %211 = vector.broadcast %cst_64 : f32 to vector<8x128xf32>
    %212 = arith.addf %211, %210 : vector<8x128xf32>
    %213 = arith.divf %211, %212 : vector<8x128xf32>
    %214 = vector.extract_strided_slice %207 {offsets = [0, 128], sizes = [8, 128], strides = [1, 1]} : vector<8x512xf32> to vector<8x128xf32>
    %215 = arith.negf %214 : vector<8x128xf32>
    %216 = math.exp %215 : vector<8x128xf32>
    %cst_65 = arith.constant 1.000000e+00 : f32
    %217 = vector.broadcast %cst_65 : f32 to vector<8x128xf32>
    %218 = arith.addf %217, %216 : vector<8x128xf32>
    %219 = arith.divf %217, %218 : vector<8x128xf32>
    %220 = vector.extract_strided_slice %207 {offsets = [0, 256], sizes = [8, 128], strides = [1, 1]} : vector<8x512xf32> to vector<8x128xf32>
    %221 = math.tanh %220 : vector<8x128xf32>
    %222 = vector.extract_strided_slice %207 {offsets = [0, 384], sizes = [8, 128], strides = [1, 1]} : vector<8x512xf32> to vector<8x128xf32>
    %223 = arith.negf %222 : vector<8x128xf32>
    %224 = math.exp %223 : vector<8x128xf32>
    %cst_66 = arith.constant 1.000000e+00 : f32
    %225 = vector.broadcast %cst_66 : f32 to vector<8x128xf32>
    %226 = arith.addf %225, %224 : vector<8x128xf32>
    %227 = arith.divf %225, %226 : vector<8x128xf32>
    %228 = arith.mulf %219, %199 : vector<8x128xf32>
    %229 = arith.mulf %213, %221 : vector<8x128xf32>
    %230 = arith.addf %228, %229 : vector<8x128xf32>
    %231 = math.tanh %230 : vector<8x128xf32>
    %232 = arith.mulf %227, %231 : vector<8x128xf32>
    %233 = arith.truncf %232 : vector<8x128xf32> to vector<8x128xbf16>
    %c48_67 = arith.constant 48 : index
    %c0_68 = arith.constant 0 : index
    %234 = vector.load %arg10[%c48_67, %c0_68] : memref<64x128xbf16, #tpu.memory_space<vmem>>, vector<8x128xbf16>
    tpu.vector_store %arg10[%c48_67, %c0_68], %233 {strides = array<i32>} : memref<64x128xbf16, #tpu.memory_space<vmem>>, vector<8x128xbf16>,
    %c56 = arith.constant 56 : index
    %c0_69 = arith.constant 0 : index
    %235 = vector.load %arg11[%c56, %c0_69] : memref<64x512xf32, #tpu.memory_space<vmem>>, vector<8x512xf32>
    %236 = arith.truncf %232 : vector<8x128xf32> to vector<8x128xbf16>
    %cst_70 = arith.constant dense<0.000000e+00> : vector<8x512xf32>
    %237 = tpu.matmul %236, %13, %cst_70 {dimension_numbers = #tpu.dot_dimension_numbers<[1], [0], [0], [1], [0, 0, 1, 1], [], []>} : vector<8x128xbf16>, vector<128x512xbf16>, vector<8x512xf32> -> vector<8x512xf32>
    %238 = arith.addf %235, %237 : vector<8x512xf32>
    %239 = vector.extract_strided_slice %238 {offsets = [0, 0], sizes = [8, 128], strides = [1, 1]} : vector<8x512xf32> to vector<8x128xf32>
    %240 = arith.negf %239 : vector<8x128xf32>
    %241 = math.exp %240 : vector<8x128xf32>
    %cst_71 = arith.constant 1.000000e+00 : f32
    %242 = vector.broadcast %cst_71 : f32 to vector<8x128xf32>
    %243 = arith.addf %242, %241 : vector<8x128xf32>
    %244 = arith.divf %242, %243 : vector<8x128xf32>
    %245 = vector.extract_strided_slice %238 {offsets = [0, 128], sizes = [8, 128], strides = [1, 1]} : vector<8x512xf32> to vector<8x128xf32>
    %246 = arith.negf %245 : vector<8x128xf32>
    %247 = math.exp %246 : vector<8x128xf32>
    %cst_72 = arith.constant 1.000000e+00 : f32
    %248 = vector.broadcast %cst_72 : f32 to vector<8x128xf32>
    %249 = arith.addf %248, %247 : vector<8x128xf32>
    %250 = arith.divf %248, %249 : vector<8x128xf32>
    %251 = vector.extract_strided_slice %238 {offsets = [0, 256], sizes = [8, 128], strides = [1, 1]} : vector<8x512xf32> to vector<8x128xf32>
    %252 = math.tanh %251 : vector<8x128xf32>
    %253 = vector.extract_strided_slice %238 {offsets = [0, 384], sizes = [8, 128], strides = [1, 1]} : vector<8x512xf32> to vector<8x128xf32>
    %254 = arith.negf %253 : vector<8x128xf32>
    %255 = math.exp %254 : vector<8x128xf32>
    %cst_73 = arith.constant 1.000000e+00 : f32
    %256 = vector.broadcast %cst_73 : f32 to vector<8x128xf32>
    %257 = arith.addf %256, %255 : vector<8x128xf32>
    %258 = arith.divf %256, %257 : vector<8x128xf32>
    %259 = arith.mulf %250, %230 : vector<8x128xf32>
    %260 = arith.mulf %244, %252 : vector<8x128xf32>
    %261 = arith.addf %259, %260 : vector<8x128xf32>
    %262 = math.tanh %261 : vector<8x128xf32>
    %263 = arith.mulf %258, %262 : vector<8x128xf32>
    %264 = arith.truncf %263 : vector<8x128xf32> to vector<8x128xbf16>
    %c56_74 = arith.constant 56 : index
    %c0_75 = arith.constant 0 : index
    %265 = vector.load %arg10[%c56_74, %c0_75] : memref<64x128xbf16, #tpu.memory_space<vmem>>, vector<8x128xbf16>
    tpu.vector_store %arg10[%c56_74, %c0_75], %264 {strides = array<i32>} : memref<64x128xbf16, #tpu.memory_space<vmem>>, vector<8x128xbf16>,
    %c0_76 = arith.constant 0 : index
    %c0_77 = arith.constant 0 : index
    %c0_78 = arith.constant 0 : index
    %266 = vector.load %arg8[%c0_76, %c0_77, %c0_78] : memref<2x8x128xf32, #tpu.memory_space<vmem>>, vector<1x8x128xf32>
    %267 = vector.shape_cast %266 : vector<1x8x128xf32> to vector<8x128xf32>
    %268 = vector.shape_cast %263 : vector<8x128xf32> to vector<1x8x128xf32>
    tpu.vector_store %arg8[%c0_76, %c0_77, %c0_78], %268 {strides = array<i32>} : memref<2x8x128xf32, #tpu.memory_space<vmem>>, vector<1x8x128xf32>,
    %c0_79 = arith.constant 0 : index
    %c0_80 = arith.constant 0 : index
    %c0_81 = arith.constant 0 : index
    %269 = vector.load %arg9[%c0_79, %c0_80, %c0_81] : memref<2x8x128xf32, #tpu.memory_space<vmem>>, vector<1x8x128xf32>
    %270 = vector.shape_cast %269 : vector<1x8x128xf32> to vector<8x128xf32>
    %271 = vector.shape_cast %261 : vector<8x128xf32> to vector<1x8x128xf32>
    tpu.vector_store %arg9[%c0_79, %c0_80, %c0_81], %271 {strides = array<i32>} : memref<2x8x128xf32, #tpu.memory_space<vmem>>, vector<1x8x128xf32>,
    %c0_82 = arith.constant 0 : index
    %c0_83 = arith.constant 0 : index
    %272 = vector.load %arg10[%c0_82, %c0_83] : memref<64x128xbf16, #tpu.memory_space<vmem>>, vector<64x128xbf16>
    %c1 = arith.constant 1 : index
    %c0_84 = arith.constant 0 : index
    %c0_85 = arith.constant 0 : index
    %273 = vector.load %arg2[%c1, %c0_84, %c0_85] : memref<2x128x512xbf16, #tpu.memory_space<vmem>>, vector<1x128x512xbf16>
    %274 = vector.shape_cast %273 : vector<1x128x512xbf16> to vector<128x512xbf16>
    %cst_86 = arith.constant dense<0.000000e+00> : vector<64x512xf32>
    %275 = tpu.matmul %272, %274, %cst_86 {dimension_numbers = #tpu.dot_dimension_numbers<[1], [0], [0], [1], [0, 0, 1, 1], [], []>} : vector<64x128xbf16>, vector<128x512xbf16>, vector<64x512xf32> -> vector<64x512xf32>
    %c1_87 = arith.constant 1 : index
    %c0_88 = arith.constant 0 : index
    %c0_89 = arith.constant 0 : index
    %276 = vector.load %arg4[%c1_87, %c0_88, %c0_89] : memref<2x1x512xf32, #tpu.memory_space<vmem>>, vector<1x1x512xf32>
    %277 = vector.shape_cast %276 : vector<1x1x512xf32> to vector<1x512xf32>
    %278 = vector.broadcast %277 : vector<1x512xf32> to vector<64x512xf32>
    %279 = arith.addf %275, %278 : vector<64x512xf32>
    %c0_90 = arith.constant 0 : index
    %c0_91 = arith.constant 0 : index
    %280 = vector.load %arg11[%c0_90, %c0_91] : memref<64x512xf32, #tpu.memory_space<vmem>>, vector<64x512xf32>
    tpu.vector_store %arg11[%c0_90, %c0_91], %279 {strides = array<i32>} : memref<64x512xf32, #tpu.memory_space<vmem>>, vector<64x512xf32>,
    %c1_92 = arith.constant 1 : index
    %c0_93 = arith.constant 0 : index
    %c0_94 = arith.constant 0 : index
    %281 = vector.load %arg3[%c1_92, %c0_93, %c0_94] : memref<2x128x512xbf16, #tpu.memory_space<vmem>>, vector<1x128x512xbf16>
    %282 = vector.shape_cast %281 : vector<1x128x512xbf16> to vector<128x512xbf16>
    %c1_95 = arith.constant 1 : index
    %c0_96 = arith.constant 0 : index
    %c0_97 = arith.constant 0 : index
    %283 = vector.load %arg8[%c1_95, %c0_96, %c0_97] : memref<2x8x128xf32, #tpu.memory_space<vmem>>, vector<1x8x128xf32>
    %284 = vector.shape_cast %283 : vector<1x8x128xf32> to vector<8x128xf32>
    %c1_98 = arith.constant 1 : index
    %c0_99 = arith.constant 0 : index
    %c0_100 = arith.constant 0 : index
    %285 = vector.load %arg9[%c1_98, %c0_99, %c0_100] : memref<2x8x128xf32, #tpu.memory_space<vmem>>, vector<1x8x128xf32>
    %286 = vector.shape_cast %285 : vector<1x8x128xf32> to vector<8x128xf32>
    %c0_101 = arith.constant 0 : index
    %c0_102 = arith.constant 0 : index
    %287 = vector.load %arg11[%c0_101, %c0_102] : memref<64x512xf32, #tpu.memory_space<vmem>>, vector<8x512xf32>
    %288 = arith.truncf %284 : vector<8x128xf32> to vector<8x128xbf16>
    %cst_103 = arith.constant dense<0.000000e+00> : vector<8x512xf32>
    %289 = tpu.matmul %288, %282, %cst_103 {dimension_numbers = #tpu.dot_dimension_numbers<[1], [0], [0], [1], [0, 0, 1, 1], [], []>} : vector<8x128xbf16>, vector<128x512xbf16>, vector<8x512xf32> -> vector<8x512xf32>
    %290 = arith.addf %287, %289 : vector<8x512xf32>
    %291 = vector.extract_strided_slice %290 {offsets = [0, 0], sizes = [8, 128], strides = [1, 1]} : vector<8x512xf32> to vector<8x128xf32>
    %292 = arith.negf %291 : vector<8x128xf32>
    %293 = math.exp %292 : vector<8x128xf32>
    %cst_104 = arith.constant 1.000000e+00 : f32
    %294 = vector.broadcast %cst_104 : f32 to vector<8x128xf32>
    %295 = arith.addf %294, %293 : vector<8x128xf32>
    %296 = arith.divf %294, %295 : vector<8x128xf32>
    %297 = vector.extract_strided_slice %290 {offsets = [0, 128], sizes = [8, 128], strides = [1, 1]} : vector<8x512xf32> to vector<8x128xf32>
    %298 = arith.negf %297 : vector<8x128xf32>
    %299 = math.exp %298 : vector<8x128xf32>
    %cst_105 = arith.constant 1.000000e+00 : f32
    %300 = vector.broadcast %cst_105 : f32 to vector<8x128xf32>
    %301 = arith.addf %300, %299 : vector<8x128xf32>
    %302 = arith.divf %300, %301 : vector<8x128xf32>
    %303 = vector.extract_strided_slice %290 {offsets = [0, 256], sizes = [8, 128], strides = [1, 1]} : vector<8x512xf32> to vector<8x128xf32>
    %304 = math.tanh %303 : vector<8x128xf32>
    %305 = vector.extract_strided_slice %290 {offsets = [0, 384], sizes = [8, 128], strides = [1, 1]} : vector<8x512xf32> to vector<8x128xf32>
    %306 = arith.negf %305 : vector<8x128xf32>
    %307 = math.exp %306 : vector<8x128xf32>
    %cst_106 = arith.constant 1.000000e+00 : f32
    %308 = vector.broadcast %cst_106 : f32 to vector<8x128xf32>
    %309 = arith.addf %308, %307 : vector<8x128xf32>
    %310 = arith.divf %308, %309 : vector<8x128xf32>
    %311 = arith.mulf %302, %286 : vector<8x128xf32>
    %312 = arith.mulf %296, %304 : vector<8x128xf32>
    %313 = arith.addf %311, %312 : vector<8x128xf32>
    %314 = math.tanh %313 : vector<8x128xf32>
    %315 = arith.mulf %310, %314 : vector<8x128xf32>
    %c0_107 = arith.constant 0 : index
    %c0_108 = arith.constant 0 : index
    %316 = vector.load %arg5[%c0_107, %c0_108] : memref<64x128xf32, #tpu.memory_space<vmem>>, vector<8x128xf32>
    tpu.vector_store %arg5[%c0_107, %c0_108], %315 {strides = array<i32>} : memref<64x128xf32, #tpu.memory_space<vmem>>, vector<8x128xf32>,
    %c8_109 = arith.constant 8 : index
    %c0_110 = arith.constant 0 : index
    %317 = vector.load %arg11[%c8_109, %c0_110] : memref<64x512xf32, #tpu.memory_space<vmem>>, vector<8x512xf32>
    %318 = arith.truncf %315 : vector<8x128xf32> to vector<8x128xbf16>
    %cst_111 = arith.constant dense<0.000000e+00> : vector<8x512xf32>
    %319 = tpu.matmul %318, %282, %cst_111 {dimension_numbers = #tpu.dot_dimension_numbers<[1], [0], [0], [1], [0, 0, 1, 1], [], []>} : vector<8x128xbf16>, vector<128x512xbf16>, vector<8x512xf32> -> vector<8x512xf32>
    %320 = arith.addf %317, %319 : vector<8x512xf32>
    %321 = vector.extract_strided_slice %320 {offsets = [0, 0], sizes = [8, 128], strides = [1, 1]} : vector<8x512xf32> to vector<8x128xf32>
    %322 = arith.negf %321 : vector<8x128xf32>
    %323 = math.exp %322 : vector<8x128xf32>
    %cst_112 = arith.constant 1.000000e+00 : f32
    %324 = vector.broadcast %cst_112 : f32 to vector<8x128xf32>
    %325 = arith.addf %324, %323 : vector<8x128xf32>
    %326 = arith.divf %324, %325 : vector<8x128xf32>
    %327 = vector.extract_strided_slice %320 {offsets = [0, 128], sizes = [8, 128], strides = [1, 1]} : vector<8x512xf32> to vector<8x128xf32>
    %328 = arith.negf %327 : vector<8x128xf32>
    %329 = math.exp %328 : vector<8x128xf32>
    %cst_113 = arith.constant 1.000000e+00 : f32
    %330 = vector.broadcast %cst_113 : f32 to vector<8x128xf32>
    %331 = arith.addf %330, %329 : vector<8x128xf32>
    %332 = arith.divf %330, %331 : vector<8x128xf32>
    %333 = vector.extract_strided_slice %320 {offsets = [0, 256], sizes = [8, 128], strides = [1, 1]} : vector<8x512xf32> to vector<8x128xf32>
    %334 = math.tanh %333 : vector<8x128xf32>
    %335 = vector.extract_strided_slice %320 {offsets = [0, 384], sizes = [8, 128], strides = [1, 1]} : vector<8x512xf32> to vector<8x128xf32>
    %336 = arith.negf %335 : vector<8x128xf32>
    %337 = math.exp %336 : vector<8x128xf32>
    %cst_114 = arith.constant 1.000000e+00 : f32
    %338 = vector.broadcast %cst_114 : f32 to vector<8x128xf32>
    %339 = arith.addf %338, %337 : vector<8x128xf32>
    %340 = arith.divf %338, %339 : vector<8x128xf32>
    %341 = arith.mulf %332, %313 : vector<8x128xf32>
    %342 = arith.mulf %326, %334 : vector<8x128xf32>
    %343 = arith.addf %341, %342 : vector<8x128xf32>
    %344 = math.tanh %343 : vector<8x128xf32>
    %345 = arith.mulf %340, %344 : vector<8x128xf32>
    %c8_115 = arith.constant 8 : index
    %c0_116 = arith.constant 0 : index
    %346 = vector.load %arg5[%c8_115, %c0_116] : memref<64x128xf32, #tpu.memory_space<vmem>>, vector<8x128xf32>
    tpu.vector_store %arg5[%c8_115, %c0_116], %345 {strides = array<i32>} : memref<64x128xf32, #tpu.memory_space<vmem>>, vector<8x128xf32>,
    %c16_117 = arith.constant 16 : index
    %c0_118 = arith.constant 0 : index
    %347 = vector.load %arg11[%c16_117, %c0_118] : memref<64x512xf32, #tpu.memory_space<vmem>>, vector<8x512xf32>
    %348 = arith.truncf %345 : vector<8x128xf32> to vector<8x128xbf16>
    %cst_119 = arith.constant dense<0.000000e+00> : vector<8x512xf32>
    %349 = tpu.matmul %348, %282, %cst_119 {dimension_numbers = #tpu.dot_dimension_numbers<[1], [0], [0], [1], [0, 0, 1, 1], [], []>} : vector<8x128xbf16>, vector<128x512xbf16>, vector<8x512xf32> -> vector<8x512xf32>
    %350 = arith.addf %347, %349 : vector<8x512xf32>
    %351 = vector.extract_strided_slice %350 {offsets = [0, 0], sizes = [8, 128], strides = [1, 1]} : vector<8x512xf32> to vector<8x128xf32>
    %352 = arith.negf %351 : vector<8x128xf32>
    %353 = math.exp %352 : vector<8x128xf32>
    %cst_120 = arith.constant 1.000000e+00 : f32
    %354 = vector.broadcast %cst_120 : f32 to vector<8x128xf32>
    %355 = arith.addf %354, %353 : vector<8x128xf32>
    %356 = arith.divf %354, %355 : vector<8x128xf32>
    %357 = vector.extract_strided_slice %350 {offsets = [0, 128], sizes = [8, 128], strides = [1, 1]} : vector<8x512xf32> to vector<8x128xf32>
    %358 = arith.negf %357 : vector<8x128xf32>
    %359 = math.exp %358 : vector<8x128xf32>
    %cst_121 = arith.constant 1.000000e+00 : f32
    %360 = vector.broadcast %cst_121 : f32 to vector<8x128xf32>
    %361 = arith.addf %360, %359 : vector<8x128xf32>
    %362 = arith.divf %360, %361 : vector<8x128xf32>
    %363 = vector.extract_strided_slice %350 {offsets = [0, 256], sizes = [8, 128], strides = [1, 1]} : vector<8x512xf32> to vector<8x128xf32>
    %364 = math.tanh %363 : vector<8x128xf32>
    %365 = vector.extract_strided_slice %350 {offsets = [0, 384], sizes = [8, 128], strides = [1, 1]} : vector<8x512xf32> to vector<8x128xf32>
    %366 = arith.negf %365 : vector<8x128xf32>
    %367 = math.exp %366 : vector<8x128xf32>
    %cst_122 = arith.constant 1.000000e+00 : f32
    %368 = vector.broadcast %cst_122 : f32 to vector<8x128xf32>
    %369 = arith.addf %368, %367 : vector<8x128xf32>
    %370 = arith.divf %368, %369 : vector<8x128xf32>
    %371 = arith.mulf %362, %343 : vector<8x128xf32>
    %372 = arith.mulf %356, %364 : vector<8x128xf32>
    %373 = arith.addf %371, %372 : vector<8x128xf32>
    %374 = math.tanh %373 : vector<8x128xf32>
    %375 = arith.mulf %370, %374 : vector<8x128xf32>
    %c16_123 = arith.constant 16 : index
    %c0_124 = arith.constant 0 : index
    %376 = vector.load %arg5[%c16_123, %c0_124] : memref<64x128xf32, #tpu.memory_space<vmem>>, vector<8x128xf32>
    tpu.vector_store %arg5[%c16_123, %c0_124], %375 {strides = array<i32>} : memref<64x128xf32, #tpu.memory_space<vmem>>, vector<8x128xf32>,
    %c24_125 = arith.constant 24 : index
    %c0_126 = arith.constant 0 : index
    %377 = vector.load %arg11[%c24_125, %c0_126] : memref<64x512xf32, #tpu.memory_space<vmem>>, vector<8x512xf32>
    %378 = arith.truncf %375 : vector<8x128xf32> to vector<8x128xbf16>
    %cst_127 = arith.constant dense<0.000000e+00> : vector<8x512xf32>
    %379 = tpu.matmul %378, %282, %cst_127 {dimension_numbers = #tpu.dot_dimension_numbers<[1], [0], [0], [1], [0, 0, 1, 1], [], []>} : vector<8x128xbf16>, vector<128x512xbf16>, vector<8x512xf32> -> vector<8x512xf32>
    %380 = arith.addf %377, %379 : vector<8x512xf32>
    %381 = vector.extract_strided_slice %380 {offsets = [0, 0], sizes = [8, 128], strides = [1, 1]} : vector<8x512xf32> to vector<8x128xf32>
    %382 = arith.negf %381 : vector<8x128xf32>
    %383 = math.exp %382 : vector<8x128xf32>
    %cst_128 = arith.constant 1.000000e+00 : f32
    %384 = vector.broadcast %cst_128 : f32 to vector<8x128xf32>
    %385 = arith.addf %384, %383 : vector<8x128xf32>
    %386 = arith.divf %384, %385 : vector<8x128xf32>
    %387 = vector.extract_strided_slice %380 {offsets = [0, 128], sizes = [8, 128], strides = [1, 1]} : vector<8x512xf32> to vector<8x128xf32>
    %388 = arith.negf %387 : vector<8x128xf32>
    %389 = math.exp %388 : vector<8x128xf32>
    %cst_129 = arith.constant 1.000000e+00 : f32
    %390 = vector.broadcast %cst_129 : f32 to vector<8x128xf32>
    %391 = arith.addf %390, %389 : vector<8x128xf32>
    %392 = arith.divf %390, %391 : vector<8x128xf32>
    %393 = vector.extract_strided_slice %380 {offsets = [0, 256], sizes = [8, 128], strides = [1, 1]} : vector<8x512xf32> to vector<8x128xf32>
    %394 = math.tanh %393 : vector<8x128xf32>
    %395 = vector.extract_strided_slice %380 {offsets = [0, 384], sizes = [8, 128], strides = [1, 1]} : vector<8x512xf32> to vector<8x128xf32>
    %396 = arith.negf %395 : vector<8x128xf32>
    %397 = math.exp %396 : vector<8x128xf32>
    %cst_130 = arith.constant 1.000000e+00 : f32
    %398 = vector.broadcast %cst_130 : f32 to vector<8x128xf32>
    %399 = arith.addf %398, %397 : vector<8x128xf32>
    %400 = arith.divf %398, %399 : vector<8x128xf32>
    %401 = arith.mulf %392, %373 : vector<8x128xf32>
    %402 = arith.mulf %386, %394 : vector<8x128xf32>
    %403 = arith.addf %401, %402 : vector<8x128xf32>
    %404 = math.tanh %403 : vector<8x128xf32>
    %405 = arith.mulf %400, %404 : vector<8x128xf32>
    %c24_131 = arith.constant 24 : index
    %c0_132 = arith.constant 0 : index
    %406 = vector.load %arg5[%c24_131, %c0_132] : memref<64x128xf32, #tpu.memory_space<vmem>>, vector<8x128xf32>
    tpu.vector_store %arg5[%c24_131, %c0_132], %405 {strides = array<i32>} : memref<64x128xf32, #tpu.memory_space<vmem>>, vector<8x128xf32>,
    %c32_133 = arith.constant 32 : index
    %c0_134 = arith.constant 0 : index
    %407 = vector.load %arg11[%c32_133, %c0_134] : memref<64x512xf32, #tpu.memory_space<vmem>>, vector<8x512xf32>
    %408 = arith.truncf %405 : vector<8x128xf32> to vector<8x128xbf16>
    %cst_135 = arith.constant dense<0.000000e+00> : vector<8x512xf32>
    %409 = tpu.matmul %408, %282, %cst_135 {dimension_numbers = #tpu.dot_dimension_numbers<[1], [0], [0], [1], [0, 0, 1, 1], [], []>} : vector<8x128xbf16>, vector<128x512xbf16>, vector<8x512xf32> -> vector<8x512xf32>
    %410 = arith.addf %407, %409 : vector<8x512xf32>
    %411 = vector.extract_strided_slice %410 {offsets = [0, 0], sizes = [8, 128], strides = [1, 1]} : vector<8x512xf32> to vector<8x128xf32>
    %412 = arith.negf %411 : vector<8x128xf32>
    %413 = math.exp %412 : vector<8x128xf32>
    %cst_136 = arith.constant 1.000000e+00 : f32
    %414 = vector.broadcast %cst_136 : f32 to vector<8x128xf32>
    %415 = arith.addf %414, %413 : vector<8x128xf32>
    %416 = arith.divf %414, %415 : vector<8x128xf32>
    %417 = vector.extract_strided_slice %410 {offsets = [0, 128], sizes = [8, 128], strides = [1, 1]} : vector<8x512xf32> to vector<8x128xf32>
    %418 = arith.negf %417 : vector<8x128xf32>
    %419 = math.exp %418 : vector<8x128xf32>
    %cst_137 = arith.constant 1.000000e+00 : f32
    %420 = vector.broadcast %cst_137 : f32 to vector<8x128xf32>
    %421 = arith.addf %420, %419 : vector<8x128xf32>
    %422 = arith.divf %420, %421 : vector<8x128xf32>
    %423 = vector.extract_strided_slice %410 {offsets = [0, 256], sizes = [8, 128], strides = [1, 1]} : vector<8x512xf32> to vector<8x128xf32>
    %424 = math.tanh %423 : vector<8x128xf32>
    %425 = vector.extract_strided_slice %410 {offsets = [0, 384], sizes = [8, 128], strides = [1, 1]} : vector<8x512xf32> to vector<8x128xf32>
    %426 = arith.negf %425 : vector<8x128xf32>
    %427 = math.exp %426 : vector<8x128xf32>
    %cst_138 = arith.constant 1.000000e+00 : f32
    %428 = vector.broadcast %cst_138 : f32 to vector<8x128xf32>
    %429 = arith.addf %428, %427 : vector<8x128xf32>
    %430 = arith.divf %428, %429 : vector<8x128xf32>
    %431 = arith.mulf %422, %403 : vector<8x128xf32>
    %432 = arith.mulf %416, %424 : vector<8x128xf32>
    %433 = arith.addf %431, %432 : vector<8x128xf32>
    %434 = math.tanh %433 : vector<8x128xf32>
    %435 = arith.mulf %430, %434 : vector<8x128xf32>
    %c32_139 = arith.constant 32 : index
    %c0_140 = arith.constant 0 : index
    %436 = vector.load %arg5[%c32_139, %c0_140] : memref<64x128xf32, #tpu.memory_space<vmem>>, vector<8x128xf32>
    tpu.vector_store %arg5[%c32_139, %c0_140], %435 {strides = array<i32>} : memref<64x128xf32, #tpu.memory_space<vmem>>, vector<8x128xf32>,
    %c40_141 = arith.constant 40 : index
    %c0_142 = arith.constant 0 : index
    %437 = vector.load %arg11[%c40_141, %c0_142] : memref<64x512xf32, #tpu.memory_space<vmem>>, vector<8x512xf32>
    %438 = arith.truncf %435 : vector<8x128xf32> to vector<8x128xbf16>
    %cst_143 = arith.constant dense<0.000000e+00> : vector<8x512xf32>
    %439 = tpu.matmul %438, %282, %cst_143 {dimension_numbers = #tpu.dot_dimension_numbers<[1], [0], [0], [1], [0, 0, 1, 1], [], []>} : vector<8x128xbf16>, vector<128x512xbf16>, vector<8x512xf32> -> vector<8x512xf32>
    %440 = arith.addf %437, %439 : vector<8x512xf32>
    %441 = vector.extract_strided_slice %440 {offsets = [0, 0], sizes = [8, 128], strides = [1, 1]} : vector<8x512xf32> to vector<8x128xf32>
    %442 = arith.negf %441 : vector<8x128xf32>
    %443 = math.exp %442 : vector<8x128xf32>
    %cst_144 = arith.constant 1.000000e+00 : f32
    %444 = vector.broadcast %cst_144 : f32 to vector<8x128xf32>
    %445 = arith.addf %444, %443 : vector<8x128xf32>
    %446 = arith.divf %444, %445 : vector<8x128xf32>
    %447 = vector.extract_strided_slice %440 {offsets = [0, 128], sizes = [8, 128], strides = [1, 1]} : vector<8x512xf32> to vector<8x128xf32>
    %448 = arith.negf %447 : vector<8x128xf32>
    %449 = math.exp %448 : vector<8x128xf32>
    %cst_145 = arith.constant 1.000000e+00 : f32
    %450 = vector.broadcast %cst_145 : f32 to vector<8x128xf32>
    %451 = arith.addf %450, %449 : vector<8x128xf32>
    %452 = arith.divf %450, %451 : vector<8x128xf32>
    %453 = vector.extract_strided_slice %440 {offsets = [0, 256], sizes = [8, 128], strides = [1, 1]} : vector<8x512xf32> to vector<8x128xf32>
    %454 = math.tanh %453 : vector<8x128xf32>
    %455 = vector.extract_strided_slice %440 {offsets = [0, 384], sizes = [8, 128], strides = [1, 1]} : vector<8x512xf32> to vector<8x128xf32>
    %456 = arith.negf %455 : vector<8x128xf32>
    %457 = math.exp %456 : vector<8x128xf32>
    %cst_146 = arith.constant 1.000000e+00 : f32
    %458 = vector.broadcast %cst_146 : f32 to vector<8x128xf32>
    %459 = arith.addf %458, %457 : vector<8x128xf32>
    %460 = arith.divf %458, %459 : vector<8x128xf32>
    %461 = arith.mulf %452, %433 : vector<8x128xf32>
    %462 = arith.mulf %446, %454 : vector<8x128xf32>
    %463 = arith.addf %461, %462 : vector<8x128xf32>
    %464 = math.tanh %463 : vector<8x128xf32>
    %465 = arith.mulf %460, %464 : vector<8x128xf32>
    %c40_147 = arith.constant 40 : index
    %c0_148 = arith.constant 0 : index
    %466 = vector.load %arg5[%c40_147, %c0_148] : memref<64x128xf32, #tpu.memory_space<vmem>>, vector<8x128xf32>
    tpu.vector_store %arg5[%c40_147, %c0_148], %465 {strides = array<i32>} : memref<64x128xf32, #tpu.memory_space<vmem>>, vector<8x128xf32>,
    %c48_149 = arith.constant 48 : index
    %c0_150 = arith.constant 0 : index
    %467 = vector.load %arg11[%c48_149, %c0_150] : memref<64x512xf32, #tpu.memory_space<vmem>>, vector<8x512xf32>
    %468 = arith.truncf %465 : vector<8x128xf32> to vector<8x128xbf16>
    %cst_151 = arith.constant dense<0.000000e+00> : vector<8x512xf32>
    %469 = tpu.matmul %468, %282, %cst_151 {dimension_numbers = #tpu.dot_dimension_numbers<[1], [0], [0], [1], [0, 0, 1, 1], [], []>} : vector<8x128xbf16>, vector<128x512xbf16>, vector<8x512xf32> -> vector<8x512xf32>
    %470 = arith.addf %467, %469 : vector<8x512xf32>
    %471 = vector.extract_strided_slice %470 {offsets = [0, 0], sizes = [8, 128], strides = [1, 1]} : vector<8x512xf32> to vector<8x128xf32>
    %472 = arith.negf %471 : vector<8x128xf32>
    %473 = math.exp %472 : vector<8x128xf32>
    %cst_152 = arith.constant 1.000000e+00 : f32
    %474 = vector.broadcast %cst_152 : f32 to vector<8x128xf32>
    %475 = arith.addf %474, %473 : vector<8x128xf32>
    %476 = arith.divf %474, %475 : vector<8x128xf32>
    %477 = vector.extract_strided_slice %470 {offsets = [0, 128], sizes = [8, 128], strides = [1, 1]} : vector<8x512xf32> to vector<8x128xf32>
    %478 = arith.negf %477 : vector<8x128xf32>
    %479 = math.exp %478 : vector<8x128xf32>
    %cst_153 = arith.constant 1.000000e+00 : f32
    %480 = vector.broadcast %cst_153 : f32 to vector<8x128xf32>
    %481 = arith.addf %480, %479 : vector<8x128xf32>
    %482 = arith.divf %480, %481 : vector<8x128xf32>
    %483 = vector.extract_strided_slice %470 {offsets = [0, 256], sizes = [8, 128], strides = [1, 1]} : vector<8x512xf32> to vector<8x128xf32>
    %484 = math.tanh %483 : vector<8x128xf32>
    %485 = vector.extract_strided_slice %470 {offsets = [0, 384], sizes = [8, 128], strides = [1, 1]} : vector<8x512xf32> to vector<8x128xf32>
    %486 = arith.negf %485 : vector<8x128xf32>
    %487 = math.exp %486 : vector<8x128xf32>
    %cst_154 = arith.constant 1.000000e+00 : f32
    %488 = vector.broadcast %cst_154 : f32 to vector<8x128xf32>
    %489 = arith.addf %488, %487 : vector<8x128xf32>
    %490 = arith.divf %488, %489 : vector<8x128xf32>
    %491 = arith.mulf %482, %463 : vector<8x128xf32>
    %492 = arith.mulf %476, %484 : vector<8x128xf32>
    %493 = arith.addf %491, %492 : vector<8x128xf32>
    %494 = math.tanh %493 : vector<8x128xf32>
    %495 = arith.mulf %490, %494 : vector<8x128xf32>
    %c48_155 = arith.constant 48 : index
    %c0_156 = arith.constant 0 : index
    %496 = vector.load %arg5[%c48_155, %c0_156] : memref<64x128xf32, #tpu.memory_space<vmem>>, vector<8x128xf32>
    tpu.vector_store %arg5[%c48_155, %c0_156], %495 {strides = array<i32>} : memref<64x128xf32, #tpu.memory_space<vmem>>, vector<8x128xf32>,
    %c56_157 = arith.constant 56 : index
    %c0_158 = arith.constant 0 : index
    %497 = vector.load %arg11[%c56_157, %c0_158] : memref<64x512xf32, #tpu.memory_space<vmem>>, vector<8x512xf32>
    %498 = arith.truncf %495 : vector<8x128xf32> to vector<8x128xbf16>
    %cst_159 = arith.constant dense<0.000000e+00> : vector<8x512xf32>
    %499 = tpu.matmul %498, %282, %cst_159 {dimension_numbers = #tpu.dot_dimension_numbers<[1], [0], [0], [1], [0, 0, 1, 1], [], []>} : vector<8x128xbf16>, vector<128x512xbf16>, vector<8x512xf32> -> vector<8x512xf32>
    %500 = arith.addf %497, %499 : vector<8x512xf32>
    %501 = vector.extract_strided_slice %500 {offsets = [0, 0], sizes = [8, 128], strides = [1, 1]} : vector<8x512xf32> to vector<8x128xf32>
    %502 = arith.negf %501 : vector<8x128xf32>
    %503 = math.exp %502 : vector<8x128xf32>
    %cst_160 = arith.constant 1.000000e+00 : f32
    %504 = vector.broadcast %cst_160 : f32 to vector<8x128xf32>
    %505 = arith.addf %504, %503 : vector<8x128xf32>
    %506 = arith.divf %504, %505 : vector<8x128xf32>
    %507 = vector.extract_strided_slice %500 {offsets = [0, 128], sizes = [8, 128], strides = [1, 1]} : vector<8x512xf32> to vector<8x128xf32>
    %508 = arith.negf %507 : vector<8x128xf32>
    %509 = math.exp %508 : vector<8x128xf32>
    %cst_161 = arith.constant 1.000000e+00 : f32
    %510 = vector.broadcast %cst_161 : f32 to vector<8x128xf32>
    %511 = arith.addf %510, %509 : vector<8x128xf32>
    %512 = arith.divf %510, %511 : vector<8x128xf32>
    %513 = vector.extract_strided_slice %500 {offsets = [0, 256], sizes = [8, 128], strides = [1, 1]} : vector<8x512xf32> to vector<8x128xf32>
    %514 = math.tanh %513 : vector<8x128xf32>
    %515 = vector.extract_strided_slice %500 {offsets = [0, 384], sizes = [8, 128], strides = [1, 1]} : vector<8x512xf32> to vector<8x128xf32>
    %516 = arith.negf %515 : vector<8x128xf32>
    %517 = math.exp %516 : vector<8x128xf32>
    %cst_162 = arith.constant 1.000000e+00 : f32
    %518 = vector.broadcast %cst_162 : f32 to vector<8x128xf32>
    %519 = arith.addf %518, %517 : vector<8x128xf32>
    %520 = arith.divf %518, %519 : vector<8x128xf32>
    %521 = arith.mulf %512, %493 : vector<8x128xf32>
    %522 = arith.mulf %506, %514 : vector<8x128xf32>
    %523 = arith.addf %521, %522 : vector<8x128xf32>
    %524 = math.tanh %523 : vector<8x128xf32>
    %525 = arith.mulf %520, %524 : vector<8x128xf32>
    %c56_163 = arith.constant 56 : index
    %c0_164 = arith.constant 0 : index
    %526 = vector.load %arg5[%c56_163, %c0_164] : memref<64x128xf32, #tpu.memory_space<vmem>>, vector<8x128xf32>
    tpu.vector_store %arg5[%c56_163, %c0_164], %525 {strides = array<i32>} : memref<64x128xf32, #tpu.memory_space<vmem>>, vector<8x128xf32>,
    %c1_165 = arith.constant 1 : index
    %c0_166 = arith.constant 0 : index
    %c0_167 = arith.constant 0 : index
    %527 = vector.load %arg8[%c1_165, %c0_166, %c0_167] : memref<2x8x128xf32, #tpu.memory_space<vmem>>, vector<1x8x128xf32>
    %528 = vector.shape_cast %527 : vector<1x8x128xf32> to vector<8x128xf32>
    %529 = vector.shape_cast %525 : vector<8x128xf32> to vector<1x8x128xf32>
    tpu.vector_store %arg8[%c1_165, %c0_166, %c0_167], %529 {strides = array<i32>} : memref<2x8x128xf32, #tpu.memory_space<vmem>>, vector<1x8x128xf32>,
    %c1_168 = arith.constant 1 : index
    %c0_169 = arith.constant 0 : index
    %c0_170 = arith.constant 0 : index
    %530 = vector.load %arg9[%c1_168, %c0_169, %c0_170] : memref<2x8x128xf32, #tpu.memory_space<vmem>>, vector<1x8x128xf32>
    %531 = vector.shape_cast %530 : vector<1x8x128xf32> to vector<8x128xf32>
    %532 = vector.shape_cast %523 : vector<8x128xf32> to vector<1x8x128xf32>
    tpu.vector_store %arg9[%c1_168, %c0_169, %c0_170], %532 {strides = array<i32>} : memref<2x8x128xf32, #tpu.memory_space<vmem>>, vector<1x8x128xf32>,
    %c0_i32_171 = arith.constant 0 : i32
    %533 = arith.cmpi eq, %arg0, %c0_i32_171 : i32
    %534 = arith.extui %533 : i1 to i32
    %c0_i32_172 = arith.constant 0 : i32
    %535 = arith.cmpi ne, %534, %c0_i32_172 : i32
    scf.if %535 {
      %c0_173 = arith.constant 0 : index
      %c0_174 = arith.constant 0 : index
      %c0_175 = arith.constant 0 : index
      %536 = vector.load %arg8[%c0_173, %c0_174, %c0_175] : memref<2x8x128xf32, #tpu.memory_space<vmem>>, vector<2x8x128xf32>
      %c0_176 = arith.constant 0 : index
      %c0_177 = arith.constant 0 : index
      %c0_178 = arith.constant 0 : index
      %537 = vector.load %arg6[%c0_176, %c0_177, %c0_178] : memref<2x8x128xf32, #tpu.memory_space<vmem>>, vector<2x8x128xf32>
      tpu.vector_store %arg6[%c0_176, %c0_177, %c0_178], %536 {strides = array<i32>} : memref<2x8x128xf32, #tpu.memory_space<vmem>>, vector<2x8x128xf32>,
      %c0_179 = arith.constant 0 : index
      %c0_180 = arith.constant 0 : index
      %c0_181 = arith.constant 0 : index
      %538 = vector.load %arg9[%c0_179, %c0_180, %c0_181] : memref<2x8x128xf32, #tpu.memory_space<vmem>>, vector<2x8x128xf32>
      %c0_182 = arith.constant 0 : index
      %c0_183 = arith.constant 0 : index
      %c0_184 = arith.constant 0 : index
      %539 = vector.load %arg7[%c0_182, %c0_183, %c0_184] : memref<2x8x128xf32, #tpu.memory_space<vmem>>, vector<2x8x128xf32>
      tpu.vector_store %arg7[%c0_182, %c0_183, %c0_184], %538 {strides = array<i32>} : memref<2x8x128xf32, #tpu.memory_space<vmem>>, vector<2x8x128xf32>,
    } else {
    }
    return
  }
  func.func @transform_0(%arg0: i32) -> (i32, i32) {
    %c0_i32 = arith.constant 0 : i32
    %c0_i32_0 = arith.constant 0 : i32
    return %arg0, %c0_i32 : i32, i32
  }
  func.func @transform_1(%arg0: i32) -> (i32, i32, i32) {
    %c0_i32 = arith.constant 0 : i32
    %c0_i32_0 = arith.constant 0 : i32
    %c0_i32_1 = arith.constant 0 : i32
    %c0_i32_2 = arith.constant 0 : i32
    return %c0_i32, %c0_i32_0, %c0_i32_1 : i32, i32, i32
  }
  func.func @transform_2(%arg0: i32) -> (i32, i32, i32) {
    %c0_i32 = arith.constant 0 : i32
    %c0_i32_0 = arith.constant 0 : i32
    %c0_i32_1 = arith.constant 0 : i32
    %c0_i32_2 = arith.constant 0 : i32
    return %c0_i32, %c0_i32_0, %c0_i32_1 : i32, i32, i32
  }
  func.func @transform_3(%arg0: i32) -> (i32, i32, i32) {
    %c0_i32 = arith.constant 0 : i32
    %c0_i32_0 = arith.constant 0 : i32
    %c0_i32_1 = arith.constant 0 : i32
    %c0_i32_2 = arith.constant 0 : i32
    return %c0_i32, %c0_i32_0, %c0_i32_1 : i32, i32, i32
  }
  func.func @transform_4(%arg0: i32) -> (i32, i32) {
    %c0_i32 = arith.constant 0 : i32
    %c0_i32_0 = arith.constant 0 : i32
    return %arg0, %c0_i32 : i32, i32
  }
  func.func @transform_5(%arg0: i32) -> (i32, i32, i32) {
    %c0_i32 = arith.constant 0 : i32
    %c0_i32_0 = arith.constant 0 : i32
    %c0_i32_1 = arith.constant 0 : i32
    %c0_i32_2 = arith.constant 0 : i32
    return %c0_i32, %c0_i32_0, %c0_i32_1 : i32, i32, i32
  }
  func.func @transform_6(%arg0: i32) -> (i32, i32, i32) {
    %c0_i32 = arith.constant 0 : i32
    %c0_i32_0 = arith.constant 0 : i32
    %c0_i32_1 = arith.constant 0 : i32
    %c0_i32_2 = arith.constant 0 : i32
    return %c0_i32, %c0_i32_0, %c0_i32_1 : i32, i32, i32
  }
}

</mosaic_0001>

<llo_original>
// kernel: encoder_forward.1
$region0: #{encoder_forward.1}
  #allocation0 [shape = 'u32[]', space=smem, size = 0x4, offset = 0x4, fixed_abs, tag = 'smem constant byte address 0x4 - core index']
  #allocation1 [shape = 'u32[144,128]{1,0:T(1,128)}', space=vmem, size = 0x12000, scoped, tag = 'internal scratch']
  #allocation2 [shape = 'f32[2,8,128]{2,1,0:T(8,128)}', space=vmem, size = 0x2000, scoped, tag = 'scratch operand']
  #allocation3 [shape = 'f32[2,8,128]{2,1,0:T(8,128)}', space=vmem, size = 0x2000, scoped, tag = 'scratch operand']
  #allocation4 [shape = 'bf16[64,128]{1,0:T(16,128)(2,1)}', space=vmem, size = 0x4000, scoped, tag = 'scratch operand']
  #allocation5 [shape = 'f32[64,512]{1,0:T(8,128)}', space=vmem, size = 0x20000, scoped, tag = 'scratch operand']
  %s0 = inlined_call_operand.vmem [shape: bf16[64,128], index: 0, kind: input, shape index: {}]
  %s1 = inlined_call_operand.vmem [shape: bf16[2,128,512], index: 1, kind: input, shape index: {}]
  %s2 = inlined_call_operand.vmem [shape: bf16[2,128,512], index: 2, kind: input, shape index: {}]
  %s3 = inlined_call_operand.vmem [shape: f32[2,1,512], index: 3, kind: input, shape index: {}]
  %s4 = inlined_call_operand.vmem [shape: f32[64,128], index: 4, kind: output, shape index: {0}]
  %s5 = inlined_call_operand.vmem [shape: f32[2,8,128], index: 5, kind: output, shape index: {1}]
  %s6 = inlined_call_operand.vmem [shape: f32[2,8,128], index: 6, kind: output, shape index: {2}]
  %7 = xla_tuple %s4, %s5, %s6
  %s8 = sld [smem:[#allocation0]]
  $region50: #{encoder_forward.1} parent=0
    _
  %s10 = ssub.s32 1, %s8
  %s11 = scalar_select 0, %s10, %s8
  // Predicated region
  $region2: #{encoder_forward.1} parent=0 // pred_check
    _
  $region3: #{encoder_forward.1} parent=0 // pred_check_branch
    %13 = sbr.rel (0) target = $region5
  $region4: #{encoder_forward.1} parent=0 // pred_region
    _
  $region5: #{encoder_forward.1} parent=0 // pred_fallthru
    _
  // Predicated region
  $region6: #{encoder_forward.1} parent=0 // pred_check
    _
  $region7: #{encoder_forward.1} parent=0 // pred_check_branch
    %15 = sbr.rel (0) target = $region9
  $region8: #{encoder_forward.1} parent=0 // pred_region
    _
  $region9: #{encoder_forward.1} parent=0 // pred_fallthru
    _
  // Predicated region
  $region10: #{encoder_forward.1} parent=0 // pred_check
    _
  $region11: #{encoder_forward.1} parent=0 // pred_check_branch
    %17 = sbr.rel (0) target = $region13
  $region12: #{encoder_forward.1} parent=0 // pred_region
    _
  $region13: #{encoder_forward.1} parent=0 // pred_fallthru
    _
  // Predicated region
  $region14: #{encoder_forward.1} parent=0 // pred_check
    _
  $region15: #{encoder_forward.1} parent=0 // pred_check_branch
    %19 = sbr.rel (0) target = $region17
  $region16: #{encoder_forward.1} parent=0 // pred_region
    _
  $region17: #{encoder_forward.1} parent=0 // pred_fallthru
    _
  %p21 = scmp.eq.s32.totalorder 0, 0
  // Predicated region
  $region18: #{encoder_forward.1} parent=0 // pred_check
    %p22 = pneg %p21
  $region19: #{encoder_forward.1} parent=0 // pred_check_branch
    %24 = sbr.rel (%p22) target = $region21
  $region20: #{encoder_forward.1} parent=0 // pred_region
    %25 = vst [vmem:[#allocation2] sm:$0xff] 0.0
    %26 = vst [vmem:[#allocation2 + $0x8] sm:$0xff] 0.0
    %27 = vst [vmem:[#allocation3] sm:$0xff] 0.0
    %28 = vst [vmem:[#allocation3 + $0x8] sm:$0xff] 0.0
  $region21: #{encoder_forward.1} parent=0 // pred_fallthru
    _
  %v29 = vld [vmem:[%s0] sm:$0xf]
  %v30 = vld [vmem:[%s0 + $0x4] sm:$0xf]
  %v31 = vld [vmem:[%s0 + $0x8] sm:$0xf]
  %v32 = vld [vmem:[%s0 + $0xc] sm:$0xf]
  %v33 = vld [vmem:[%s0 + $0x10] sm:$0xf]
  %v34 = vld [vmem:[%s0 + $0x14] sm:$0xf]
  %v35 = vld [vmem:[%s0 + $0x18] sm:$0xf]
  %v36 = vld [vmem:[%s0 + $0x1c] sm:$0xf]
  %v37 = vld [vmem:[%s1] sm:$0xff]
  %v38 = vld [vmem:[%s1 + $0x8] sm:$0xff]
  %v39 = vld [vmem:[%s1 + $0x10] sm:$0xff]
  %v40 = vld [vmem:[%s1 + $0x18] sm:$0xff]
  %v41 = vld [vmem:[%s1 + $0x20] sm:$0xff]
  %v42 = vld [vmem:[%s1 + $0x28] sm:$0xff]
  %v43 = vld [vmem:[%s1 + $0x30] sm:$0xff]
  %v44 = vld [vmem:[%s1 + $0x38] sm:$0xff]
  %v45 = vld [vmem:[%s1 + $0x40] sm:$0xff]
  %v46 = vld [vmem:[%s1 + $0x48] sm:$0xff]
  %v47 = vld [vmem:[%s1 + $0x50] sm:$0xff]
  %v48 = vld [vmem:[%s1 + $0x58] sm:$0xff]
  %v49 = vld [vmem:[%s1 + $0x60] sm:$0xff]
  %v50 = vld [vmem:[%s1 + $0x68] sm:$0xff]
  %v51 = vld [vmem:[%s1 + $0x70] sm:$0xff]
  %v52 = vld [vmem:[%s1 + $0x78] sm:$0xff]
  %v53 = vld [vmem:[%s1 + $0x80] sm:$0xff]
  %v54 = vld [vmem:[%s1 + $0x88] sm:$0xff]
  %v55 = vld [vmem:[%s1 + $0x90] sm:$0xff]
  %v56 = vld [vmem:[%s1 + $0x98] sm:$0xff]
  %v57 = vld [vmem:[%s1 + $0xa0] sm:$0xff]
  %v58 = vld [vmem:[%s1 + $0xa8] sm:$0xff]
  %v59 = vld [vmem:[%s1 + $0xb0] sm:$0xff]
  %v60 = vld [vmem:[%s1 + $0xb8] sm:$0xff]
  %v61 = vld [vmem:[%s1 + $0xc0] sm:$0xff]
  %v62 = vld [vmem:[%s1 + $0xc8] sm:$0xff]
  %v63 = vld [vmem:[%s1 + $0xd0] sm:$0xff]
  %v64 = vld [vmem:[%s1 + $0xd8] sm:$0xff]
  %v65 = vld [vmem:[%s1 + $0xe0] sm:$0xff]
  %v66 = vld [vmem:[%s1 + $0xe8] sm:$0xff]
  %v67 = vld [vmem:[%s1 + $0xf0] sm:$0xff]
  %v68 = vld [vmem:[%s1 + $0xf8] sm:$0xff]
  %v69 = vld [vmem:[%s3] sm:$0xf]
  %v71 = vlaneseq
  %v72 = vshrl.u32 %v71, 7
  %v73 = vsub.s32 0, %v72
  %v74 = vrot.slane %v69, %v73
  %v75 = vlaneseq
  %v76 = vshrl.u32 %v75, 7
  %v77 = vsub.s32 1, %v76
  %v78 = vrot.slane %v69, %v77
  %v79 = vlaneseq
  %v80 = vshrl.u32 %v79, 7
  %v81 = vsub.s32 2, %v80
  %v82 = vrot.slane %v69, %v81
  %v83 = vlaneseq
  %v84 = vshrl.u32 %v83, 7
  %v85 = vsub.s32 3, %v84
  %v86 = vrot.slane %v69, %v85
  %v99 = vunpack.c.l.b16 %v29
  %v100 = vunpack.c.l.b16 %v30
  %v101 = vunpack.c.l.b16 %v31
  %v102 = vunpack.c.l.b16 %v32
  %v103 = vunpack.c.l.b16 %v33
  %v104 = vunpack.c.l.b16 %v34
  %v105 = vunpack.c.l.b16 %v35
  %v106 = vunpack.c.l.b16 %v36
  %v107 = vpack.c.b16 %v100, %v99
  %v108 = vpack.c.b16 %v102, %v101
  %v109 = vpack.c.b16 %v104, %v103
  %v110 = vpack.c.b16 %v106, %v105
  %v147 = vunpack.c.l.b16 %v37
  %v148 = vunpack.c.h.b16 %v37
  %v149 = vunpack.c.l.b16 %v38
  %v150 = vunpack.c.h.b16 %v38
  %v151 = vunpack.c.l.b16 %v39
  %v152 = vunpack.c.h.b16 %v39
  %v153 = vunpack.c.l.b16 %v40
  %v154 = vunpack.c.h.b16 %v40
  %v155 = vunpack.c.l.b16 %v41
  %v156 = vunpack.c.h.b16 %v41
  %v157 = vunpack.c.l.b16 %v42
  %v158 = vunpack.c.h.b16 %v42
  %v159 = vunpack.c.l.b16 %v43
  %v160 = vunpack.c.h.b16 %v43
  %v161 = vunpack.c.l.b16 %v44
  %v162 = vunpack.c.h.b16 %v44
  %v163 = vunpack.c.l.b16 %v45
  %v164 = vunpack.c.h.b16 %v45
  %v165 = vunpack.c.l.b16 %v46
  %v166 = vunpack.c.h.b16 %v46
  %v167 = vunpack.c.l.b16 %v47
  %v168 = vunpack.c.h.b16 %v47
  %v169 = vunpack.c.l.b16 %v48
  %v170 = vunpack.c.h.b16 %v48
  %v171 = vunpack.c.l.b16 %v49
  %v172 = vunpack.c.h.b16 %v49
  %v173 = vunpack.c.l.b16 %v50
  %v174 = vunpack.c.h.b16 %v50
  %v175 = vunpack.c.l.b16 %v51
  %v176 = vunpack.c.h.b16 %v51
  %v177 = vunpack.c.l.b16 %v52
  %v178 = vunpack.c.h.b16 %v52
  %v179 = vunpack.c.l.b16 %v53
  %v180 = vunpack.c.h.b16 %v53
  %v181 = vunpack.c.l.b16 %v54
  %v182 = vunpack.c.h.b16 %v54
  %v183 = vunpack.c.l.b16 %v55
  %v184 = vunpack.c.h.b16 %v55
  %v185 = vunpack.c.l.b16 %v56
  %v186 = vunpack.c.h.b16 %v56
  %v187 = vunpack.c.l.b16 %v57
  %v188 = vunpack.c.h.b16 %v57
  %v189 = vunpack.c.l.b16 %v58
  %v190 = vunpack.c.h.b16 %v58
  %v191 = vunpack.c.l.b16 %v59
  %v192 = vunpack.c.h.b16 %v59
  %v193 = vunpack.c.l.b16 %v60
  %v194 = vunpack.c.h.b16 %v60
  %v195 = vunpack.c.l.b16 %v61
  %v196 = vunpack.c.h.b16 %v61
  %v197 = vunpack.c.l.b16 %v62
  %v198 = vunpack.c.h.b16 %v62
  %v199 = vunpack.c.l.b16 %v63
  %v200 = vunpack.c.h.b16 %v63
  %v201 = vunpack.c.l.b16 %v64
  %v202 = vunpack.c.h.b16 %v64
  %v203 = vunpack.c.l.b16 %v65
  %v204 = vunpack.c.h.b16 %v65
  %v205 = vunpack.c.l.b16 %v66
  %v206 = vunpack.c.h.b16 %v66
  %v207 = vunpack.c.l.b16 %v67
  %v208 = vunpack.c.h.b16 %v67
  %v209 = vunpack.c.l.b16 %v68
  %v210 = vunpack.c.h.b16 %v68
  %v211 = vpack.c.b16 %v151, %v147
  %v212 = vpack.c.b16 %v152, %v148
  %v213 = vpack.c.b16 %v153, %v149
  %v214 = vpack.c.b16 %v154, %v150
  %v215 = vpack.c.b16 %v159, %v155
  %v216 = vpack.c.b16 %v160, %v156
  %v217 = vpack.c.b16 %v161, %v157
  %v218 = vpack.c.b16 %v162, %v158
  %v219 = vpack.c.b16 %v167, %v163
  %v220 = vpack.c.b16 %v168, %v164
  %v221 = vpack.c.b16 %v169, %v165
  %v222 = vpack.c.b16 %v170, %v166
  %v223 = vpack.c.b16 %v175, %v171
  %v224 = vpack.c.b16 %v176, %v172
  %v225 = vpack.c.b16 %v177, %v173
  %v226 = vpack.c.b16 %v178, %v174
  %v227 = vpack.c.b16 %v183, %v179
  %v228 = vpack.c.b16 %v184, %v180
  %v229 = vpack.c.b16 %v185, %v181
  %v230 = vpack.c.b16 %v186, %v182
  %v231 = vpack.c.b16 %v191, %v187
  %v232 = vpack.c.b16 %v192, %v188
  %v233 = vpack.c.b16 %v193, %v189
  %v234 = vpack.c.b16 %v194, %v190
  %v235 = vpack.c.b16 %v199, %v195
  %v236 = vpack.c.b16 %v200, %v196
  %v237 = vpack.c.b16 %v201, %v197
  %v238 = vpack.c.b16 %v202, %v198
  %v239 = vpack.c.b16 %v207, %v203
  %v240 = vpack.c.b16 %v208, %v204
  %v241 = vpack.c.b16 %v209, %v205
  %v242 = vpack.c.b16 %v210, %v206
  %275 = vmatprep.subr.bf16.mxu0 %v212
  %276 = vmatpush1.bf16.msra.mxu0 %v211
  %277 = vmatprep.subr.bf16.mxu0 %v216
  %278 = vmatpush1.bf16.msra.mxu0 %v215
  %279 = vmatprep.subr.bf16.mxu0 %v220
  %280 = vmatpush1.bf16.msra.mxu0 %v219
  %281 = vmatprep.subr.bf16.mxu0 %v224
  %282 = vmatpush1.bf16.msra.mxu0 %v223
  %283 = vmatprep.subr.bf16.mxu0 %v228
  %284 = vmatpush1.bf16.msra.mxu0 %v227
  %285 = vmatprep.subr.bf16.mxu0 %v232
  %286 = vmatpush1.bf16.msra.mxu0 %v231
  %287 = vmatprep.subr.bf16.mxu0 %v236
  %288 = vmatpush1.bf16.msra.mxu0 %v235
  %289 = vmatprep.subr.bf16.mxu0 %v240
  %290 = vmatpush1.bf16.msra.mxu0 %v239
  %291 = vmatprep.subr.bf16.mxu0 0
  %292 = vmatpush1.bf16.msra.mxu0 0
  %293 = vmatprep.subr.bf16.mxu0 0
  %294 = vmatpush1.bf16.msra.mxu0 0
  %295 = vmatprep.subr.bf16.mxu0 0
  %296 = vmatpush1.bf16.msra.mxu0 0
  %297 = vmatprep.subr.bf16.mxu0 0
  %298 = vmatpush1.bf16.msra.mxu0 0
  %299 = vmatprep.subr.bf16.mxu0 0
  %300 = vmatpush1.bf16.msra.mxu0 0
  %301 = vmatprep.subr.bf16.mxu0 0
  %302 = vmatpush1.bf16.msra.mxu0 0
  %303 = vmatprep.subr.bf16.mxu0 0
  %304 = vmatpush1.bf16.msra.mxu0 0
  %305 = vmatprep.subr.bf16.mxu0 0
  %306 = vmatpush1.bf16.msra.mxu0 0
  %307 = vmatprep.mubr.bf16.mxu0 0
  %308 = vmatmul.mubr.bf16.gmra.mrb[0].mxu0 %v107
  %v309 = vpop.f32.mrb[0].mxu0
  %v310 = vadd.f32 %v74, %v309
  %v311 = vpop.f32.mrb[0].mxu0
  %v312 = vadd.f32 %v78, %v311
  %v313 = vpop.f32.mrb[0].mxu0
  %v314 = vadd.f32 %v74, %v313
  %v315 = vpop.f32.mrb[0].mxu0
  %v316 = vadd.f32 %v78, %v315
  %317 = vmatprep.mubr.bf16.mxu0 0
  %318 = vmatmul.mubr.bf16.gmra.mrb[0].mxu0 %v108
  %v319 = vpop.f32.mrb[0].mxu0
  %v320 = vadd.f32 %v74, %v319
  %v321 = vpop.f32.mrb[0].mxu0
  %v322 = vadd.f32 %v78, %v321
  %v323 = vpop.f32.mrb[0].mxu0
  %v324 = vadd.f32 %v74, %v323
  %v325 = vpop.f32.mrb[0].mxu0
  %v326 = vadd.f32 %v78, %v325
  %327 = vmatprep.mubr.bf16.mxu0 0
  %328 = vmatmul.mubr.bf16.gmra.mrb[0].mxu0 %v109
  %v329 = vpop.f32.mrb[0].mxu0
  %v330 = vadd.f32 %v74, %v329
  %v331 = vpop.f32.mrb[0].mxu0
  %v332 = vadd.f32 %v78, %v331
  %v333 = vpop.f32.mrb[0].mxu0
  %v334 = vadd.f32 %v74, %v333
  %v335 = vpop.f32.mrb[0].mxu0
  %v336 = vadd.f32 %v78, %v335
  %337 = vmatprep.mubr.bf16.mxu0 0
  %338 = vmatmul.mubr.bf16.gmra.mrb[0].mxu0 %v110
  %v339 = vpop.f32.mrb[0].mxu0
  %v340 = vadd.f32 %v74, %v339
  %v341 = vpop.f32.mrb[0].mxu0
  %v342 = vadd.f32 %v78, %v341
  %v343 = vpop.f32.mrb[0].mxu0
  %v344 = vadd.f32 %v74, %v343
  %v345 = vpop.f32.mrb[0].mxu0
  %v346 = vadd.f32 %v78, %v345
  %347 = vdwg.mxu0
  %348 = vmatprep.subr.bf16.mxu0 %v214
  %349 = vmatpush1.bf16.msra.mxu0 %v213
  %350 = vmatprep.subr.bf16.mxu0 %v218
  %351 = vmatpush1.bf16.msra.mxu0 %v217
  %352 = vmatprep.subr.bf16.mxu0 %v222
  %353 = vmatpush1.bf16.msra.mxu0 %v221
  %354 = vmatprep.subr.bf16.mxu0 %v226
  %355 = vmatpush1.bf16.msra.mxu0 %v225
  %356 = vmatprep.subr.bf16.mxu0 %v230
  %357 = vmatpush1.bf16.msra.mxu0 %v229
  %358 = vmatprep.subr.bf16.mxu0 %v234
  %359 = vmatpush1.bf16.msra.mxu0 %v233
  %360 = vmatprep.subr.bf16.mxu0 %v238
  %361 = vmatpush1.bf16.msra.mxu0 %v237
  %362 = vmatprep.subr.bf16.mxu0 %v242
  %363 = vmatpush1.bf16.msra.mxu0 %v241
  %364 = vmatprep.subr.bf16.mxu0 0
  %365 = vmatpush1.bf16.msra.mxu0 0
  %366 = vmatprep.subr.bf16.mxu0 0
  %367 = vmatpush1.bf16.msra.mxu0 0
  %368 = vmatprep.subr.bf16.mxu0 0
  %369 = vmatpush1.bf16.msra.mxu0 0
  %370 = vmatprep.subr.bf16.mxu0 0
  %371 = vmatpush1.bf16.msra.mxu0 0
  %372 = vmatprep.subr.bf16.mxu0 0
  %373 = vmatpush1.bf16.msra.mxu0 0
  %374 = vmatprep.subr.bf16.mxu0 0
  %375 = vmatpush1.bf16.msra.mxu0 0
  %376 = vmatprep.subr.bf16.mxu0 0
  %377 = vmatpush1.bf16.msra.mxu0 0
  %378 = vmatprep.subr.bf16.mxu0 0
  %379 = vmatpush1.bf16.msra.mxu0 0
  %380 = vmatprep.mubr.bf16.mxu0 0
  %381 = vmatmul.mubr.bf16.gmra.mrb[0].mxu0 %v107
  %v382 = vpop.f32.mrb[0].mxu0
  %v383 = vadd.f32 %v82, %v382
  %v384 = vpop.f32.mrb[0].mxu0
  %v385 = vadd.f32 %v86, %v384
  %v386 = vpop.f32.mrb[0].mxu0
  %v387 = vadd.f32 %v82, %v386
  %v388 = vpop.f32.mrb[0].mxu0
  %v389 = vadd.f32 %v86, %v388
  %390 = vmatprep.mubr.bf16.mxu0 0
  %391 = vmatmul.mubr.bf16.gmra.mrb[0].mxu0 %v108
  %v392 = vpop.f32.mrb[0].mxu0
  %v393 = vadd.f32 %v82, %v392
  %v394 = vpop.f32.mrb[0].mxu0
  %v395 = vadd.f32 %v86, %v394
  %v396 = vpop.f32.mrb[0].mxu0
  %v397 = vadd.f32 %v82, %v396
  %v398 = vpop.f32.mrb[0].mxu0
  %v399 = vadd.f32 %v86, %v398
  %400 = vmatprep.mubr.bf16.mxu0 0
  %401 = vmatmul.mubr.bf16.gmra.mrb[0].mxu0 %v109
  %v402 = vpop.f32.mrb[0].mxu0
  %v403 = vadd.f32 %v82, %v402
  %v404 = vpop.f32.mrb[0].mxu0
  %v405 = vadd.f32 %v86, %v404
  %v406 = vpop.f32.mrb[0].mxu0
  %v407 = vadd.f32 %v82, %v406
  %v408 = vpop.f32.mrb[0].mxu0
  %v409 = vadd.f32 %v86, %v408
  %410 = vmatprep.mubr.bf16.mxu0 0
  %411 = vmatmul.mubr.bf16.gmra.mrb[0].mxu0 %v110
  %v412 = vpop.f32.mrb[0].mxu0
  %v413 = vadd.f32 %v82, %v412
  %v414 = vpop.f32.mrb[0].mxu0
  %v415 = vadd.f32 %v86, %v414
  %v416 = vpop.f32.mrb[0].mxu0
  %v417 = vadd.f32 %v82, %v416
  %v418 = vpop.f32.mrb[0].mxu0
  %v419 = vadd.f32 %v86, %v418
  %420 = vdwg.mxu0
  %421 = vst [vmem:[#allocation5] sm:$0xff] %v310
  %422 = vst [vmem:[#allocation5 + $0x8] sm:$0xff] %v312
  %423 = vst [vmem:[#allocation5 + $0x10] sm:$0xff] %v383
  %424 = vst [vmem:[#allocation5 + $0x18] sm:$0xff] %v385
  %425 = vst [vmem:[#allocation5 + $0x20] sm:$0xff] %v314
  %426 = vst [vmem:[#allocation5 + $0x28] sm:$0xff] %v316
  %427 = vst [vmem:[#allocation5 + $0x30] sm:$0xff] %v387
  %428 = vst [vmem:[#allocation5 + $0x38] sm:$0xff] %v389
  %429 = vst [vmem:[#allocation5 + $0x40] sm:$0xff] %v320
  %430 = vst [vmem:[#allocation5 + $0x48] sm:$0xff] %v322
  %431 = vst [vmem:[#allocation5 + $0x50] sm:$0xff] %v393
  %432 = vst [vmem:[#allocation5 + $0x58] sm:$0xff] %v395
  %433 = vst [vmem:[#allocation5 + $0x60] sm:$0xff] %v324
  %434 = vst [vmem:[#allocation5 + $0x68] sm:$0xff] %v326
  %435 = vst [vmem:[#allocation5 + $0x70] sm:$0xff] %v397
  %436 = vst [vmem:[#allocation5 + $0x78] sm:$0xff] %v399
  %437 = vst [vmem:[#allocation5 + $0x80] sm:$0xff] %v330
  %438 = vst [vmem:[#allocation5 + $0x88] sm:$0xff] %v332
  %439 = vst [vmem:[#allocation5 + $0x90] sm:$0xff] %v403
  %440 = vst [vmem:[#allocation5 + $0x98] sm:$0xff] %v405
  %441 = vst [vmem:[#allocation5 + $0xa0] sm:$0xff] %v334
  %442 = vst [vmem:[#allocation5 + $0xa8] sm:$0xff] %v336
  %443 = vst [vmem:[#allocation5 + $0xb0] sm:$0xff] %v407
  %444 = vst [vmem:[#allocation5 + $0xb8] sm:$0xff] %v409
  %445 = vst [vmem:[#allocation5 + $0xc0] sm:$0xff] %v340
  %446 = vst [vmem:[#allocation5 + $0xc8] sm:$0xff] %v342
  %447 = vst [vmem:[#allocation5 + $0xd0] sm:$0xff] %v413
  %448 = vst [vmem:[#allocation5 + $0xd8] sm:$0xff] %v415
  %449 = vst [vmem:[#allocation5 + $0xe0] sm:$0xff] %v344
  %450 = vst [vmem:[#allocation5 + $0xe8] sm:$0xff] %v346
  %451 = vst [vmem:[#allocation5 + $0xf0] sm:$0xff] %v417
  %452 = vst [vmem:[#allocation5 + $0xf8] sm:$0xff] %v419
  %v453 = vld [vmem:[%s2] sm:$0xff]
  %v454 = vld [vmem:[%s2 + $0x8] sm:$0xff]
  %v455 = vld [vmem:[%s2 + $0x10] sm:$0xff]
  %v456 = vld [vmem:[%s2 + $0x18] sm:$0xff]
  %v457 = vld [vmem:[%s2 + $0x20] sm:$0xff]
  %v458 = vld [vmem:[%s2 + $0x28] sm:$0xff]
  %v459 = vld [vmem:[%s2 + $0x30] sm:$0xff]
  %v460 = vld [vmem:[%s2 + $0x38] sm:$0xff]
  %v461 = vld [vmem:[%s2 + $0x40] sm:$0xff]
  %v462 = vld [vmem:[%s2 + $0x48] sm:$0xff]
  %v463 = vld [vmem:[%s2 + $0x50] sm:$0xff]
  %v464 = vld [vmem:[%s2 + $0x58] sm:$0xff]
  %v465 = vld [vmem:[%s2 + $0x60] sm:$0xff]
  %v466 = vld [vmem:[%s2 + $0x68] sm:$0xff]
  %v467 = vld [vmem:[%s2 + $0x70] sm:$0xff]
  %v468 = vld [vmem:[%s2 + $0x78] sm:$0xff]
  %v469 = vld [vmem:[%s2 + $0x80] sm:$0xff]
  %v470 = vld [vmem:[%s2 + $0x88] sm:$0xff]
  %v471 = vld [vmem:[%s2 + $0x90] sm:$0xff]
  %v472 = vld [vmem:[%s2 + $0x98] sm:$0xff]
  %v473 = vld [vmem:[%s2 + $0xa0] sm:$0xff]
  %v474 = vld [vmem:[%s2 + $0xa8] sm:$0xff]
  %v475 = vld [vmem:[%s2 + $0xb0] sm:$0xff]
  %v476 = vld [vmem:[%s2 + $0xb8] sm:$0xff]
  %v477 = vld [vmem:[%s2 + $0xc0] sm:$0xff]
  %v478 = vld [vmem:[%s2 + $0xc8] sm:$0xff]
  %v479 = vld [vmem:[%s2 + $0xd0] sm:$0xff]
  %v480 = vld [vmem:[%s2 + $0xd8] sm:$0xff]
  %v481 = vld [vmem:[%s2 + $0xe0] sm:$0xff]
  %v482 = vld [vmem:[%s2 + $0xe8] sm:$0xff]
  %v483 = vld [vmem:[%s2 + $0xf0] sm:$0xff]
  %v484 = vld [vmem:[%s2 + $0xf8] sm:$0xff]
  %v485 = vld [vmem:[#allocation2] sm:$0xff]
  %v486 = vld [vmem:[#allocation3] sm:$0xff]
  %v487 = vld [vmem:[#allocation5] sm:$0xff]
  %v488 = vld [vmem:[#allocation5 + $0x8] sm:$0xff]
  %v489 = vld [vmem:[#allocation5 + $0x10] sm:$0xff]
  %v490 = vld [vmem:[#allocation5 + $0x18] sm:$0xff]
  %v491 = vpack.c.bf16 %v485, %v485
  %v524 = vunpack.c.l.b16 %v453
  %v525 = vunpack.c.h.b16 %v453
  %v526 = vunpack.c.l.b16 %v454
  %v527 = vunpack.c.h.b16 %v454
  %v528 = vunpack.c.l.b16 %v455
  %v529 = vunpack.c.h.b16 %v455
  %v530 = vunpack.c.l.b16 %v456
  %v531 = vunpack.c.h.b16 %v456
  %v532 = vunpack.c.l.b16 %v457
  %v533 = vunpack.c.h.b16 %v457
  %v534 = vunpack.c.l.b16 %v458
  %v535 = vunpack.c.h.b16 %v458
  %v536 = vunpack.c.l.b16 %v459
  %v537 = vunpack.c.h.b16 %v459
  %v538 = vunpack.c.l.b16 %v460
  %v539 = vunpack.c.h.b16 %v460
  %v540 = vunpack.c.l.b16 %v461
  %v541 = vunpack.c.h.b16 %v461
  %v542 = vunpack.c.l.b16 %v462
  %v543 = vunpack.c.h.b16 %v462
  %v544 = vunpack.c.l.b16 %v463
  %v545 = vunpack.c.h.b16 %v463
  %v546 = vunpack.c.l.b16 %v464
  %v547 = vunpack.c.h.b16 %v464
  %v548 = vunpack.c.l.b16 %v465
  %v549 = vunpack.c.h.b16 %v465
  %v550 = vunpack.c.l.b16 %v466
  %v551 = vunpack.c.h.b16 %v466
  %v552 = vunpack.c.l.b16 %v467
  %v553 = vunpack.c.h.b16 %v467
  %v554 = vunpack.c.l.b16 %v468
  %v555 = vunpack.c.h.b16 %v468
  %v556 = vunpack.c.l.b16 %v469
  %v557 = vunpack.c.h.b16 %v469
  %v558 = vunpack.c.l.b16 %v470
  %v559 = vunpack.c.h.b16 %v470
  %v560 = vunpack.c.l.b16 %v471
  %v561 = vunpack.c.h.b16 %v471
  %v562 = vunpack.c.l.b16 %v472
  %v563 = vunpack.c.h.b16 %v472
  %v564 = vunpack.c.l.b16 %v473
  %v565 = vunpack.c.h.b16 %v473
  %v566 = vunpack.c.l.b16 %v474
  %v567 = vunpack.c.h.b16 %v474
  %v568 = vunpack.c.l.b16 %v475
  %v569 = vunpack.c.h.b16 %v475
  %v570 = vunpack.c.l.b16 %v476
  %v571 = vunpack.c.h.b16 %v476
  %v572 = vunpack.c.l.b16 %v477
  %v573 = vunpack.c.h.b16 %v477
  %v574 = vunpack.c.l.b16 %v478
  %v575 = vunpack.c.h.b16 %v478
  %v576 = vunpack.c.l.b16 %v479
  %v577 = vunpack.c.h.b16 %v479
  %v578 = vunpack.c.l.b16 %v480
  %v579 = vunpack.c.h.b16 %v480
  %v580 = vunpack.c.l.b16 %v481
  %v581 = vunpack.c.h.b16 %v481
  %v582 = vunpack.c.l.b16 %v482
  %v583 = vunpack.c.h.b16 %v482
  %v584 = vunpack.c.l.b16 %v483
  %v585 = vunpack.c.h.b16 %v483
  %v586 = vunpack.c.l.b16 %v484
  %v587 = vunpack.c.h.b16 %v484
  %v588 = vpack.c.b16 %v528, %v524
  %v589 = vpack.c.b16 %v529, %v525
  %v590 = vpack.c.b16 %v530, %v526
  %v591 = vpack.c.b16 %v531, %v527
  %v592 = vpack.c.b16 %v536, %v532
  %v593 = vpack.c.b16 %v537, %v533
  %v594 = vpack.c.b16 %v538, %v534
  %v595 = vpack.c.b16 %v539, %v535
  %v596 = vpack.c.b16 %v544, %v540
  %v597 = vpack.c.b16 %v545, %v541
  %v598 = vpack.c.b16 %v546, %v542
  %v599 = vpack.c.b16 %v547, %v543
  %v600 = vpack.c.b16 %v552, %v548
  %v601 = vpack.c.b16 %v553, %v549
  %v602 = vpack.c.b16 %v554, %v550
  %v603 = vpack.c.b16 %v555, %v551
  %v604 = vpack.c.b16 %v560, %v556
  %v605 = vpack.c.b16 %v561, %v557
  %v606 = vpack.c.b16 %v562, %v558
  %v607 = vpack.c.b16 %v563, %v559
  %v608 = vpack.c.b16 %v568, %v564
  %v609 = vpack.c.b16 %v569, %v565
  %v610 = vpack.c.b16 %v570, %v566
  %v611 = vpack.c.b16 %v571, %v567
  %v612 = vpack.c.b16 %v576, %v572
  %v613 = vpack.c.b16 %v577, %v573
  %v614 = vpack.c.b16 %v578, %v574
  %v615 = vpack.c.b16 %v579, %v575
  %v616 = vpack.c.b16 %v584, %v580
  %v617 = vpack.c.b16 %v585, %v581
  %v618 = vpack.c.b16 %v586, %v582
  %v619 = vpack.c.b16 %v587, %v583
  %652 = vmatprep.subr.bf16.mxu0 %v589
  %653 = vmatpush1.bf16.msra.mxu0 %v588
  %654 = vmatprep.subr.bf16.mxu0 %v593
  %655 = vmatpush1.bf16.msra.mxu0 %v592
  %656 = vmatprep.subr.bf16.mxu0 %v597
  %657 = vmatpush1.bf16.msra.mxu0 %v596
  %658 = vmatprep.subr.bf16.mxu0 %v601
  %659 = vmatpush1.bf16.msra.mxu0 %v600
  %660 = vmatprep.subr.bf16.mxu0 %v605
  %661 = vmatpush1.bf16.msra.mxu0 %v604
  %662 = vmatprep.subr.bf16.mxu0 %v609
  %663 = vmatpush1.bf16.msra.mxu0 %v608
  %664 = vmatprep.subr.bf16.mxu0 %v613
  %665 = vmatpush1.bf16.msra.mxu0 %v612
  %666 = vmatprep.subr.bf16.mxu0 %v617
  %667 = vmatpush1.bf16.msra.mxu0 %v616
  %668 = vmatprep.subr.bf16.mxu0 0
  %669 = vmatpush1.bf16.msra.mxu0 0
  %670 = vmatprep.subr.bf16.mxu0 0
  %671 = vmatpush1.bf16.msra.mxu0 0
  %672 = vmatprep.subr.bf16.mxu0 0
  %673 = vmatpush1.bf16.msra.mxu0 0
  %674 = vmatprep.subr.bf16.mxu0 0
  %675 = vmatpush1.bf16.msra.mxu0 0
  %676 = vmatprep.subr.bf16.mxu0 0
  %677 = vmatpush1.bf16.msra.mxu0 0
  %678 = vmatprep.subr.bf16.mxu0 0
  %679 = vmatpush1.bf16.msra.mxu0 0
  %680 = vmatprep.subr.bf16.mxu0 0
  %681 = vmatpush1.bf16.msra.mxu0 0
  %682 = vmatprep.subr.bf16.mxu0 0
  %683 = vmatpush1.bf16.msra.mxu0 0
  %684 = vmatprep.mubr.bf16.mxu0 0
  %685 = vmatmul.mubr.bf16.gmra.mrb[0].mxu0 %v491
  %v686 = vpop.f32.mrb[0].mxu0
  %v687 = vadd.f32 0.0, %v686
  %v688 = vpop.f32.mrb[0].mxu0
  %v689 = vadd.f32 0.0, %v688
  %v690 = vpop.f32.mrb[0].mxu0
  %v691 = vpop.f32.mrb[0].mxu0
  %692 = vdwg.mxu0
  %693 = vmatprep.subr.bf16.mxu0 %v591
  %694 = vmatpush1.bf16.msra.mxu0 %v590
  %695 = vmatprep.subr.bf16.mxu0 %v595
  %696 = vmatpush1.bf16.msra.mxu0 %v594
  %697 = vmatprep.subr.bf16.mxu0 %v599
  %698 = vmatpush1.bf16.msra.mxu0 %v598
  %699 = vmatprep.subr.bf16.mxu0 %v603
  %700 = vmatpush1.bf16.msra.mxu0 %v602
  %701 = vmatprep.subr.bf16.mxu0 %v607
  %702 = vmatpush1.bf16.msra.mxu0 %v606
  %703 = vmatprep.subr.bf16.mxu0 %v611
  %704 = vmatpush1.bf16.msra.mxu0 %v610
  %705 = vmatprep.subr.bf16.mxu0 %v615
  %706 = vmatpush1.bf16.msra.mxu0 %v614
  %707 = vmatprep.subr.bf16.mxu0 %v619
  %708 = vmatpush1.bf16.msra.mxu0 %v618
  %709 = vmatprep.subr.bf16.mxu0 0
  %710 = vmatpush1.bf16.msra.mxu0 0
  %711 = vmatprep.subr.bf16.mxu0 0
  %712 = vmatpush1.bf16.msra.mxu0 0
  %713 = vmatprep.subr.bf16.mxu0 0
  %714 = vmatpush1.bf16.msra.mxu0 0
  %715 = vmatprep.subr.bf16.mxu0 0
  %716 = vmatpush1.bf16.msra.mxu0 0
  %717 = vmatprep.subr.bf16.mxu0 0
  %718 = vmatpush1.bf16.msra.mxu0 0
  %719 = vmatprep.subr.bf16.mxu0 0
  %720 = vmatpush1.bf16.msra.mxu0 0
  %721 = vmatprep.subr.bf16.mxu0 0
  %722 = vmatpush1.bf16.msra.mxu0 0
  %723 = vmatprep.subr.bf16.mxu0 0
  %724 = vmatpush1.bf16.msra.mxu0 0
  %725 = vmatprep.mubr.bf16.mxu0 0
  %726 = vmatmul.mubr.bf16.gmra.mrb[0].mxu0 %v491
  %v727 = vpop.f32.mrb[0].mxu0
  %v728 = vadd.f32 0.0, %v727
  %v729 = vpop.f32.mrb[0].mxu0
  %v730 = vadd.f32 0.0, %v729
  %v731 = vpop.f32.mrb[0].mxu0
  %v732 = vpop.f32.mrb[0].mxu0
  %733 = vdwg.mxu0
  %v734 = vadd.f32 %v487, %v687
  %v735 = vadd.f32 %v488, %v689
  %v736 = vadd.f32 %v489, %v728
  %v737 = vadd.f32 %v490, %v730
  %v738 = vxor.u32 %v734, 2147483648
  %v739 = vmul.f32 %v738, 1.442695
  %v740 = vpow.pop %v739
  %v741 = vadd.f32 %v740, 1.0
  %v742 = vrcp.pop %v741
  %v743 = vmul.f32 1.0, %v742
  %v744 = vxor.u32 %v735, 2147483648
  %v745 = vmul.f32 %v744, 1.442695
  %v746 = vpow.pop %v745
  %v747 = vadd.f32 %v746, 1.0
  %v748 = vrcp.pop %v747
  %v749 = vmul.f32 1.0, %v748
  %v750 = vtanh.pop %v736
  %v751 = vxor.u32 %v737, 2147483648
  %v752 = vmul.f32 %v751, 1.442695
  %v753 = vpow.pop %v752
  %v754 = vadd.f32 %v753, 1.0
  %v755 = vrcp.pop %v754
  %v756 = vmul.f32 1.0, %v755
  %v757 = vmul.f32 %v749, %v486
  %v758 = vmul.f32 %v743, %v750
  %v759 = vadd.f32 %v757, %v758
  %v760 = vtanh.pop %v759
  %v761 = vmul.f32 %v756, %v760
  %v762 = vpack.c.bf16 %v761, %v761
  %763 = vst [vmem:[#allocation4] sm:$0xf] %v762
  %v764 = vld [vmem:[#allocation5 + $0x20] sm:$0xff]
  %v765 = vld [vmem:[#allocation5 + $0x28] sm:$0xff]
  %v766 = vld [vmem:[#allocation5 + $0x30] sm:$0xff]
  %v767 = vld [vmem:[#allocation5 + $0x38] sm:$0xff]
  %768 = vmatprep.subr.bf16.mxu0 %v589
  %769 = vmatpush1.bf16.msra.mxu0 %v588
  %770 = vmatprep.subr.bf16.mxu0 %v593
  %771 = vmatpush1.bf16.msra.mxu0 %v592
  %772 = vmatprep.subr.bf16.mxu0 %v597
  %773 = vmatpush1.bf16.msra.mxu0 %v596
  %774 = vmatprep.subr.bf16.mxu0 %v601
  %775 = vmatpush1.bf16.msra.mxu0 %v600
  %776 = vmatprep.subr.bf16.mxu0 %v605
  %777 = vmatpush1.bf16.msra.mxu0 %v604
  %778 = vmatprep.subr.bf16.mxu0 %v609
  %779 = vmatpush1.bf16.msra.mxu0 %v608
  %780 = vmatprep.subr.bf16.mxu0 %v613
  %781 = vmatpush1.bf16.msra.mxu0 %v612
  %782 = vmatprep.subr.bf16.mxu0 %v617
  %783 = vmatpush1.bf16.msra.mxu0 %v616
  %784 = vmatprep.subr.bf16.mxu0 0
  %785 = vmatpush1.bf16.msra.mxu0 0
  %786 = vmatprep.subr.bf16.mxu0 0
  %787 = vmatpush1.bf16.msra.mxu0 0
  %788 = vmatprep.subr.bf16.mxu0 0
  %789 = vmatpush1.bf16.msra.mxu0 0
  %790 = vmatprep.subr.bf16.mxu0 0
  %791 = vmatpush1.bf16.msra.mxu0 0
  %792 = vmatprep.subr.bf16.mxu0 0
  %793 = vmatpush1.bf16.msra.mxu0 0
  %794 = vmatprep.subr.bf16.mxu0 0
  %795 = vmatpush1.bf16.msra.mxu0 0
  %796 = vmatprep.subr.bf16.mxu0 0
  %797 = vmatpush1.bf16.msra.mxu0 0
  %798 = vmatprep.subr.bf16.mxu0 0
  %799 = vmatpush1.bf16.msra.mxu0 0
  %800 = vmatprep.mubr.bf16.mxu0 0
  %801 = vmatmul.mubr.bf16.gmra.mrb[0].mxu0 %v762
  %v802 = vpop.f32.mrb[0].mxu0
  %v803 = vadd.f32 0.0, %v802
  %v804 = vpop.f32.mrb[0].mxu0
  %v805 = vadd.f32 0.0, %v804
  %v806 = vpop.f32.mrb[0].mxu0
  %v807 = vpop.f32.mrb[0].mxu0
  %808 = vdwg.mxu0
  %809 = vmatprep.subr.bf16.mxu0 %v591
  %810 = vmatpush1.bf16.msra.mxu0 %v590
  %811 = vmatprep.subr.bf16.mxu0 %v595
  %812 = vmatpush1.bf16.msra.mxu0 %v594
  %813 = vmatprep.subr.bf16.mxu0 %v599
  %814 = vmatpush1.bf16.msra.mxu0 %v598
  %815 = vmatprep.subr.bf16.mxu0 %v603
  %816 = vmatpush1.bf16.msra.mxu0 %v602
  %817 = vmatprep.subr.bf16.mxu0 %v607
  %818 = vmatpush1.bf16.msra.mxu0 %v606
  %819 = vmatprep.subr.bf16.mxu0 %v611
  %820 = vmatpush1.bf16.msra.mxu0 %v610
  %821 = vmatprep.subr.bf16.mxu0 %v615
  %822 = vmatpush1.bf16.msra.mxu0 %v614
  %823 = vmatprep.subr.bf16.mxu0 %v619
  %824 = vmatpush1.bf16.msra.mxu0 %v618
  %825 = vmatprep.subr.bf16.mxu0 0
  %826 = vmatpush1.bf16.msra.mxu0 0
  %827 = vmatprep.subr.bf16.mxu0 0
  %828 = vmatpush1.bf16.msra.mxu0 0
  %829 = vmatprep.subr.bf16.mxu0 0
  %830 = vmatpush1.bf16.msra.mxu0 0
  %831 = vmatprep.subr.bf16.mxu0 0
  %832 = vmatpush1.bf16.msra.mxu0 0
  %833 = vmatprep.subr.bf16.mxu0 0
  %834 = vmatpush1.bf16.msra.mxu0 0
  %835 = vmatprep.subr.bf16.mxu0 0
  %836 = vmatpush1.bf16.msra.mxu0 0
  %837 = vmatprep.subr.bf16.mxu0 0
  %838 = vmatpush1.bf16.msra.mxu0 0
  %839 = vmatprep.subr.bf16.mxu0 0
  %840 = vmatpush1.bf16.msra.mxu0 0
  %841 = vmatprep.mubr.bf16.mxu0 0
  %842 = vmatmul.mubr.bf16.gmra.mrb[0].mxu0 %v762
  %v843 = vpop.f32.mrb[0].mxu0
  %v844 = vadd.f32 0.0, %v843
  %v845 = vpop.f32.mrb[0].mxu0
  %v846 = vadd.f32 0.0, %v845
  %v847 = vpop.f32.mrb[0].mxu0
  %v848 = vpop.f32.mrb[0].mxu0
  %849 = vdwg.mxu0
  %v850 = vadd.f32 %v764, %v803
  %v851 = vadd.f32 %v765, %v805
  %v852 = vadd.f32 %v766, %v844
  %v853 = vadd.f32 %v767, %v846
  %v854 = vxor.u32 %v850, 2147483648
  %v855 = vmul.f32 %v854, 1.442695
  %v856 = vpow.pop %v855
  %v857 = vadd.f32 %v856, 1.0
  %v858 = vrcp.pop %v857
  %v859 = vmul.f32 1.0, %v858
  %v860 = vxor.u32 %v851, 2147483648
  %v861 = vmul.f32 %v860, 1.442695
  %v862 = vpow.pop %v861
  %v863 = vadd.f32 %v862, 1.0
  %v864 = vrcp.pop %v863
  %v865 = vmul.f32 1.0, %v864
  %v866 = vtanh.pop %v852
  %v867 = vxor.u32 %v853, 2147483648
  %v868 = vmul.f32 %v867, 1.442695
  %v869 = vpow.pop %v868
  %v870 = vadd.f32 %v869, 1.0
  %v871 = vrcp.pop %v870
  %v872 = vmul.f32 1.0, %v871
  %v873 = vmul.f32 %v865, %v759
  %v874 = vmul.f32 %v859, %v866
  %v875 = vadd.f32 %v873, %v874
  %v876 = vtanh.pop %v875
  %v877 = vmul.f32 %v872, %v876
  %v878 = vpack.c.bf16 %v877, %v877
  %v880 = vrot.slane %v878, 4
  %882 = vst [vmem:[#allocation4] sm:$0xf0] %v880
  %v883 = vld [vmem:[#allocation5 + $0x40] sm:$0xff]
  %v884 = vld [vmem:[#allocation5 + $0x48] sm:$0xff]
  %v885 = vld [vmem:[#allocation5 + $0x50] sm:$0xff]
  %v886 = vld [vmem:[#allocation5 + $0x58] sm:$0xff]
  %887 = vmatprep.subr.bf16.mxu0 %v589
  %888 = vmatpush1.bf16.msra.mxu0 %v588
  %889 = vmatprep.subr.bf16.mxu0 %v593
  %890 = vmatpush1.bf16.msra.mxu0 %v592
  %891 = vmatprep.subr.bf16.mxu0 %v597
  %892 = vmatpush1.bf16.msra.mxu0 %v596
  %893 = vmatprep.subr.bf16.mxu0 %v601
  %894 = vmatpush1.bf16.msra.mxu0 %v600
  %895 = vmatprep.subr.bf16.mxu0 %v605
  %896 = vmatpush1.bf16.msra.mxu0 %v604
  %897 = vmatprep.subr.bf16.mxu0 %v609
  %898 = vmatpush1.bf16.msra.mxu0 %v608
  %899 = vmatprep.subr.bf16.mxu0 %v613
  %900 = vmatpush1.bf16.msra.mxu0 %v612
  %901 = vmatprep.subr.bf16.mxu0 %v617
  %902 = vmatpush1.bf16.msra.mxu0 %v616
  %903 = vmatprep.subr.bf16.mxu0 0
  %904 = vmatpush1.bf16.msra.mxu0 0
  %905 = vmatprep.subr.bf16.mxu0 0
  %906 = vmatpush1.bf16.msra.mxu0 0
  %907 = vmatprep.subr.bf16.mxu0 0
  %908 = vmatpush1.bf16.msra.mxu0 0
  %909 = vmatprep.subr.bf16.mxu0 0
  %910 = vmatpush1.bf16.msra.mxu0 0
  %911 = vmatprep.subr.bf16.mxu0 0
  %912 = vmatpush1.bf16.msra.mxu0 0
  %913 = vmatprep.subr.bf16.mxu0 0
  %914 = vmatpush1.bf16.msra.mxu0 0
  %915 = vmatprep.subr.bf16.mxu0 0
  %916 = vmatpush1.bf16.msra.mxu0 0
  %917 = vmatprep.subr.bf16.mxu0 0
  %918 = vmatpush1.bf16.msra.mxu0 0
  %919 = vmatprep.mubr.bf16.mxu0 0
  %920 = vmatmul.mubr.bf16.gmra.mrb[0].mxu0 %v878
  %v921 = vpop.f32.mrb[0].mxu0
  %v922 = vadd.f32 0.0, %v921
  %v923 = vpop.f32.mrb[0].mxu0
  %v924 = vadd.f32 0.0, %v923
  %v925 = vpop.f32.mrb[0].mxu0
  %v926 = vpop.f32.mrb[0].mxu0
  %927 = vdwg.mxu0
  %928 = vmatprep.subr.bf16.mxu0 %v591
  %929 = vmatpush1.bf16.msra.mxu0 %v590
  %930 = vmatprep.subr.bf16.mxu0 %v595
  %931 = vmatpush1.bf16.msra.mxu0 %v594
  %932 = vmatprep.subr.bf16.mxu0 %v599
  %933 = vmatpush1.bf16.msra.mxu0 %v598
  %934 = vmatprep.subr.bf16.mxu0 %v603
  %935 = vmatpush1.bf16.msra.mxu0 %v602
  %936 = vmatprep.subr.bf16.mxu0 %v607
  %937 = vmatpush1.bf16.msra.mxu0 %v606
  %938 = vmatprep.subr.bf16.mxu0 %v611
  %939 = vmatpush1.bf16.msra.mxu0 %v610
  %940 = vmatprep.subr.bf16.mxu0 %v615
  %941 = vmatpush1.bf16.msra.mxu0 %v614
  %942 = vmatprep.subr.bf16.mxu0 %v619
  %943 = vmatpush1.bf16.msra.mxu0 %v618
  %944 = vmatprep.subr.bf16.mxu0 0
  %945 = vmatpush1.bf16.msra.mxu0 0
  %946 = vmatprep.subr.bf16.mxu0 0
  %947 = vmatpush1.bf16.msra.mxu0 0
  %948 = vmatprep.subr.bf16.mxu0 0
  %949 = vmatpush1.bf16.msra.mxu0 0
  %950 = vmatprep.subr.bf16.mxu0 0
  %951 = vmatpush1.bf16.msra.mxu0 0
  %952 = vmatprep.subr.bf16.mxu0 0
  %953 = vmatpush1.bf16.msra.mxu0 0
  %954 = vmatprep.subr.bf16.mxu0 0
  %955 = vmatpush1.bf16.msra.mxu0 0
  %956 = vmatprep.subr.bf16.mxu0 0
  %957 = vmatpush1.bf16.msra.mxu0 0
  %958 = vmatprep.subr.bf16.mxu0 0
  %959 = vmatpush1.bf16.msra.mxu0 0
  %960 = vmatprep.mubr.bf16.mxu0 0
  %961 = vmatmul.mubr.bf16.gmra.mrb[0].mxu0 %v878
  %v962 = vpop.f32.mrb[0].mxu0
  %v963 = vadd.f32 0.0, %v962
  %v964 = vpop.f32.mrb[0].mxu0
  %v965 = vadd.f32 0.0, %v964
  %v966 = vpop.f32.mrb[0].mxu0
  %v967 = vpop.f32.mrb[0].mxu0
  %968 = vdwg.mxu0
  %v969 = vadd.f32 %v883, %v922
  %v970 = vadd.f32 %v884, %v924
  %v971 = vadd.f32 %v885, %v963
  %v972 = vadd.f32 %v886, %v965
  %v973 = vxor.u32 %v969, 2147483648
  %v974 = vmul.f32 %v973, 1.442695
  %v975 = vpow.pop %v974
  %v976 = vadd.f32 %v975, 1.0
  %v977 = vrcp.pop %v976
  %v978 = vmul.f32 1.0, %v977
  %v979 = vxor.u32 %v970, 2147483648
  %v980 = vmul.f32 %v979, 1.442695
  %v981 = vpow.pop %v980
  %v982 = vadd.f32 %v981, 1.0
  %v983 = vrcp.pop %v982
  %v984 = vmul.f32 1.0, %v983
  %v985 = vtanh.pop %v971
  %v986 = vxor.u32 %v972, 2147483648
  %v987 = vmul.f32 %v986, 1.442695
  %v988 = vpow.pop %v987
  %v989 = vadd.f32 %v988, 1.0
  %v990 = vrcp.pop %v989
  %v991 = vmul.f32 1.0, %v990
  %v992 = vmul.f32 %v984, %v875
  %v993 = vmul.f32 %v978, %v985
  %v994 = vadd.f32 %v992, %v993
  %v995 = vtanh.pop %v994
  %v996 = vmul.f32 %v991, %v995
  %v997 = vpack.c.bf16 %v996, %v996
  %998 = vst [vmem:[#allocation4 + $0x8] sm:$0xf] %v997
  %v999 = vld [vmem:[#allocation5 + $0x60] sm:$0xff]
  %v1000 = vld [vmem:[#allocation5 + $0x68] sm:$0xff]
  %v1001 = vld [vmem:[#allocation5 + $0x70] sm:$0xff]
  %v1002 = vld [vmem:[#allocation5 + $0x78] sm:$0xff]
  %1003 = vmatprep.subr.bf16.mxu0 %v589
  %1004 = vmatpush1.bf16.msra.mxu0 %v588
  %1005 = vmatprep.subr.bf16.mxu0 %v593
  %1006 = vmatpush1.bf16.msra.mxu0 %v592
  %1007 = vmatprep.subr.bf16.mxu0 %v597
  %1008 = vmatpush1.bf16.msra.mxu0 %v596
  %1009 = vmatprep.subr.bf16.mxu0 %v601
  %1010 = vmatpush1.bf16.msra.mxu0 %v600
  %1011 = vmatprep.subr.bf16.mxu0 %v605
  %1012 = vmatpush1.bf16.msra.mxu0 %v604
  %1013 = vmatprep.subr.bf16.mxu0 %v609
  %1014 = vmatpush1.bf16.msra.mxu0 %v608
  %1015 = vmatprep.subr.bf16.mxu0 %v613
  %1016 = vmatpush1.bf16.msra.mxu0 %v612
  %1017 = vmatprep.subr.bf16.mxu0 %v617
  %1018 = vmatpush1.bf16.msra.mxu0 %v616
  %1019 = vmatprep.subr.bf16.mxu0 0
  %1020 = vmatpush1.bf16.msra.mxu0 0
  %1021 = vmatprep.subr.bf16.mxu0 0
  %1022 = vmatpush1.bf16.msra.mxu0 0
  %1023 = vmatprep.subr.bf16.mxu0 0
  %1024 = vmatpush1.bf16.msra.mxu0 0
  %1025 = vmatprep.subr.bf16.mxu0 0
  %1026 = vmatpush1.bf16.msra.mxu0 0
  %1027 = vmatprep.subr.bf16.mxu0 0
  %1028 = vmatpush1.bf16.msra.mxu0 0
  %1029 = vmatprep.subr.bf16.mxu0 0
  %1030 = vmatpush1.bf16.msra.mxu0 0
  %1031 = vmatprep.subr.bf16.mxu0 0
  %1032 = vmatpush1.bf16.msra.mxu0 0
  %1033 = vmatprep.subr.bf16.mxu0 0
  %1034 = vmatpush1.bf16.msra.mxu0 0
  %1035 = vmatprep.mubr.bf16.mxu0 0
  %1036 = vmatmul.mubr.bf16.gmra.mrb[0].mxu0 %v997
  %v1037 = vpop.f32.mrb[0].mxu0
  %v1038 = vadd.f32 0.0, %v1037
  %v1039 = vpop.f32.mrb[0].mxu0
  %v1040 = vadd.f32 0.0, %v1039
  %v1041 = vpop.f32.mrb[0].mxu0
  %v1042 = vpop.f32.mrb[0].mxu0
  %1043 = vdwg.mxu0
  %1044 = vmatprep.subr.bf16.mxu0 %v591
  %1045 = vmatpush1.bf16.msra.mxu0 %v590
  %1046 = vmatprep.subr.bf16.mxu0 %v595
  %1047 = vmatpush1.bf16.msra.mxu0 %v594
  %1048 = vmatprep.subr.bf16.mxu0 %v599
  %1049 = vmatpush1.bf16.msra.mxu0 %v598
  %1050 = vmatprep.subr.bf16.mxu0 %v603
  %1051 = vmatpush1.bf16.msra.mxu0 %v602
  %1052 = vmatprep.subr.bf16.mxu0 %v607
  %1053 = vmatpush1.bf16.msra.mxu0 %v606
  %1054 = vmatprep.subr.bf16.mxu0 %v611
  %1055 = vmatpush1.bf16.msra.mxu0 %v610
  %1056 = vmatprep.subr.bf16.mxu0 %v615
  %1057 = vmatpush1.bf16.msra.mxu0 %v614
  %1058 = vmatprep.subr.bf16.mxu0 %v619
  %1059 = vmatpush1.bf16.msra.mxu0 %v618
  %1060 = vmatprep.subr.bf16.mxu0 0
  %1061 = vmatpush1.bf16.msra.mxu0 0
  %1062 = vmatprep.subr.bf16.mxu0 0
  %1063 = vmatpush1.bf16.msra.mxu0 0
  %1064 = vmatprep.subr.bf16.mxu0 0
  %1065 = vmatpush1.bf16.msra.mxu0 0
  %1066 = vmatprep.subr.bf16.mxu0 0
  %1067 = vmatpush1.bf16.msra.mxu0 0
  %1068 = vmatprep.subr.bf16.mxu0 0
  %1069 = vmatpush1.bf16.msra.mxu0 0
  %1070 = vmatprep.subr.bf16.mxu0 0
  %1071 = vmatpush1.bf16.msra.mxu0 0
  %1072 = vmatprep.subr.bf16.mxu0 0
  %1073 = vmatpush1.bf16.msra.mxu0 0
  %1074 = vmatprep.subr.bf16.mxu0 0
  %1075 = vmatpush1.bf16.msra.mxu0 0
  %1076 = vmatprep.mubr.bf16.mxu0 0
  %1077 = vmatmul.mubr.bf16.gmra.mrb[0].mxu0 %v997
  %v1078 = vpop.f32.mrb[0].mxu0
  %v1079 = vadd.f32 0.0, %v1078
  %v1080 = vpop.f32.mrb[0].mxu0
  %v1081 = vadd.f32 0.0, %v1080
  %v1082 = vpop.f32.mrb[0].mxu0
  %v1083 = vpop.f32.mrb[0].mxu0
  %1084 = vdwg.mxu0
  %v1085 = vadd.f32 %v999, %v1038
  %v1086 = vadd.f32 %v1000, %v1040
  %v1087 = vadd.f32 %v1001, %v1079
  %v1088 = vadd.f32 %v1002, %v1081
  %v1089 = vxor.u32 %v1085, 2147483648
  %v1090 = vmul.f32 %v1089, 1.442695
  %v1091 = vpow.pop %v1090
  %v1092 = vadd.f32 %v1091, 1.0
  %v1093 = vrcp.pop %v1092
  %v1094 = vmul.f32 1.0, %v1093
  %v1095 = vxor.u32 %v1086, 2147483648
  %v1096 = vmul.f32 %v1095, 1.442695
  %v1097 = vpow.pop %v1096
  %v1098 = vadd.f32 %v1097, 1.0
  %v1099 = vrcp.pop %v1098
  %v1100 = vmul.f32 1.0, %v1099
  %v1101 = vtanh.pop %v1087
  %v1102 = vxor.u32 %v1088, 2147483648
  %v1103 = vmul.f32 %v1102, 1.442695
  %v1104 = vpow.pop %v1103
  %v1105 = vadd.f32 %v1104, 1.0
  %v1106 = vrcp.pop %v1105
  %v1107 = vmul.f32 1.0, %v1106
  %v1108 = vmul.f32 %v1100, %v994
  %v1109 = vmul.f32 %v1094, %v1101
  %v1110 = vadd.f32 %v1108, %v1109
  %v1111 = vtanh.pop %v1110
  %v1112 = vmul.f32 %v1107, %v1111
  %v1113 = vpack.c.bf16 %v1112, %v1112
  %v1115 = vrot.slane %v1113, 4
  %1117 = vst [vmem:[#allocation4 + $0x8] sm:$0xf0] %v1115
  %v1118 = vld [vmem:[#allocation5 + $0x80] sm:$0xff]
  %v1119 = vld [vmem:[#allocation5 + $0x88] sm:$0xff]
  %v1120 = vld [vmem:[#allocation5 + $0x90] sm:$0xff]
  %v1121 = vld [vmem:[#allocation5 + $0x98] sm:$0xff]
  %1122 = vmatprep.subr.bf16.mxu0 %v589
  %1123 = vmatpush1.bf16.msra.mxu0 %v588
  %1124 = vmatprep.subr.bf16.mxu0 %v593
  %1125 = vmatpush1.bf16.msra.mxu0 %v592
  %1126 = vmatprep.subr.bf16.mxu0 %v597
  %1127 = vmatpush1.bf16.msra.mxu0 %v596
  %1128 = vmatprep.subr.bf16.mxu0 %v601
  %1129 = vmatpush1.bf16.msra.mxu0 %v600
  %1130 = vmatprep.subr.bf16.mxu0 %v605
  %1131 = vmatpush1.bf16.msra.mxu0 %v604
  %1132 = vmatprep.subr.bf16.mxu0 %v609
  %1133 = vmatpush1.bf16.msra.mxu0 %v608
  %1134 = vmatprep.subr.bf16.mxu0 %v613
  %1135 = vmatpush1.bf16.msra.mxu0 %v612
  %1136 = vmatprep.subr.bf16.mxu0 %v617
  %1137 = vmatpush1.bf16.msra.mxu0 %v616
  %1138 = vmatprep.subr.bf16.mxu0 0
  %1139 = vmatpush1.bf16.msra.mxu0 0
  %1140 = vmatprep.subr.bf16.mxu0 0
  %1141 = vmatpush1.bf16.msra.mxu0 0
  %1142 = vmatprep.subr.bf16.mxu0 0
  %1143 = vmatpush1.bf16.msra.mxu0 0
  %1144 = vmatprep.subr.bf16.mxu0 0
  %1145 = vmatpush1.bf16.msra.mxu0 0
  %1146 = vmatprep.subr.bf16.mxu0 0
  %1147 = vmatpush1.bf16.msra.mxu0 0
  %1148 = vmatprep.subr.bf16.mxu0 0
  %1149 = vmatpush1.bf16.msra.mxu0 0
  %1150 = vmatprep.subr.bf16.mxu0 0
  %1151 = vmatpush1.bf16.msra.mxu0 0
  %1152 = vmatprep.subr.bf16.mxu0 0
  %1153 = vmatpush1.bf16.msra.mxu0 0
  %1154 = vmatprep.mubr.bf16.mxu0 0
  %1155 = vmatmul.mubr.bf16.gmra.mrb[0].mxu0 %v1113
  %v1156 = vpop.f32.mrb[0].mxu0
  %v1157 = vadd.f32 0.0, %v1156
  %v1158 = vpop.f32.mrb[0].mxu0
  %v1159 = vadd.f32 0.0, %v1158
  %v1160 = vpop.f32.mrb[0].mxu0
  %v1161 = vpop.f32.mrb[0].mxu0
  %1162 = vdwg.mxu0
  %1163 = vmatprep.subr.bf16.mxu0 %v591
  %1164 = vmatpush1.bf16.msra.mxu0 %v590
  %1165 = vmatprep.subr.bf16.mxu0 %v595
  %1166 = vmatpush1.bf16.msra.mxu0 %v594
  %1167 = vmatprep.subr.bf16.mxu0 %v599
  %1168 = vmatpush1.bf16.msra.mxu0 %v598
  %1169 = vmatprep.subr.bf16.mxu0 %v603
  %1170 = vmatpush1.bf16.msra.mxu0 %v602
  %1171 = vmatprep.subr.bf16.mxu0 %v607
  %1172 = vmatpush1.bf16.msra.mxu0 %v606
  %1173 = vmatprep.subr.bf16.mxu0 %v611
  %1174 = vmatpush1.bf16.msra.mxu0 %v610
  %1175 = vmatprep.subr.bf16.mxu0 %v615
  %1176 = vmatpush1.bf16.msra.mxu0 %v614
  %1177 = vmatprep.subr.bf16.mxu0 %v619
  %1178 = vmatpush1.bf16.msra.mxu0 %v618
  %1179 = vmatprep.subr.bf16.mxu0 0
  %1180 = vmatpush1.bf16.msra.mxu0 0
  %1181 = vmatprep.subr.bf16.mxu0 0
  %1182 = vmatpush1.bf16.msra.mxu0 0
  %1183 = vmatprep.subr.bf16.mxu0 0
  %1184 = vmatpush1.bf16.msra.mxu0 0
  %1185 = vmatprep.subr.bf16.mxu0 0
  %1186 = vmatpush1.bf16.msra.mxu0 0
  %1187 = vmatprep.subr.bf16.mxu0 0
  %1188 = vmatpush1.bf16.msra.mxu0 0
  %1189 = vmatprep.subr.bf16.mxu0 0
  %1190 = vmatpush1.bf16.msra.mxu0 0
  %1191 = vmatprep.subr.bf16.mxu0 0
  %1192 = vmatpush1.bf16.msra.mxu0 0
  %1193 = vmatprep.subr.bf16.mxu0 0
  %1194 = vmatpush1.bf16.msra.mxu0 0
  %1195 = vmatprep.mubr.bf16.mxu0 0
  %1196 = vmatmul.mubr.bf16.gmra.mrb[0].mxu0 %v1113
  %v1197 = vpop.f32.mrb[0].mxu0
  %v1198 = vadd.f32 0.0, %v1197
  %v1199 = vpop.f32.mrb[0].mxu0
  %v1200 = vadd.f32 0.0, %v1199
  %v1201 = vpop.f32.mrb[0].mxu0
  %v1202 = vpop.f32.mrb[0].mxu0
  %1203 = vdwg.mxu0
  %v1204 = vadd.f32 %v1118, %v1157
  %v1205 = vadd.f32 %v1119, %v1159
  %v1206 = vadd.f32 %v1120, %v1198
  %v1207 = vadd.f32 %v1121, %v1200
  %v1208 = vxor.u32 %v1204, 2147483648
  %v1209 = vmul.f32 %v1208, 1.442695
  %v1210 = vpow.pop %v1209
  %v1211 = vadd.f32 %v1210, 1.0
  %v1212 = vrcp.pop %v1211
  %v1213 = vmul.f32 1.0, %v1212
  %v1214 = vxor.u32 %v1205, 2147483648
  %v1215 = vmul.f32 %v1214, 1.442695
  %v1216 = vpow.pop %v1215
  %v1217 = vadd.f32 %v1216, 1.0
  %v1218 = vrcp.pop %v1217
  %v1219 = vmul.f32 1.0, %v1218
  %v1220 = vtanh.pop %v1206
  %v1221 = vxor.u32 %v1207, 2147483648
  %v1222 = vmul.f32 %v1221, 1.442695
  %v1223 = vpow.pop %v1222
  %v1224 = vadd.f32 %v1223, 1.0
  %v1225 = vrcp.pop %v1224
  %v1226 = vmul.f32 1.0, %v1225
  %v1227 = vmul.f32 %v1219, %v1110
  %v1228 = vmul.f32 %v1213, %v1220
  %v1229 = vadd.f32 %v1227, %v1228
  %v1230 = vtanh.pop %v1229
  %v1231 = vmul.f32 %v1226, %v1230
  %v1232 = vpack.c.bf16 %v1231, %v1231
  %1233 = vst [vmem:[#allocation4 + $0x10] sm:$0xf] %v1232
  %v1234 = vld [vmem:[#allocation5 + $0xa0] sm:$0xff]
  %v1235 = vld [vmem:[#allocation5 + $0xa8] sm:$0xff]
  %v1236 = vld [vmem:[#allocation5 + $0xb0] sm:$0xff]
  %v1237 = vld [vmem:[#allocation5 + $0xb8] sm:$0xff]
  %1238 = vmatprep.subr.bf16.mxu0 %v589
  %1239 = vmatpush1.bf16.msra.mxu0 %v588
  %1240 = vmatprep.subr.bf16.mxu0 %v593
  %1241 = vmatpush1.bf16.msra.mxu0 %v592
  %1242 = vmatprep.subr.bf16.mxu0 %v597
  %1243 = vmatpush1.bf16.msra.mxu0 %v596
  %1244 = vmatprep.subr.bf16.mxu0 %v601
  %1245 = vmatpush1.bf16.msra.mxu0 %v600
  %1246 = vmatprep.subr.bf16.mxu0 %v605
  %1247 = vmatpush1.bf16.msra.mxu0 %v604
  %1248 = vmatprep.subr.bf16.mxu0 %v609
  %1249 = vmatpush1.bf16.msra.mxu0 %v608
  %1250 = vmatprep.subr.bf16.mxu0 %v613
  %1251 = vmatpush1.bf16.msra.mxu0 %v612
  %1252 = vmatprep.subr.bf16.mxu0 %v617
  %1253 = vmatpush1.bf16.msra.mxu0 %v616
  %1254 = vmatprep.subr.bf16.mxu0 0
  %1255 = vmatpush1.bf16.msra.mxu0 0
  %1256 = vmatprep.subr.bf16.mxu0 0
  %1257 = vmatpush1.bf16.msra.mxu0 0
  %1258 = vmatprep.subr.bf16.mxu0 0
  %1259 = vmatpush1.bf16.msra.mxu0 0
  %1260 = vmatprep.subr.bf16.mxu0 0
  %1261 = vmatpush1.bf16.msra.mxu0 0
  %1262 = vmatprep.subr.bf16.mxu0 0
  %1263 = vmatpush1.bf16.msra.mxu0 0
  %1264 = vmatprep.subr.bf16.mxu0 0
  %1265 = vmatpush1.bf16.msra.mxu0 0
  %1266 = vmatprep.subr.bf16.mxu0 0
  %1267 = vmatpush1.bf16.msra.mxu0 0
  %1268 = vmatprep.subr.bf16.mxu0 0
  %1269 = vmatpush1.bf16.msra.mxu0 0
  %1270 = vmatprep.mubr.bf16.mxu0 0
  %1271 = vmatmul.mubr.bf16.gmra.mrb[0].mxu0 %v1232
  %v1272 = vpop.f32.mrb[0].mxu0
  %v1273 = vadd.f32 0.0, %v1272
  %v1274 = vpop.f32.mrb[0].mxu0
  %v1275 = vadd.f32 0.0, %v1274
  %v1276 = vpop.f32.mrb[0].mxu0
  %v1277 = vpop.f32.mrb[0].mxu0
  %1278 = vdwg.mxu0
  %1279 = vmatprep.subr.bf16.mxu0 %v591
  %1280 = vmatpush1.bf16.msra.mxu0 %v590
  %1281 = vmatprep.subr.bf16.mxu0 %v595
  %1282 = vmatpush1.bf16.msra.mxu0 %v594
  %1283 = vmatprep.subr.bf16.mxu0 %v599
  %1284 = vmatpush1.bf16.msra.mxu0 %v598
  %1285 = vmatprep.subr.bf16.mxu0 %v603
  %1286 = vmatpush1.bf16.msra.mxu0 %v602
  %1287 = vmatprep.subr.bf16.mxu0 %v607
  %1288 = vmatpush1.bf16.msra.mxu0 %v606
  %1289 = vmatprep.subr.bf16.mxu0 %v611
  %1290 = vmatpush1.bf16.msra.mxu0 %v610
  %1291 = vmatprep.subr.bf16.mxu0 %v615
  %1292 = vmatpush1.bf16.msra.mxu0 %v614
  %1293 = vmatprep.subr.bf16.mxu0 %v619
  %1294 = vmatpush1.bf16.msra.mxu0 %v618
  %1295 = vmatprep.subr.bf16.mxu0 0
  %1296 = vmatpush1.bf16.msra.mxu0 0
  %1297 = vmatprep.subr.bf16.mxu0 0
  %1298 = vmatpush1.bf16.msra.mxu0 0
  %1299 = vmatprep.subr.bf16.mxu0 0
  %1300 = vmatpush1.bf16.msra.mxu0 0
  %1301 = vmatprep.subr.bf16.mxu0 0
  %1302 = vmatpush1.bf16.msra.mxu0 0
  %1303 = vmatprep.subr.bf16.mxu0 0
  %1304 = vmatpush1.bf16.msra.mxu0 0
  %1305 = vmatprep.subr.bf16.mxu0 0
  %1306 = vmatpush1.bf16.msra.mxu0 0
  %1307 = vmatprep.subr.bf16.mxu0 0
  %1308 = vmatpush1.bf16.msra.mxu0 0
  %1309 = vmatprep.subr.bf16.mxu0 0
  %1310 = vmatpush1.bf16.msra.mxu0 0
  %1311 = vmatprep.mubr.bf16.mxu0 0
  %1312 = vmatmul.mubr.bf16.gmra.mrb[0].mxu0 %v1232
  %v1313 = vpop.f32.mrb[0].mxu0
  %v1314 = vadd.f32 0.0, %v1313
  %v1315 = vpop.f32.mrb[0].mxu0
  %v1316 = vadd.f32 0.0, %v1315
  %v1317 = vpop.f32.mrb[0].mxu0
  %v1318 = vpop.f32.mrb[0].mxu0
  %1319 = vdwg.mxu0
  %v1320 = vadd.f32 %v1234, %v1273
  %v1321 = vadd.f32 %v1235, %v1275
  %v1322 = vadd.f32 %v1236, %v1314
  %v1323 = vadd.f32 %v1237, %v1316
  %v1324 = vxor.u32 %v1320, 2147483648
  %v1325 = vmul.f32 %v1324, 1.442695
  %v1326 = vpow.pop %v1325
  %v1327 = vadd.f32 %v1326, 1.0
  %v1328 = vrcp.pop %v1327
  %v1329 = vmul.f32 1.0, %v1328
  %v1330 = vxor.u32 %v1321, 2147483648
  %v1331 = vmul.f32 %v1330, 1.442695
  %v1332 = vpow.pop %v1331
  %v1333 = vadd.f32 %v1332, 1.0
  %v1334 = vrcp.pop %v1333
  %v1335 = vmul.f32 1.0, %v1334
  %v1336 = vtanh.pop %v1322
  %v1337 = vxor.u32 %v1323, 2147483648
  %v1338 = vmul.f32 %v1337, 1.442695
  %v1339 = vpow.pop %v1338
  %v1340 = vadd.f32 %v1339, 1.0
  %v1341 = vrcp.pop %v1340
  %v1342 = vmul.f32 1.0, %v1341
  %v1343 = vmul.f32 %v1335, %v1229
  %v1344 = vmul.f32 %v1329, %v1336
  %v1345 = vadd.f32 %v1343, %v1344
  %v1346 = vtanh.pop %v1345
  %v1347 = vmul.f32 %v1342, %v1346
  %v1348 = vpack.c.bf16 %v1347, %v1347
  %v1350 = vrot.slane %v1348, 4
  %1352 = vst [vmem:[#allocation4 + $0x10] sm:$0xf0] %v1350
  %v1353 = vld [vmem:[#allocation5 + $0xc0] sm:$0xff]
  %v1354 = vld [vmem:[#allocation5 + $0xc8] sm:$0xff]
  %v1355 = vld [vmem:[#allocation5 + $0xd0] sm:$0xff]
  %v1356 = vld [vmem:[#allocation5 + $0xd8] sm:$0xff]
  %1357 = vmatprep.subr.bf16.mxu0 %v589
  %1358 = vmatpush1.bf16.msra.mxu0 %v588
  %1359 = vmatprep.subr.bf16.mxu0 %v593
  %1360 = vmatpush1.bf16.msra.mxu0 %v592
  %1361 = vmatprep.subr.bf16.mxu0 %v597
  %1362 = vmatpush1.bf16.msra.mxu0 %v596
  %1363 = vmatprep.subr.bf16.mxu0 %v601
  %1364 = vmatpush1.bf16.msra.mxu0 %v600
  %1365 = vmatprep.subr.bf16.mxu0 %v605
  %1366 = vmatpush1.bf16.msra.mxu0 %v604
  %1367 = vmatprep.subr.bf16.mxu0 %v609
  %1368 = vmatpush1.bf16.msra.mxu0 %v608
  %1369 = vmatprep.subr.bf16.mxu0 %v613
  %1370 = vmatpush1.bf16.msra.mxu0 %v612
  %1371 = vmatprep.subr.bf16.mxu0 %v617
  %1372 = vmatpush1.bf16.msra.mxu0 %v616
  %1373 = vmatprep.subr.bf16.mxu0 0
  %1374 = vmatpush1.bf16.msra.mxu0 0
  %1375 = vmatprep.subr.bf16.mxu0 0
  %1376 = vmatpush1.bf16.msra.mxu0 0
  %1377 = vmatprep.subr.bf16.mxu0 0
  %1378 = vmatpush1.bf16.msra.mxu0 0
  %1379 = vmatprep.subr.bf16.mxu0 0
  %1380 = vmatpush1.bf16.msra.mxu0 0
  %1381 = vmatprep.subr.bf16.mxu0 0
  %1382 = vmatpush1.bf16.msra.mxu0 0
  %1383 = vmatprep.subr.bf16.mxu0 0
  %1384 = vmatpush1.bf16.msra.mxu0 0
  %1385 = vmatprep.subr.bf16.mxu0 0
  %1386 = vmatpush1.bf16.msra.mxu0 0
  %1387 = vmatprep.subr.bf16.mxu0 0
  %1388 = vmatpush1.bf16.msra.mxu0 0
  %1389 = vmatprep.mubr.bf16.mxu0 0
  %1390 = vmatmul.mubr.bf16.gmra.mrb[0].mxu0 %v1348
  %v1391 = vpop.f32.mrb[0].mxu0
  %v1392 = vadd.f32 0.0, %v1391
  %v1393 = vpop.f32.mrb[0].mxu0
  %v1394 = vadd.f32 0.0, %v1393
  %v1395 = vpop.f32.mrb[0].mxu0
  %v1396 = vpop.f32.mrb[0].mxu0
  %1397 = vdwg.mxu0
  %1398 = vmatprep.subr.bf16.mxu0 %v591
  %1399 = vmatpush1.bf16.msra.mxu0 %v590
  %1400 = vmatprep.subr.bf16.mxu0 %v595
  %1401 = vmatpush1.bf16.msra.mxu0 %v594
  %1402 = vmatprep.subr.bf16.mxu0 %v599
  %1403 = vmatpush1.bf16.msra.mxu0 %v598
  %1404 = vmatprep.subr.bf16.mxu0 %v603
  %1405 = vmatpush1.bf16.msra.mxu0 %v602
  %1406 = vmatprep.subr.bf16.mxu0 %v607
  %1407 = vmatpush1.bf16.msra.mxu0 %v606
  %1408 = vmatprep.subr.bf16.mxu0 %v611
  %1409 = vmatpush1.bf16.msra.mxu0 %v610
  %1410 = vmatprep.subr.bf16.mxu0 %v615
  %1411 = vmatpush1.bf16.msra.mxu0 %v614
  %1412 = vmatprep.subr.bf16.mxu0 %v619
  %1413 = vmatpush1.bf16.msra.mxu0 %v618
  %1414 = vmatprep.subr.bf16.mxu0 0
  %1415 = vmatpush1.bf16.msra.mxu0 0
  %1416 = vmatprep.subr.bf16.mxu0 0
  %1417 = vmatpush1.bf16.msra.mxu0 0
  %1418 = vmatprep.subr.bf16.mxu0 0
  %1419 = vmatpush1.bf16.msra.mxu0 0
  %1420 = vmatprep.subr.bf16.mxu0 0
  %1421 = vmatpush1.bf16.msra.mxu0 0
  %1422 = vmatprep.subr.bf16.mxu0 0
  %1423 = vmatpush1.bf16.msra.mxu0 0
  %1424 = vmatprep.subr.bf16.mxu0 0
  %1425 = vmatpush1.bf16.msra.mxu0 0
  %1426 = vmatprep.subr.bf16.mxu0 0
  %1427 = vmatpush1.bf16.msra.mxu0 0
  %1428 = vmatprep.subr.bf16.mxu0 0
  %1429 = vmatpush1.bf16.msra.mxu0 0
  %1430 = vmatprep.mubr.bf16.mxu0 0
  %1431 = vmatmul.mubr.bf16.gmra.mrb[0].mxu0 %v1348
  %v1432 = vpop.f32.mrb[0].mxu0
  %v1433 = vadd.f32 0.0, %v1432
  %v1434 = vpop.f32.mrb[0].mxu0
  %v1435 = vadd.f32 0.0, %v1434
  %v1436 = vpop.f32.mrb[0].mxu0
  %v1437 = vpop.f32.mrb[0].mxu0
  %1438 = vdwg.mxu0
  %v1439 = vadd.f32 %v1353, %v1392
  %v1440 = vadd.f32 %v1354, %v1394
  %v1441 = vadd.f32 %v1355, %v1433
  %v1442 = vadd.f32 %v1356, %v1435
  %v1443 = vxor.u32 %v1439, 2147483648
  %v1444 = vmul.f32 %v1443, 1.442695
  %v1445 = vpow.pop %v1444
  %v1446 = vadd.f32 %v1445, 1.0
  %v1447 = vrcp.pop %v1446
  %v1448 = vmul.f32 1.0, %v1447
  %v1449 = vxor.u32 %v1440, 2147483648
  %v1450 = vmul.f32 %v1449, 1.442695
  %v1451 = vpow.pop %v1450
  %v1452 = vadd.f32 %v1451, 1.0
  %v1453 = vrcp.pop %v1452
  %v1454 = vmul.f32 1.0, %v1453
  %v1455 = vtanh.pop %v1441
  %v1456 = vxor.u32 %v1442, 2147483648
  %v1457 = vmul.f32 %v1456, 1.442695
  %v1458 = vpow.pop %v1457
  %v1459 = vadd.f32 %v1458, 1.0
  %v1460 = vrcp.pop %v1459
  %v1461 = vmul.f32 1.0, %v1460
  %v1462 = vmul.f32 %v1454, %v1345
  %v1463 = vmul.f32 %v1448, %v1455
  %v1464 = vadd.f32 %v1462, %v1463
  %v1465 = vtanh.pop %v1464
  %v1466 = vmul.f32 %v1461, %v1465
  %v1467 = vpack.c.bf16 %v1466, %v1466
  %1468 = vst [vmem:[#allocation4 + $0x18] sm:$0xf] %v1467
  %v1469 = vld [vmem:[#allocation5 + $0xe0] sm:$0xff]
  %v1470 = vld [vmem:[#allocation5 + $0xe8] sm:$0xff]
  %v1471 = vld [vmem:[#allocation5 + $0xf0] sm:$0xff]
  %v1472 = vld [vmem:[#allocation5 + $0xf8] sm:$0xff]
  %1473 = vmatprep.subr.bf16.mxu0 %v589
  %1474 = vmatpush1.bf16.msra.mxu0 %v588
  %1475 = vmatprep.subr.bf16.mxu0 %v593
  %1476 = vmatpush1.bf16.msra.mxu0 %v592
  %1477 = vmatprep.subr.bf16.mxu0 %v597
  %1478 = vmatpush1.bf16.msra.mxu0 %v596
  %1479 = vmatprep.subr.bf16.mxu0 %v601
  %1480 = vmatpush1.bf16.msra.mxu0 %v600
  %1481 = vmatprep.subr.bf16.mxu0 %v605
  %1482 = vmatpush1.bf16.msra.mxu0 %v604
  %1483 = vmatprep.subr.bf16.mxu0 %v609
  %1484 = vmatpush1.bf16.msra.mxu0 %v608
  %1485 = vmatprep.subr.bf16.mxu0 %v613
  %1486 = vmatpush1.bf16.msra.mxu0 %v612
  %1487 = vmatprep.subr.bf16.mxu0 %v617
  %1488 = vmatpush1.bf16.msra.mxu0 %v616
  %1489 = vmatprep.subr.bf16.mxu0 0
  %1490 = vmatpush1.bf16.msra.mxu0 0
  %1491 = vmatprep.subr.bf16.mxu0 0
  %1492 = vmatpush1.bf16.msra.mxu0 0
  %1493 = vmatprep.subr.bf16.mxu0 0
  %1494 = vmatpush1.bf16.msra.mxu0 0
  %1495 = vmatprep.subr.bf16.mxu0 0
  %1496 = vmatpush1.bf16.msra.mxu0 0
  %1497 = vmatprep.subr.bf16.mxu0 0
  %1498 = vmatpush1.bf16.msra.mxu0 0
  %1499 = vmatprep.subr.bf16.mxu0 0
  %1500 = vmatpush1.bf16.msra.mxu0 0
  %1501 = vmatprep.subr.bf16.mxu0 0
  %1502 = vmatpush1.bf16.msra.mxu0 0
  %1503 = vmatprep.subr.bf16.mxu0 0
  %1504 = vmatpush1.bf16.msra.mxu0 0
  %1505 = vmatprep.mubr.bf16.mxu0 0
  %1506 = vmatmul.mubr.bf16.gmra.mrb[0].mxu0 %v1467
  %v1507 = vpop.f32.mrb[0].mxu0
  %v1508 = vadd.f32 0.0, %v1507
  %v1509 = vpop.f32.mrb[0].mxu0
  %v1510 = vadd.f32 0.0, %v1509
  %v1511 = vpop.f32.mrb[0].mxu0
  %v1512 = vpop.f32.mrb[0].mxu0
  %1513 = vdwg.mxu0
  %1514 = vmatprep.subr.bf16.mxu0 %v591
  %1515 = vmatpush1.bf16.msra.mxu0 %v590
  %1516 = vmatprep.subr.bf16.mxu0 %v595
  %1517 = vmatpush1.bf16.msra.mxu0 %v594
  %1518 = vmatprep.subr.bf16.mxu0 %v599
  %1519 = vmatpush1.bf16.msra.mxu0 %v598
  %1520 = vmatprep.subr.bf16.mxu0 %v603
  %1521 = vmatpush1.bf16.msra.mxu0 %v602
  %1522 = vmatprep.subr.bf16.mxu0 %v607
  %1523 = vmatpush1.bf16.msra.mxu0 %v606
  %1524 = vmatprep.subr.bf16.mxu0 %v611
  %1525 = vmatpush1.bf16.msra.mxu0 %v610
  %1526 = vmatprep.subr.bf16.mxu0 %v615
  %1527 = vmatpush1.bf16.msra.mxu0 %v614
  %1528 = vmatprep.subr.bf16.mxu0 %v619
  %1529 = vmatpush1.bf16.msra.mxu0 %v618
  %1530 = vmatprep.subr.bf16.mxu0 0
  %1531 = vmatpush1.bf16.msra.mxu0 0
  %1532 = vmatprep.subr.bf16.mxu0 0
  %1533 = vmatpush1.bf16.msra.mxu0 0
  %1534 = vmatprep.subr.bf16.mxu0 0
  %1535 = vmatpush1.bf16.msra.mxu0 0
  %1536 = vmatprep.subr.bf16.mxu0 0
  %1537 = vmatpush1.bf16.msra.mxu0 0
  %1538 = vmatprep.subr.bf16.mxu0 0
  %1539 = vmatpush1.bf16.msra.mxu0 0
  %1540 = vmatprep.subr.bf16.mxu0 0
  %1541 = vmatpush1.bf16.msra.mxu0 0
  %1542 = vmatprep.subr.bf16.mxu0 0
  %1543 = vmatpush1.bf16.msra.mxu0 0
  %1544 = vmatprep.subr.bf16.mxu0 0
  %1545 = vmatpush1.bf16.msra.mxu0 0
  %1546 = vmatprep.mubr.bf16.mxu0 0
  %1547 = vmatmul.mubr.bf16.gmra.mrb[0].mxu0 %v1467
  %v1548 = vpop.f32.mrb[0].mxu0
  %v1549 = vadd.f32 0.0, %v1548
  %v1550 = vpop.f32.mrb[0].mxu0
  %v1551 = vadd.f32 0.0, %v1550
  %v1552 = vpop.f32.mrb[0].mxu0
  %v1553 = vpop.f32.mrb[0].mxu0
  %1554 = vdwg.mxu0
  %v1555 = vadd.f32 %v1469, %v1508
  %v1556 = vadd.f32 %v1470, %v1510
  %v1557 = vadd.f32 %v1471, %v1549
  %v1558 = vadd.f32 %v1472, %v1551
  %v1559 = vxor.u32 %v1555, 2147483648
  %v1560 = vmul.f32 %v1559, 1.442695
  %v1561 = vpow.pop %v1560
  %v1562 = vadd.f32 %v1561, 1.0
  %v1563 = vrcp.pop %v1562
  %v1564 = vmul.f32 1.0, %v1563
  %v1565 = vxor.u32 %v1556, 2147483648
  %v1566 = vmul.f32 %v1565, 1.442695
  %v1567 = vpow.pop %v1566
  %v1568 = vadd.f32 %v1567, 1.0
  %v1569 = vrcp.pop %v1568
  %v1570 = vmul.f32 1.0, %v1569
  %v1571 = vtanh.pop %v1557
  %v1572 = vxor.u32 %v1558, 2147483648
  %v1573 = vmul.f32 %v1572, 1.442695
  %v1574 = vpow.pop %v1573
  %v1575 = vadd.f32 %v1574, 1.0
  %v1576 = vrcp.pop %v1575
  %v1577 = vmul.f32 1.0, %v1576
  %v1578 = vmul.f32 %v1570, %v1464
  %v1579 = vmul.f32 %v1564, %v1571
  %v1580 = vadd.f32 %v1578, %v1579
  %v1581 = vtanh.pop %v1580
  %v1582 = vmul.f32 %v1577, %v1581
  %v1583 = vpack.c.bf16 %v1582, %v1582
  %v1585 = vrot.slane %v1583, 4
  %1587 = vst [vmem:[#allocation4 + $0x18] sm:$0xf0] %v1585
  %1588 = vst [vmem:[#allocation2] sm:$0xff] %v1582
  %1589 = vst [vmem:[#allocation3] sm:$0xff] %v1580
  %v1590 = vld [vmem:[#allocation4] sm:$0xff]
  %v1591 = vld [vmem:[#allocation4 + $0x8] sm:$0xff]
  %v1592 = vld [vmem:[#allocation4 + $0x10] sm:$0xff]
  %v1593 = vld [vmem:[#allocation4 + $0x18] sm:$0xff]
  %s1594 = scalar_lea.vmem %s1, 256
  %v1595 = vld [vmem:[%s1594] sm:$0xff]
  %v1596 = vld [vmem:[%s1594 + $0x8] sm:$0xff]
  %v1597 = vld [vmem:[%s1594 + $0x10] sm:$0xff]
  %v1598 = vld [vmem:[%s1594 + $0x18] sm:$0xff]
  %v1599 = vld [vmem:[%s1594 + $0x20] sm:$0xff]
  %v1600 = vld [vmem:[%s1594 + $0x28] sm:$0xff]
  %v1601 = vld [vmem:[%s1594 + $0x30] sm:$0xff]
  %v1602 = vld [vmem:[%s1594 + $0x38] sm:$0xff]
  %v1603 = vld [vmem:[%s1594 + $0x40] sm:$0xff]
  %v1604 = vld [vmem:[%s1594 + $0x48] sm:$0xff]
  %v1605 = vld [vmem:[%s1594 + $0x50] sm:$0xff]
  %v1606 = vld [vmem:[%s1594 + $0x58] sm:$0xff]
  %v1607 = vld [vmem:[%s1594 + $0x60] sm:$0xff]
  %v1608 = vld [vmem:[%s1594 + $0x68] sm:$0xff]
  %v1609 = vld [vmem:[%s1594 + $0x70] sm:$0xff]
  %v1610 = vld [vmem:[%s1594 + $0x78] sm:$0xff]
  %v1611 = vld [vmem:[%s1594 + $0x80] sm:$0xff]
  %v1612 = vld [vmem:[%s1594 + $0x88] sm:$0xff]
  %v1613 = vld [vmem:[%s1594 + $0x90] sm:$0xff]
  %v1614 = vld [vmem:[%s1594 + $0x98] sm:$0xff]
  %v1615 = vld [vmem:[%s1594 + $0xa0] sm:$0xff]
  %v1616 = vld [vmem:[%s1594 + $0xa8] sm:$0xff]
  %v1617 = vld [vmem:[%s1594 + $0xb0] sm:$0xff]
  %v1618 = vld [vmem:[%s1594 + $0xb8] sm:$0xff]
  %v1619 = vld [vmem:[%s1594 + $0xc0] sm:$0xff]
  %v1620 = vld [vmem:[%s1594 + $0xc8] sm:$0xff]
  %v1621 = vld [vmem:[%s1594 + $0xd0] sm:$0xff]
  %v1622 = vld [vmem:[%s1594 + $0xd8] sm:$0xff]
  %v1623 = vld [vmem:[%s1594 + $0xe0] sm:$0xff]
  %v1624 = vld [vmem:[%s1594 + $0xe8] sm:$0xff]
  %v1625 = vld [vmem:[%s1594 + $0xf0] sm:$0xff]
  %v1626 = vld [vmem:[%s1594 + $0xf8] sm:$0xff]
  %s1627 = scalar_lea.vmem %s3, 4
  %v1628 = vld [vmem:[%s1627] sm:$0xf]
  %v1630 = vlaneseq
  %v1631 = vshrl.u32 %v1630, 7
  %v1632 = vsub.s32 0, %v1631
  %v1633 = vrot.slane %v1628, %v1632
  %v1634 = vlaneseq
  %v1635 = vshrl.u32 %v1634, 7
  %v1636 = vsub.s32 1, %v1635
  %v1637 = vrot.slane %v1628, %v1636
  %v1638 = vlaneseq
  %v1639 = vshrl.u32 %v1638, 7
  %v1640 = vsub.s32 2, %v1639
  %v1641 = vrot.slane %v1628, %v1640
  %v1642 = vlaneseq
  %v1643 = vshrl.u32 %v1642, 7
  %v1644 = vsub.s32 3, %v1643
  %v1645 = vrot.slane %v1628, %v1644
  %v1682 = vunpack.c.l.b16 %v1595
  %v1683 = vunpack.c.h.b16 %v1595
  %v1684 = vunpack.c.l.b16 %v1596
  %v1685 = vunpack.c.h.b16 %v1596
  %v1686 = vunpack.c.l.b16 %v1597
  %v1687 = vunpack.c.h.b16 %v1597
  %v1688 = vunpack.c.l.b16 %v1598
  %v1689 = vunpack.c.h.b16 %v1598
  %v1690 = vunpack.c.l.b16 %v1599
  %v1691 = vunpack.c.h.b16 %v1599
  %v1692 = vunpack.c.l.b16 %v1600
  %v1693 = vunpack.c.h.b16 %v1600
  %v1694 = vunpack.c.l.b16 %v1601
  %v1695 = vunpack.c.h.b16 %v1601
  %v1696 = vunpack.c.l.b16 %v1602
  %v1697 = vunpack.c.h.b16 %v1602
  %v1698 = vunpack.c.l.b16 %v1603
  %v1699 = vunpack.c.h.b16 %v1603
  %v1700 = vunpack.c.l.b16 %v1604
  %v1701 = vunpack.c.h.b16 %v1604
  %v1702 = vunpack.c.l.b16 %v1605
  %v1703 = vunpack.c.h.b16 %v1605
  %v1704 = vunpack.c.l.b16 %v1606
  %v1705 = vunpack.c.h.b16 %v1606
  %v1706 = vunpack.c.l.b16 %v1607
  %v1707 = vunpack.c.h.b16 %v1607
  %v1708 = vunpack.c.l.b16 %v1608
  %v1709 = vunpack.c.h.b16 %v1608
  %v1710 = vunpack.c.l.b16 %v1609
  %v1711 = vunpack.c.h.b16 %v1609
  %v1712 = vunpack.c.l.b16 %v1610
  %v1713 = vunpack.c.h.b16 %v1610
  %v1714 = vunpack.c.l.b16 %v1611
  %v1715 = vunpack.c.h.b16 %v1611
  %v1716 = vunpack.c.l.b16 %v1612
  %v1717 = vunpack.c.h.b16 %v1612
  %v1718 = vunpack.c.l.b16 %v1613
  %v1719 = vunpack.c.h.b16 %v1613
  %v1720 = vunpack.c.l.b16 %v1614
  %v1721 = vunpack.c.h.b16 %v1614
  %v1722 = vunpack.c.l.b16 %v1615
  %v1723 = vunpack.c.h.b16 %v1615
  %v1724 = vunpack.c.l.b16 %v1616
  %v1725 = vunpack.c.h.b16 %v1616
  %v1726 = vunpack.c.l.b16 %v1617
  %v1727 = vunpack.c.h.b16 %v1617
  %v1728 = vunpack.c.l.b16 %v1618
  %v1729 = vunpack.c.h.b16 %v1618
  %v1730 = vunpack.c.l.b16 %v1619
  %v1731 = vunpack.c.h.b16 %v1619
  %v1732 = vunpack.c.l.b16 %v1620
  %v1733 = vunpack.c.h.b16 %v1620
  %v1734 = vunpack.c.l.b16 %v1621
  %v1735 = vunpack.c.h.b16 %v1621
  %v1736 = vunpack.c.l.b16 %v1622
  %v1737 = vunpack.c.h.b16 %v1622
  %v1738 = vunpack.c.l.b16 %v1623
  %v1739 = vunpack.c.h.b16 %v1623
  %v1740 = vunpack.c.l.b16 %v1624
  %v1741 = vunpack.c.h.b16 %v1624
  %v1742 = vunpack.c.l.b16 %v1625
  %v1743 = vunpack.c.h.b16 %v1625
  %v1744 = vunpack.c.l.b16 %v1626
  %v1745 = vunpack.c.h.b16 %v1626
  %v1746 = vpack.c.b16 %v1686, %v1682
  %v1747 = vpack.c.b16 %v1687, %v1683
  %v1748 = vpack.c.b16 %v1688, %v1684
  %v1749 = vpack.c.b16 %v1689, %v1685
  %v1750 = vpack.c.b16 %v1694, %v1690
  %v1751 = vpack.c.b16 %v1695, %v1691
  %v1752 = vpack.c.b16 %v1696, %v1692
  %v1753 = vpack.c.b16 %v1697, %v1693
  %v1754 = vpack.c.b16 %v1702, %v1698
  %v1755 = vpack.c.b16 %v1703, %v1699
  %v1756 = vpack.c.b16 %v1704, %v1700
  %v1757 = vpack.c.b16 %v1705, %v1701
  %v1758 = vpack.c.b16 %v1710, %v1706
  %v1759 = vpack.c.b16 %v1711, %v1707
  %v1760 = vpack.c.b16 %v1712, %v1708
  %v1761 = vpack.c.b16 %v1713, %v1709
  %v1762 = vpack.c.b16 %v1718, %v1714
  %v1763 = vpack.c.b16 %v1719, %v1715
  %v1764 = vpack.c.b16 %v1720, %v1716
  %v1765 = vpack.c.b16 %v1721, %v1717
  %v1766 = vpack.c.b16 %v1726, %v1722
  %v1767 = vpack.c.b16 %v1727, %v1723
  %v1768 = vpack.c.b16 %v1728, %v1724
  %v1769 = vpack.c.b16 %v1729, %v1725
  %v1770 = vpack.c.b16 %v1734, %v1730
  %v1771 = vpack.c.b16 %v1735, %v1731
  %v1772 = vpack.c.b16 %v1736, %v1732
  %v1773 = vpack.c.b16 %v1737, %v1733
  %v1774 = vpack.c.b16 %v1742, %v1738
  %v1775 = vpack.c.b16 %v1743, %v1739
  %v1776 = vpack.c.b16 %v1744, %v1740
  %v1777 = vpack.c.b16 %v1745, %v1741
  %1810 = vmatprep.subr.bf16.mxu0 %v1747
  %1811 = vmatpush1.bf16.msra.mxu0 %v1746
  %1812 = vmatprep.subr.bf16.mxu0 %v1751
  %1813 = vmatpush1.bf16.msra.mxu0 %v1750
  %1814 = vmatprep.subr.bf16.mxu0 %v1755
  %1815 = vmatpush1.bf16.msra.mxu0 %v1754
  %1816 = vmatprep.subr.bf16.mxu0 %v1759
  %1817 = vmatpush1.bf16.msra.mxu0 %v1758
  %1818 = vmatprep.subr.bf16.mxu0 %v1763
  %1819 = vmatpush1.bf16.msra.mxu0 %v1762
  %1820 = vmatprep.subr.bf16.mxu0 %v1767
  %1821 = vmatpush1.bf16.msra.mxu0 %v1766
  %1822 = vmatprep.subr.bf16.mxu0 %v1771
  %1823 = vmatpush1.bf16.msra.mxu0 %v1770
  %1824 = vmatprep.subr.bf16.mxu0 %v1775
  %1825 = vmatpush1.bf16.msra.mxu0 %v1774
  %1826 = vmatprep.subr.bf16.mxu0 0
  %1827 = vmatpush1.bf16.msra.mxu0 0
  %1828 = vmatprep.subr.bf16.mxu0 0
  %1829 = vmatpush1.bf16.msra.mxu0 0
  %1830 = vmatprep.subr.bf16.mxu0 0
  %1831 = vmatpush1.bf16.msra.mxu0 0
  %1832 = vmatprep.subr.bf16.mxu0 0
  %1833 = vmatpush1.bf16.msra.mxu0 0
  %1834 = vmatprep.subr.bf16.mxu0 0
  %1835 = vmatpush1.bf16.msra.mxu0 0
  %1836 = vmatprep.subr.bf16.mxu0 0
  %1837 = vmatpush1.bf16.msra.mxu0 0
  %1838 = vmatprep.subr.bf16.mxu0 0
  %1839 = vmatpush1.bf16.msra.mxu0 0
  %1840 = vmatprep.subr.bf16.mxu0 0
  %1841 = vmatpush1.bf16.msra.mxu0 0
  %1842 = vmatprep.mubr.bf16.mxu0 0
  %1843 = vmatmul.mubr.bf16.gmra.mrb[0].mxu0 %v1590
  %v1844 = vpop.f32.mrb[0].mxu0
  %v1845 = vadd.f32 %v1633, %v1844
  %v1846 = vpop.f32.mrb[0].mxu0
  %v1847 = vadd.f32 %v1637, %v1846
  %v1848 = vpop.f32.mrb[0].mxu0
  %v1849 = vadd.f32 %v1633, %v1848
  %v1850 = vpop.f32.mrb[0].mxu0
  %v1851 = vadd.f32 %v1637, %v1850
  %1852 = vmatprep.mubr.bf16.mxu0 0
  %1853 = vmatmul.mubr.bf16.gmra.mrb[0].mxu0 %v1591
  %v1854 = vpop.f32.mrb[0].mxu0
  %v1855 = vadd.f32 %v1633, %v1854
  %v1856 = vpop.f32.mrb[0].mxu0
  %v1857 = vadd.f32 %v1637, %v1856
  %v1858 = vpop.f32.mrb[0].mxu0
  %v1859 = vadd.f32 %v1633, %v1858
  %v1860 = vpop.f32.mrb[0].mxu0
  %v1861 = vadd.f32 %v1637, %v1860
  %1862 = vmatprep.mubr.bf16.mxu0 0
  %1863 = vmatmul.mubr.bf16.gmra.mrb[0].mxu0 %v1592
  %v1864 = vpop.f32.mrb[0].mxu0
  %v1865 = vadd.f32 %v1633, %v1864
  %v1866 = vpop.f32.mrb[0].mxu0
  %v1867 = vadd.f32 %v1637, %v1866
  %v1868 = vpop.f32.mrb[0].mxu0
  %v1869 = vadd.f32 %v1633, %v1868
  %v1870 = vpop.f32.mrb[0].mxu0
  %v1871 = vadd.f32 %v1637, %v1870
  %1872 = vmatprep.mubr.bf16.mxu0 0
  %1873 = vmatmul.mubr.bf16.gmra.mrb[0].mxu0 %v1593
  %v1874 = vpop.f32.mrb[0].mxu0
  %v1875 = vadd.f32 %v1633, %v1874
  %v1876 = vpop.f32.mrb[0].mxu0
  %v1877 = vadd.f32 %v1637, %v1876
  %v1878 = vpop.f32.mrb[0].mxu0
  %v1879 = vadd.f32 %v1633, %v1878
  %v1880 = vpop.f32.mrb[0].mxu0
  %v1881 = vadd.f32 %v1637, %v1880
  %1882 = vdwg.mxu0
  %1883 = vmatprep.subr.bf16.mxu0 %v1749
  %1884 = vmatpush1.bf16.msra.mxu0 %v1748
  %1885 = vmatprep.subr.bf16.mxu0 %v1753
  %1886 = vmatpush1.bf16.msra.mxu0 %v1752
  %1887 = vmatprep.subr.bf16.mxu0 %v1757
  %1888 = vmatpush1.bf16.msra.mxu0 %v1756
  %1889 = vmatprep.subr.bf16.mxu0 %v1761
  %1890 = vmatpush1.bf16.msra.mxu0 %v1760
  %1891 = vmatprep.subr.bf16.mxu0 %v1765
  %1892 = vmatpush1.bf16.msra.mxu0 %v1764
  %1893 = vmatprep.subr.bf16.mxu0 %v1769
  %1894 = vmatpush1.bf16.msra.mxu0 %v1768
  %1895 = vmatprep.subr.bf16.mxu0 %v1773
  %1896 = vmatpush1.bf16.msra.mxu0 %v1772
  %1897 = vmatprep.subr.bf16.mxu0 %v1777
  %1898 = vmatpush1.bf16.msra.mxu0 %v1776
  %1899 = vmatprep.subr.bf16.mxu0 0
  %1900 = vmatpush1.bf16.msra.mxu0 0
  %1901 = vmatprep.subr.bf16.mxu0 0
  %1902 = vmatpush1.bf16.msra.mxu0 0
  %1903 = vmatprep.subr.bf16.mxu0 0
  %1904 = vmatpush1.bf16.msra.mxu0 0
  %1905 = vmatprep.subr.bf16.mxu0 0
  %1906 = vmatpush1.bf16.msra.mxu0 0
  %1907 = vmatprep.subr.bf16.mxu0 0
  %1908 = vmatpush1.bf16.msra.mxu0 0
  %1909 = vmatprep.subr.bf16.mxu0 0
  %1910 = vmatpush1.bf16.msra.mxu0 0
  %1911 = vmatprep.subr.bf16.mxu0 0
  %1912 = vmatpush1.bf16.msra.mxu0 0
  %1913 = vmatprep.subr.bf16.mxu0 0
  %1914 = vmatpush1.bf16.msra.mxu0 0
  %1915 = vmatprep.mubr.bf16.mxu0 0
  %1916 = vmatmul.mubr.bf16.gmra.mrb[0].mxu0 %v1590
  %v1917 = vpop.f32.mrb[0].mxu0
  %v1918 = vadd.f32 %v1641, %v1917
  %v1919 = vpop.f32.mrb[0].mxu0
  %v1920 = vadd.f32 %v1645, %v1919
  %v1921 = vpop.f32.mrb[0].mxu0
  %v1922 = vadd.f32 %v1641, %v1921
  %v1923 = vpop.f32.mrb[0].mxu0
  %v1924 = vadd.f32 %v1645, %v1923
  %1925 = vmatprep.mubr.bf16.mxu0 0
  %1926 = vmatmul.mubr.bf16.gmra.mrb[0].mxu0 %v1591
  %v1927 = vpop.f32.mrb[0].mxu0
  %v1928 = vadd.f32 %v1641, %v1927
  %v1929 = vpop.f32.mrb[0].mxu0
  %v1930 = vadd.f32 %v1645, %v1929
  %v1931 = vpop.f32.mrb[0].mxu0
  %v1932 = vadd.f32 %v1641, %v1931
  %v1933 = vpop.f32.mrb[0].mxu0
  %v1934 = vadd.f32 %v1645, %v1933
  %1935 = vmatprep.mubr.bf16.mxu0 0
  %1936 = vmatmul.mubr.bf16.gmra.mrb[0].mxu0 %v1592
  %v1937 = vpop.f32.mrb[0].mxu0
  %v1938 = vadd.f32 %v1641, %v1937
  %v1939 = vpop.f32.mrb[0].mxu0
  %v1940 = vadd.f32 %v1645, %v1939
  %v1941 = vpop.f32.mrb[0].mxu0
  %v1942 = vadd.f32 %v1641, %v1941
  %v1943 = vpop.f32.mrb[0].mxu0
  %v1944 = vadd.f32 %v1645, %v1943
  %1945 = vmatprep.mubr.bf16.mxu0 0
  %1946 = vmatmul.mubr.bf16.gmra.mrb[0].mxu0 %v1593
  %v1947 = vpop.f32.mrb[0].mxu0
  %v1948 = vadd.f32 %v1641, %v1947
  %v1949 = vpop.f32.mrb[0].mxu0
  %v1950 = vadd.f32 %v1645, %v1949
  %v1951 = vpop.f32.mrb[0].mxu0
  %v1952 = vadd.f32 %v1641, %v1951
  %v1953 = vpop.f32.mrb[0].mxu0
  %v1954 = vadd.f32 %v1645, %v1953
  %1955 = vdwg.mxu0
  %1956 = vst [vmem:[#allocation5] sm:$0xff] %v1845
  %1957 = vst [vmem:[#allocation5 + $0x8] sm:$0xff] %v1847
  %1958 = vst [vmem:[#allocation5 + $0x10] sm:$0xff] %v1918
  %1959 = vst [vmem:[#allocation5 + $0x18] sm:$0xff] %v1920
  %1960 = vst [vmem:[#allocation5 + $0x20] sm:$0xff] %v1849
  %1961 = vst [vmem:[#allocation5 + $0x28] sm:$0xff] %v1851
  %1962 = vst [vmem:[#allocation5 + $0x30] sm:$0xff] %v1922
  %1963 = vst [vmem:[#allocation5 + $0x38] sm:$0xff] %v1924
  %1964 = vst [vmem:[#allocation5 + $0x40] sm:$0xff] %v1855
  %1965 = vst [vmem:[#allocation5 + $0x48] sm:$0xff] %v1857
  %1966 = vst [vmem:[#allocation5 + $0x50] sm:$0xff] %v1928
  %1967 = vst [vmem:[#allocation5 + $0x58] sm:$0xff] %v1930
  %1968 = vst [vmem:[#allocation5 + $0x60] sm:$0xff] %v1859
  %1969 = vst [vmem:[#allocation5 + $0x68] sm:$0xff] %v1861
  %1970 = vst [vmem:[#allocation5 + $0x70] sm:$0xff] %v1932
  %1971 = vst [vmem:[#allocation5 + $0x78] sm:$0xff] %v1934
  %1972 = vst [vmem:[#allocation5 + $0x80] sm:$0xff] %v1865
  %1973 = vst [vmem:[#allocation5 + $0x88] sm:$0xff] %v1867
  %1974 = vst [vmem:[#allocation5 + $0x90] sm:$0xff] %v1938
  %1975 = vst [vmem:[#allocation5 + $0x98] sm:$0xff] %v1940
  %1976 = vst [vmem:[#allocation5 + $0xa0] sm:$0xff] %v1869
  %1977 = vst [vmem:[#allocation5 + $0xa8] sm:$0xff] %v1871
  %1978 = vst [vmem:[#allocation5 + $0xb0] sm:$0xff] %v1942
  %1979 = vst [vmem:[#allocation5 + $0xb8] sm:$0xff] %v1944
  %1980 = vst [vmem:[#allocation5 + $0xc0] sm:$0xff] %v1875
  %1981 = vst [vmem:[#allocation5 + $0xc8] sm:$0xff] %v1877
  %1982 = vst [vmem:[#allocation5 + $0xd0] sm:$0xff] %v1948
  %1983 = vst [vmem:[#allocation5 + $0xd8] sm:$0xff] %v1950
  %1984 = vst [vmem:[#allocation5 + $0xe0] sm:$0xff] %v1879
  %1985 = vst [vmem:[#allocation5 + $0xe8] sm:$0xff] %v1881
  %1986 = vst [vmem:[#allocation5 + $0xf0] sm:$0xff] %v1952
  %1987 = vst [vmem:[#allocation5 + $0xf8] sm:$0xff] %v1954
  %s1988 = scalar_lea.vmem %s2, 256
  %v1989 = vld [vmem:[%s1988] sm:$0xff]
  %v1990 = vld [vmem:[%s1988 + $0x8] sm:$0xff]
  %v1991 = vld [vmem:[%s1988 + $0x10] sm:$0xff]
  %v1992 = vld [vmem:[%s1988 + $0x18] sm:$0xff]
  %v1993 = vld [vmem:[%s1988 + $0x20] sm:$0xff]
  %v1994 = vld [vmem:[%s1988 + $0x28] sm:$0xff]
  %v1995 = vld [vmem:[%s1988 + $0x30] sm:$0xff]
  %v1996 = vld [vmem:[%s1988 + $0x38] sm:$0xff]
  %v1997 = vld [vmem:[%s1988 + $0x40] sm:$0xff]
  %v1998 = vld [vmem:[%s1988 + $0x48] sm:$0xff]
  %v1999 = vld [vmem:[%s1988 + $0x50] sm:$0xff]
  %v2000 = vld [vmem:[%s1988 + $0x58] sm:$0xff]
  %v2001 = vld [vmem:[%s1988 + $0x60] sm:$0xff]
  %v2002 = vld [vmem:[%s1988 + $0x68] sm:$0xff]
  %v2003 = vld [vmem:[%s1988 + $0x70] sm:$0xff]
  %v2004 = vld [vmem:[%s1988 + $0x78] sm:$0xff]
  %v2005 = vld [vmem:[%s1988 + $0x80] sm:$0xff]
  %v2006 = vld [vmem:[%s1988 + $0x88] sm:$0xff]
  %v2007 = vld [vmem:[%s1988 + $0x90] sm:$0xff]
  %v2008 = vld [vmem:[%s1988 + $0x98] sm:$0xff]
  %v2009 = vld [vmem:[%s1988 + $0xa0] sm:$0xff]
  %v2010 = vld [vmem:[%s1988 + $0xa8] sm:$0xff]
  %v2011 = vld [vmem:[%s1988 + $0xb0] sm:$0xff]
  %v2012 = vld [vmem:[%s1988 + $0xb8] sm:$0xff]
  %v2013 = vld [vmem:[%s1988 + $0xc0] sm:$0xff]
  %v2014 = vld [vmem:[%s1988 + $0xc8] sm:$0xff]
  %v2015 = vld [vmem:[%s1988 + $0xd0] sm:$0xff]
  %v2016 = vld [vmem:[%s1988 + $0xd8] sm:$0xff]
  %v2017 = vld [vmem:[%s1988 + $0xe0] sm:$0xff]
  %v2018 = vld [vmem:[%s1988 + $0xe8] sm:$0xff]
  %v2019 = vld [vmem:[%s1988 + $0xf0] sm:$0xff]
  %v2020 = vld [vmem:[%s1988 + $0xf8] sm:$0xff]
  %s2021 = scalar_lea.vmem [#allocation2], 8
  %v2022 = vld [vmem:[%s2021] sm:$0xff]
  %s2023 = scalar_lea.vmem [#allocation3], 8
  %v2024 = vld [vmem:[%s2023] sm:$0xff]
  %v2025 = vld [vmem:[#allocation5] sm:$0xff]
  %v2026 = vld [vmem:[#allocation5 + $0x8] sm:$0xff]
  %v2027 = vld [vmem:[#allocation5 + $0x10] sm:$0xff]
  %v2028 = vld [vmem:[#allocation5 + $0x18] sm:$0xff]
  %v2029 = vpack.c.bf16 %v2022, %v2022
  %v2062 = vunpack.c.l.b16 %v1989
  %v2063 = vunpack.c.h.b16 %v1989
  %v2064 = vunpack.c.l.b16 %v1990
  %v2065 = vunpack.c.h.b16 %v1990
  %v2066 = vunpack.c.l.b16 %v1991
  %v2067 = vunpack.c.h.b16 %v1991
  %v2068 = vunpack.c.l.b16 %v1992
  %v2069 = vunpack.c.h.b16 %v1992
  %v2070 = vunpack.c.l.b16 %v1993
  %v2071 = vunpack.c.h.b16 %v1993
  %v2072 = vunpack.c.l.b16 %v1994
  %v2073 = vunpack.c.h.b16 %v1994
  %v2074 = vunpack.c.l.b16 %v1995
  %v2075 = vunpack.c.h.b16 %v1995
  %v2076 = vunpack.c.l.b16 %v1996
  %v2077 = vunpack.c.h.b16 %v1996
  %v2078 = vunpack.c.l.b16 %v1997
  %v2079 = vunpack.c.h.b16 %v1997
  %v2080 = vunpack.c.l.b16 %v1998
  %v2081 = vunpack.c.h.b16 %v1998
  %v2082 = vunpack.c.l.b16 %v1999
  %v2083 = vunpack.c.h.b16 %v1999
  %v2084 = vunpack.c.l.b16 %v2000
  %v2085 = vunpack.c.h.b16 %v2000
  %v2086 = vunpack.c.l.b16 %v2001
  %v2087 = vunpack.c.h.b16 %v2001
  %v2088 = vunpack.c.l.b16 %v2002
  %v2089 = vunpack.c.h.b16 %v2002
  %v2090 = vunpack.c.l.b16 %v2003
  %v2091 = vunpack.c.h.b16 %v2003
  %v2092 = vunpack.c.l.b16 %v2004
  %v2093 = vunpack.c.h.b16 %v2004
  %v2094 = vunpack.c.l.b16 %v2005
  %v2095 = vunpack.c.h.b16 %v2005
  %v2096 = vunpack.c.l.b16 %v2006
  %v2097 = vunpack.c.h.b16 %v2006
  %v2098 = vunpack.c.l.b16 %v2007
  %v2099 = vunpack.c.h.b16 %v2007
  %v2100 = vunpack.c.l.b16 %v2008
  %v2101 = vunpack.c.h.b16 %v2008
  %v2102 = vunpack.c.l.b16 %v2009
  %v2103 = vunpack.c.h.b16 %v2009
  %v2104 = vunpack.c.l.b16 %v2010
  %v2105 = vunpack.c.h.b16 %v2010
  %v2106 = vunpack.c.l.b16 %v2011
  %v2107 = vunpack.c.h.b16 %v2011
  %v2108 = vunpack.c.l.b16 %v2012
  %v2109 = vunpack.c.h.b16 %v2012
  %v2110 = vunpack.c.l.b16 %v2013
  %v2111 = vunpack.c.h.b16 %v2013
  %v2112 = vunpack.c.l.b16 %v2014
  %v2113 = vunpack.c.h.b16 %v2014
  %v2114 = vunpack.c.l.b16 %v2015
  %v2115 = vunpack.c.h.b16 %v2015
  %v2116 = vunpack.c.l.b16 %v2016
  %v2117 = vunpack.c.h.b16 %v2016
  %v2118 = vunpack.c.l.b16 %v2017
  %v2119 = vunpack.c.h.b16 %v2017
  %v2120 = vunpack.c.l.b16 %v2018
  %v2121 = vunpack.c.h.b16 %v2018
  %v2122 = vunpack.c.l.b16 %v2019
  %v2123 = vunpack.c.h.b16 %v2019
  %v2124 = vunpack.c.l.b16 %v2020
  %v2125 = vunpack.c.h.b16 %v2020
  %v2126 = vpack.c.b16 %v2066, %v2062
  %v2127 = vpack.c.b16 %v2067, %v2063
  %v2128 = vpack.c.b16 %v2068, %v2064
  %v2129 = vpack.c.b16 %v2069, %v2065
  %v2130 = vpack.c.b16 %v2074, %v2070
  %v2131 = vpack.c.b16 %v2075, %v2071
  %v2132 = vpack.c.b16 %v2076, %v2072
  %v2133 = vpack.c.b16 %v2077, %v2073
  %v2134 = vpack.c.b16 %v2082, %v2078
  %v2135 = vpack.c.b16 %v2083, %v2079
  %v2136 = vpack.c.b16 %v2084, %v2080
  %v2137 = vpack.c.b16 %v2085, %v2081
  %v2138 = vpack.c.b16 %v2090, %v2086
  %v2139 = vpack.c.b16 %v2091, %v2087
  %v2140 = vpack.c.b16 %v2092, %v2088
  %v2141 = vpack.c.b16 %v2093, %v2089
  %v2142 = vpack.c.b16 %v2098, %v2094
  %v2143 = vpack.c.b16 %v2099, %v2095
  %v2144 = vpack.c.b16 %v2100, %v2096
  %v2145 = vpack.c.b16 %v2101, %v2097
  %v2146 = vpack.c.b16 %v2106, %v2102
  %v2147 = vpack.c.b16 %v2107, %v2103
  %v2148 = vpack.c.b16 %v2108, %v2104
  %v2149 = vpack.c.b16 %v2109, %v2105
  %v2150 = vpack.c.b16 %v2114, %v2110
  %v2151 = vpack.c.b16 %v2115, %v2111
  %v2152 = vpack.c.b16 %v2116, %v2112
  %v2153 = vpack.c.b16 %v2117, %v2113
  %v2154 = vpack.c.b16 %v2122, %v2118
  %v2155 = vpack.c.b16 %v2123, %v2119
  %v2156 = vpack.c.b16 %v2124, %v2120
  %v2157 = vpack.c.b16 %v2125, %v2121
  %2190 = vmatprep.subr.bf16.mxu0 %v2127
  %2191 = vmatpush1.bf16.msra.mxu0 %v2126
  %2192 = vmatprep.subr.bf16.mxu0 %v2131
  %2193 = vmatpush1.bf16.msra.mxu0 %v2130
  %2194 = vmatprep.subr.bf16.mxu0 %v2135
  %2195 = vmatpush1.bf16.msra.mxu0 %v2134
  %2196 = vmatprep.subr.bf16.mxu0 %v2139
  %2197 = vmatpush1.bf16.msra.mxu0 %v2138
  %2198 = vmatprep.subr.bf16.mxu0 %v2143
  %2199 = vmatpush1.bf16.msra.mxu0 %v2142
  %2200 = vmatprep.subr.bf16.mxu0 %v2147
  %2201 = vmatpush1.bf16.msra.mxu0 %v2146
  %2202 = vmatprep.subr.bf16.mxu0 %v2151
  %2203 = vmatpush1.bf16.msra.mxu0 %v2150
  %2204 = vmatprep.subr.bf16.mxu0 %v2155
  %2205 = vmatpush1.bf16.msra.mxu0 %v2154
  %2206 = vmatprep.subr.bf16.mxu0 0
  %2207 = vmatpush1.bf16.msra.mxu0 0
  %2208 = vmatprep.subr.bf16.mxu0 0
  %2209 = vmatpush1.bf16.msra.mxu0 0
  %2210 = vmatprep.subr.bf16.mxu0 0
  %2211 = vmatpush1.bf16.msra.mxu0 0
  %2212 = vmatprep.subr.bf16.mxu0 0
  %2213 = vmatpush1.bf16.msra.mxu0 0
  %2214 = vmatprep.subr.bf16.mxu0 0
  %2215 = vmatpush1.bf16.msra.mxu0 0
  %2216 = vmatprep.subr.bf16.mxu0 0
  %2217 = vmatpush1.bf16.msra.mxu0 0
  %2218 = vmatprep.subr.bf16.mxu0 0
  %2219 = vmatpush1.bf16.msra.mxu0 0
  %2220 = vmatprep.subr.bf16.mxu0 0
  %2221 = vmatpush1.bf16.msra.mxu0 0
  %2222 = vmatprep.mubr.bf16.mxu0 0
  %2223 = vmatmul.mubr.bf16.gmra.mrb[0].mxu0 %v2029
  %v2224 = vpop.f32.mrb[0].mxu0
  %v2225 = vadd.f32 0.0, %v2224
  %v2226 = vpop.f32.mrb[0].mxu0
  %v2227 = vadd.f32 0.0, %v2226
  %v2228 = vpop.f32.mrb[0].mxu0
  %v2229 = vpop.f32.mrb[0].mxu0
  %2230 = vdwg.mxu0
  %2231 = vmatprep.subr.bf16.mxu0 %v2129
  %2232 = vmatpush1.bf16.msra.mxu0 %v2128
  %2233 = vmatprep.subr.bf16.mxu0 %v2133
  %2234 = vmatpush1.bf16.msra.mxu0 %v2132
  %2235 = vmatprep.subr.bf16.mxu0 %v2137
  %2236 = vmatpush1.bf16.msra.mxu0 %v2136
  %2237 = vmatprep.subr.bf16.mxu0 %v2141
  %2238 = vmatpush1.bf16.msra.mxu0 %v2140
  %2239 = vmatprep.subr.bf16.mxu0 %v2145
  %2240 = vmatpush1.bf16.msra.mxu0 %v2144
  %2241 = vmatprep.subr.bf16.mxu0 %v2149
  %2242 = vmatpush1.bf16.msra.mxu0 %v2148
  %2243 = vmatprep.subr.bf16.mxu0 %v2153
  %2244 = vmatpush1.bf16.msra.mxu0 %v2152
  %2245 = vmatprep.subr.bf16.mxu0 %v2157
  %2246 = vmatpush1.bf16.msra.mxu0 %v2156
  %2247 = vmatprep.subr.bf16.mxu0 0
  %2248 = vmatpush1.bf16.msra.mxu0 0
  %2249 = vmatprep.subr.bf16.mxu0 0
  %2250 = vmatpush1.bf16.msra.mxu0 0
  %2251 = vmatprep.subr.bf16.mxu0 0
  %2252 = vmatpush1.bf16.msra.mxu0 0
  %2253 = vmatprep.subr.bf16.mxu0 0
  %2254 = vmatpush1.bf16.msra.mxu0 0
  %2255 = vmatprep.subr.bf16.mxu0 0
  %2256 = vmatpush1.bf16.msra.mxu0 0
  %2257 = vmatprep.subr.bf16.mxu0 0
  %2258 = vmatpush1.bf16.msra.mxu0 0
  %2259 = vmatprep.subr.bf16.mxu0 0
  %2260 = vmatpush1.bf16.msra.mxu0 0
  %2261 = vmatprep.subr.bf16.mxu0 0
  %2262 = vmatpush1.bf16.msra.mxu0 0
  %2263 = vmatprep.mubr.bf16.mxu0 0
  %2264 = vmatmul.mubr.bf16.gmra.mrb[0].mxu0 %v2029
  %v2265 = vpop.f32.mrb[0].mxu0
  %v2266 = vadd.f32 0.0, %v2265
  %v2267 = vpop.f32.mrb[0].mxu0
  %v2268 = vadd.f32 0.0, %v2267
  %v2269 = vpop.f32.mrb[0].mxu0
  %v2270 = vpop.f32.mrb[0].mxu0
  %2271 = vdwg.mxu0
  %v2272 = vadd.f32 %v2025, %v2225
  %v2273 = vadd.f32 %v2026, %v2227
  %v2274 = vadd.f32 %v2027, %v2266
  %v2275 = vadd.f32 %v2028, %v2268
  %v2276 = vxor.u32 %v2272, 2147483648
  %v2277 = vmul.f32 %v2276, 1.442695
  %v2278 = vpow.pop %v2277
  %v2279 = vadd.f32 %v2278, 1.0
  %v2280 = vrcp.pop %v2279
  %v2281 = vmul.f32 1.0, %v2280
  %v2282 = vxor.u32 %v2273, 2147483648
  %v2283 = vmul.f32 %v2282, 1.442695
  %v2284 = vpow.pop %v2283
  %v2285 = vadd.f32 %v2284, 1.0
  %v2286 = vrcp.pop %v2285
  %v2287 = vmul.f32 1.0, %v2286
  %v2288 = vtanh.pop %v2274
  %v2289 = vxor.u32 %v2275, 2147483648
  %v2290 = vmul.f32 %v2289, 1.442695
  %v2291 = vpow.pop %v2290
  %v2292 = vadd.f32 %v2291, 1.0
  %v2293 = vrcp.pop %v2292
  %v2294 = vmul.f32 1.0, %v2293
  %v2295 = vmul.f32 %v2287, %v2024
  %v2296 = vmul.f32 %v2281, %v2288
  %v2297 = vadd.f32 %v2295, %v2296
  %v2298 = vtanh.pop %v2297
  %v2299 = vmul.f32 %v2294, %v2298
  %2300 = vst [vmem:[%s4] sm:$0xff] %v2299
  %v2301 = vld [vmem:[#allocation5 + $0x20] sm:$0xff]
  %v2302 = vld [vmem:[#allocation5 + $0x28] sm:$0xff]
  %v2303 = vld [vmem:[#allocation5 + $0x30] sm:$0xff]
  %v2304 = vld [vmem:[#allocation5 + $0x38] sm:$0xff]
  %v2305 = vpack.c.bf16 %v2299, %v2299
  %2306 = vmatprep.subr.bf16.mxu0 %v2127
  %2307 = vmatpush1.bf16.msra.mxu0 %v2126
  %2308 = vmatprep.subr.bf16.mxu0 %v2131
  %2309 = vmatpush1.bf16.msra.mxu0 %v2130
  %2310 = vmatprep.subr.bf16.mxu0 %v2135
  %2311 = vmatpush1.bf16.msra.mxu0 %v2134
  %2312 = vmatprep.subr.bf16.mxu0 %v2139
  %2313 = vmatpush1.bf16.msra.mxu0 %v2138
  %2314 = vmatprep.subr.bf16.mxu0 %v2143
  %2315 = vmatpush1.bf16.msra.mxu0 %v2142
  %2316 = vmatprep.subr.bf16.mxu0 %v2147
  %2317 = vmatpush1.bf16.msra.mxu0 %v2146
  %2318 = vmatprep.subr.bf16.mxu0 %v2151
  %2319 = vmatpush1.bf16.msra.mxu0 %v2150
  %2320 = vmatprep.subr.bf16.mxu0 %v2155
  %2321 = vmatpush1.bf16.msra.mxu0 %v2154
  %2322 = vmatprep.subr.bf16.mxu0 0
  %2323 = vmatpush1.bf16.msra.mxu0 0
  %2324 = vmatprep.subr.bf16.mxu0 0
  %2325 = vmatpush1.bf16.msra.mxu0 0
  %2326 = vmatprep.subr.bf16.mxu0 0
  %2327 = vmatpush1.bf16.msra.mxu0 0
  %2328 = vmatprep.subr.bf16.mxu0 0
  %2329 = vmatpush1.bf16.msra.mxu0 0
  %2330 = vmatprep.subr.bf16.mxu0 0
  %2331 = vmatpush1.bf16.msra.mxu0 0
  %2332 = vmatprep.subr.bf16.mxu0 0
  %2333 = vmatpush1.bf16.msra.mxu0 0
  %2334 = vmatprep.subr.bf16.mxu0 0
  %2335 = vmatpush1.bf16.msra.mxu0 0
  %2336 = vmatprep.subr.bf16.mxu0 0
  %2337 = vmatpush1.bf16.msra.mxu0 0
  %2338 = vmatprep.mubr.bf16.mxu0 0
  %2339 = vmatmul.mubr.bf16.gmra.mrb[0].mxu0 %v2305
  %v2340 = vpop.f32.mrb[0].mxu0
  %v2341 = vadd.f32 0.0, %v2340
  %v2342 = vpop.f32.mrb[0].mxu0
  %v2343 = vadd.f32 0.0, %v2342
  %v2344 = vpop.f32.mrb[0].mxu0
  %v2345 = vpop.f32.mrb[0].mxu0
  %2346 = vdwg.mxu0
  %2347 = vmatprep.subr.bf16.mxu0 %v2129
  %2348 = vmatpush1.bf16.msra.mxu0 %v2128
  %2349 = vmatprep.subr.bf16.mxu0 %v2133
  %2350 = vmatpush1.bf16.msra.mxu0 %v2132
  %2351 = vmatprep.subr.bf16.mxu0 %v2137
  %2352 = vmatpush1.bf16.msra.mxu0 %v2136
  %2353 = vmatprep.subr.bf16.mxu0 %v2141
  %2354 = vmatpush1.bf16.msra.mxu0 %v2140
  %2355 = vmatprep.subr.bf16.mxu0 %v2145
  %2356 = vmatpush1.bf16.msra.mxu0 %v2144
  %2357 = vmatprep.subr.bf16.mxu0 %v2149
  %2358 = vmatpush1.bf16.msra.mxu0 %v2148
  %2359 = vmatprep.subr.bf16.mxu0 %v2153
  %2360 = vmatpush1.bf16.msra.mxu0 %v2152
  %2361 = vmatprep.subr.bf16.mxu0 %v2157
  %2362 = vmatpush1.bf16.msra.mxu0 %v2156
  %2363 = vmatprep.subr.bf16.mxu0 0
  %2364 = vmatpush1.bf16.msra.mxu0 0
  %2365 = vmatprep.subr.bf16.mxu0 0
  %2366 = vmatpush1.bf16.msra.mxu0 0
  %2367 = vmatprep.subr.bf16.mxu0 0
  %2368 = vmatpush1.bf16.msra.mxu0 0
  %2369 = vmatprep.subr.bf16.mxu0 0
  %2370 = vmatpush1.bf16.msra.mxu0 0
  %2371 = vmatprep.subr.bf16.mxu0 0
  %2372 = vmatpush1.bf16.msra.mxu0 0
  %2373 = vmatprep.subr.bf16.mxu0 0
  %2374 = vmatpush1.bf16.msra.mxu0 0
  %2375 = vmatprep.subr.bf16.mxu0 0
  %2376 = vmatpush1.bf16.msra.mxu0 0
  %2377 = vmatprep.subr.bf16.mxu0 0
  %2378 = vmatpush1.bf16.msra.mxu0 0
  %2379 = vmatprep.mubr.bf16.mxu0 0
  %2380 = vmatmul.mubr.bf16.gmra.mrb[0].mxu0 %v2305
  %v2381 = vpop.f32.mrb[0].mxu0
  %v2382 = vadd.f32 0.0, %v2381
  %v2383 = vpop.f32.mrb[0].mxu0
  %v2384 = vadd.f32 0.0, %v2383
  %v2385 = vpop.f32.mrb[0].mxu0
  %v2386 = vpop.f32.mrb[0].mxu0
  %2387 = vdwg.mxu0
  %v2388 = vadd.f32 %v2301, %v2341
  %v2389 = vadd.f32 %v2302, %v2343
  %v2390 = vadd.f32 %v2303, %v2382
  %v2391 = vadd.f32 %v2304, %v2384
  %v2392 = vxor.u32 %v2388, 2147483648
  %v2393 = vmul.f32 %v2392, 1.442695
  %v2394 = vpow.pop %v2393
  %v2395 = vadd.f32 %v2394, 1.0
  %v2396 = vrcp.pop %v2395
  %v2397 = vmul.f32 1.0, %v2396
  %v2398 = vxor.u32 %v2389, 2147483648
  %v2399 = vmul.f32 %v2398, 1.442695
  %v2400 = vpow.pop %v2399
  %v2401 = vadd.f32 %v2400, 1.0
  %v2402 = vrcp.pop %v2401
  %v2403 = vmul.f32 1.0, %v2402
  %v2404 = vtanh.pop %v2390
  %v2405 = vxor.u32 %v2391, 2147483648
  %v2406 = vmul.f32 %v2405, 1.442695
  %v2407 = vpow.pop %v2406
  %v2408 = vadd.f32 %v2407, 1.0
  %v2409 = vrcp.pop %v2408
  %v2410 = vmul.f32 1.0, %v2409
  %v2411 = vmul.f32 %v2403, %v2297
  %v2412 = vmul.f32 %v2397, %v2404
  %v2413 = vadd.f32 %v2411, %v2412
  %v2414 = vtanh.pop %v2413
  %v2415 = vmul.f32 %v2410, %v2414
  %2416 = vst [vmem:[%s4 + $0x8] sm:$0xff] %v2415
  %v2417 = vld [vmem:[#allocation5 + $0x40] sm:$0xff]
  %v2418 = vld [vmem:[#allocation5 + $0x48] sm:$0xff]
  %v2419 = vld [vmem:[#allocation5 + $0x50] sm:$0xff]
  %v2420 = vld [vmem:[#allocation5 + $0x58] sm:$0xff]
  %v2421 = vpack.c.bf16 %v2415, %v2415
  %2422 = vmatprep.subr.bf16.mxu0 %v2127
  %2423 = vmatpush1.bf16.msra.mxu0 %v2126
  %2424 = vmatprep.subr.bf16.mxu0 %v2131
  %2425 = vmatpush1.bf16.msra.mxu0 %v2130
  %2426 = vmatprep.subr.bf16.mxu0 %v2135
  %2427 = vmatpush1.bf16.msra.mxu0 %v2134
  %2428 = vmatprep.subr.bf16.mxu0 %v2139
  %2429 = vmatpush1.bf16.msra.mxu0 %v2138
  %2430 = vmatprep.subr.bf16.mxu0 %v2143
  %2431 = vmatpush1.bf16.msra.mxu0 %v2142
  %2432 = vmatprep.subr.bf16.mxu0 %v2147
  %2433 = vmatpush1.bf16.msra.mxu0 %v2146
  %2434 = vmatprep.subr.bf16.mxu0 %v2151
  %2435 = vmatpush1.bf16.msra.mxu0 %v2150
  %2436 = vmatprep.subr.bf16.mxu0 %v2155
  %2437 = vmatpush1.bf16.msra.mxu0 %v2154
  %2438 = vmatprep.subr.bf16.mxu0 0
  %2439 = vmatpush1.bf16.msra.mxu0 0
  %2440 = vmatprep.subr.bf16.mxu0 0
  %2441 = vmatpush1.bf16.msra.mxu0 0
  %2442 = vmatprep.subr.bf16.mxu0 0
  %2443 = vmatpush1.bf16.msra.mxu0 0
  %2444 = vmatprep.subr.bf16.mxu0 0
  %2445 = vmatpush1.bf16.msra.mxu0 0
  %2446 = vmatprep.subr.bf16.mxu0 0
  %2447 = vmatpush1.bf16.msra.mxu0 0
  %2448 = vmatprep.subr.bf16.mxu0 0
  %2449 = vmatpush1.bf16.msra.mxu0 0
  %2450 = vmatprep.subr.bf16.mxu0 0
  %2451 = vmatpush1.bf16.msra.mxu0 0
  %2452 = vmatprep.subr.bf16.mxu0 0
  %2453 = vmatpush1.bf16.msra.mxu0 0
  %2454 = vmatprep.mubr.bf16.mxu0 0
  %2455 = vmatmul.mubr.bf16.gmra.mrb[0].mxu0 %v2421
  %v2456 = vpop.f32.mrb[0].mxu0
  %v2457 = vadd.f32 0.0, %v2456
  %v2458 = vpop.f32.mrb[0].mxu0
  %v2459 = vadd.f32 0.0, %v2458
  %v2460 = vpop.f32.mrb[0].mxu0
  %v2461 = vpop.f32.mrb[0].mxu0
  %2462 = vdwg.mxu0
  %2463 = vmatprep.subr.bf16.mxu0 %v2129
  %2464 = vmatpush1.bf16.msra.mxu0 %v2128
  %2465 = vmatprep.subr.bf16.mxu0 %v2133
  %2466 = vmatpush1.bf16.msra.mxu0 %v2132
  %2467 = vmatprep.subr.bf16.mxu0 %v2137
  %2468 = vmatpush1.bf16.msra.mxu0 %v2136
  %2469 = vmatprep.subr.bf16.mxu0 %v2141
  %2470 = vmatpush1.bf16.msra.mxu0 %v2140
  %2471 = vmatprep.subr.bf16.mxu0 %v2145
  %2472 = vmatpush1.bf16.msra.mxu0 %v2144
  %2473 = vmatprep.subr.bf16.mxu0 %v2149
  %2474 = vmatpush1.bf16.msra.mxu0 %v2148
  %2475 = vmatprep.subr.bf16.mxu0 %v2153
  %2476 = vmatpush1.bf16.msra.mxu0 %v2152
  %2477 = vmatprep.subr.bf16.mxu0 %v2157
  %2478 = vmatpush1.bf16.msra.mxu0 %v2156
  %2479 = vmatprep.subr.bf16.mxu0 0
  %2480 = vmatpush1.bf16.msra.mxu0 0
  %2481 = vmatprep.subr.bf16.mxu0 0
  %2482 = vmatpush1.bf16.msra.mxu0 0
  %2483 = vmatprep.subr.bf16.mxu0 0
  %2484 = vmatpush1.bf16.msra.mxu0 0
  %2485 = vmatprep.subr.bf16.mxu0 0
  %2486 = vmatpush1.bf16.msra.mxu0 0
  %2487 = vmatprep.subr.bf16.mxu0 0
  %2488 = vmatpush1.bf16.msra.mxu0 0
  %2489 = vmatprep.subr.bf16.mxu0 0
  %2490 = vmatpush1.bf16.msra.mxu0 0
  %2491 = vmatprep.subr.bf16.mxu0 0
  %2492 = vmatpush1.bf16.msra.mxu0 0
  %2493 = vmatprep.subr.bf16.mxu0 0
  %2494 = vmatpush1.bf16.msra.mxu0 0
  %2495 = vmatprep.mubr.bf16.mxu0 0
  %2496 = vmatmul.mubr.bf16.gmra.mrb[0].mxu0 %v2421
  %v2497 = vpop.f32.mrb[0].mxu0
  %v2498 = vadd.f32 0.0, %v2497
  %v2499 = vpop.f32.mrb[0].mxu0
  %v2500 = vadd.f32 0.0, %v2499
  %v2501 = vpop.f32.mrb[0].mxu0
  %v2502 = vpop.f32.mrb[0].mxu0
  %2503 = vdwg.mxu0
  %v2504 = vadd.f32 %v2417, %v2457
  %v2505 = vadd.f32 %v2418, %v2459
  %v2506 = vadd.f32 %v2419, %v2498
  %v2507 = vadd.f32 %v2420, %v2500
  %v2508 = vxor.u32 %v2504, 2147483648
  %v2509 = vmul.f32 %v2508, 1.442695
  %v2510 = vpow.pop %v2509
  %v2511 = vadd.f32 %v2510, 1.0
  %v2512 = vrcp.pop %v2511
  %v2513 = vmul.f32 1.0, %v2512
  %v2514 = vxor.u32 %v2505, 2147483648
  %v2515 = vmul.f32 %v2514, 1.442695
  %v2516 = vpow.pop %v2515
  %v2517 = vadd.f32 %v2516, 1.0
  %v2518 = vrcp.pop %v2517
  %v2519 = vmul.f32 1.0, %v2518
  %v2520 = vtanh.pop %v2506
  %v2521 = vxor.u32 %v2507, 2147483648
  %v2522 = vmul.f32 %v2521, 1.442695
  %v2523 = vpow.pop %v2522
  %v2524 = vadd.f32 %v2523, 1.0
  %v2525 = vrcp.pop %v2524
  %v2526 = vmul.f32 1.0, %v2525
  %v2527 = vmul.f32 %v2519, %v2413
  %v2528 = vmul.f32 %v2513, %v2520
  %v2529 = vadd.f32 %v2527, %v2528
  %v2530 = vtanh.pop %v2529
  %v2531 = vmul.f32 %v2526, %v2530
  %2532 = vst [vmem:[%s4 + $0x10] sm:$0xff] %v2531
  %v2533 = vld [vmem:[#allocation5 + $0x60] sm:$0xff]
  %v2534 = vld [vmem:[#allocation5 + $0x68] sm:$0xff]
  %v2535 = vld [vmem:[#allocation5 + $0x70] sm:$0xff]
  %v2536 = vld [vmem:[#allocation5 + $0x78] sm:$0xff]
  %v2537 = vpack.c.bf16 %v2531, %v2531
  %2538 = vmatprep.subr.bf16.mxu0 %v2127
  %2539 = vmatpush1.bf16.msra.mxu0 %v2126
  %2540 = vmatprep.subr.bf16.mxu0 %v2131
  %2541 = vmatpush1.bf16.msra.mxu0 %v2130
  %2542 = vmatprep.subr.bf16.mxu0 %v2135
  %2543 = vmatpush1.bf16.msra.mxu0 %v2134
  %2544 = vmatprep.subr.bf16.mxu0 %v2139
  %2545 = vmatpush1.bf16.msra.mxu0 %v2138
  %2546 = vmatprep.subr.bf16.mxu0 %v2143
  %2547 = vmatpush1.bf16.msra.mxu0 %v2142
  %2548 = vmatprep.subr.bf16.mxu0 %v2147
  %2549 = vmatpush1.bf16.msra.mxu0 %v2146
  %2550 = vmatprep.subr.bf16.mxu0 %v2151
  %2551 = vmatpush1.bf16.msra.mxu0 %v2150
  %2552 = vmatprep.subr.bf16.mxu0 %v2155
  %2553 = vmatpush1.bf16.msra.mxu0 %v2154
  %2554 = vmatprep.subr.bf16.mxu0 0
  %2555 = vmatpush1.bf16.msra.mxu0 0
  %2556 = vmatprep.subr.bf16.mxu0 0
  %2557 = vmatpush1.bf16.msra.mxu0 0
  %2558 = vmatprep.subr.bf16.mxu0 0
  %2559 = vmatpush1.bf16.msra.mxu0 0
  %2560 = vmatprep.subr.bf16.mxu0 0
  %2561 = vmatpush1.bf16.msra.mxu0 0
  %2562 = vmatprep.subr.bf16.mxu0 0
  %2563 = vmatpush1.bf16.msra.mxu0 0
  %2564 = vmatprep.subr.bf16.mxu0 0
  %2565 = vmatpush1.bf16.msra.mxu0 0
  %2566 = vmatprep.subr.bf16.mxu0 0
  %2567 = vmatpush1.bf16.msra.mxu0 0
  %2568 = vmatprep.subr.bf16.mxu0 0
  %2569 = vmatpush1.bf16.msra.mxu0 0
  %2570 = vmatprep.mubr.bf16.mxu0 0
  %2571 = vmatmul.mubr.bf16.gmra.mrb[0].mxu0 %v2537
  %v2572 = vpop.f32.mrb[0].mxu0
  %v2573 = vadd.f32 0.0, %v2572
  %v2574 = vpop.f32.mrb[0].mxu0
  %v2575 = vadd.f32 0.0, %v2574
  %v2576 = vpop.f32.mrb[0].mxu0
  %v2577 = vpop.f32.mrb[0].mxu0
  %2578 = vdwg.mxu0
  %2579 = vmatprep.subr.bf16.mxu0 %v2129
  %2580 = vmatpush1.bf16.msra.mxu0 %v2128
  %2581 = vmatprep.subr.bf16.mxu0 %v2133
  %2582 = vmatpush1.bf16.msra.mxu0 %v2132
  %2583 = vmatprep.subr.bf16.mxu0 %v2137
  %2584 = vmatpush1.bf16.msra.mxu0 %v2136
  %2585 = vmatprep.subr.bf16.mxu0 %v2141
  %2586 = vmatpush1.bf16.msra.mxu0 %v2140
  %2587 = vmatprep.subr.bf16.mxu0 %v2145
  %2588 = vmatpush1.bf16.msra.mxu0 %v2144
  %2589 = vmatprep.subr.bf16.mxu0 %v2149
  %2590 = vmatpush1.bf16.msra.mxu0 %v2148
  %2591 = vmatprep.subr.bf16.mxu0 %v2153
  %2592 = vmatpush1.bf16.msra.mxu0 %v2152
  %2593 = vmatprep.subr.bf16.mxu0 %v2157
  %2594 = vmatpush1.bf16.msra.mxu0 %v2156
  %2595 = vmatprep.subr.bf16.mxu0 0
  %2596 = vmatpush1.bf16.msra.mxu0 0
  %2597 = vmatprep.subr.bf16.mxu0 0
  %2598 = vmatpush1.bf16.msra.mxu0 0
  %2599 = vmatprep.subr.bf16.mxu0 0
  %2600 = vmatpush1.bf16.msra.mxu0 0
  %2601 = vmatprep.subr.bf16.mxu0 0
  %2602 = vmatpush1.bf16.msra.mxu0 0
  %2603 = vmatprep.subr.bf16.mxu0 0
  %2604 = vmatpush1.bf16.msra.mxu0 0
  %2605 = vmatprep.subr.bf16.mxu0 0
  %2606 = vmatpush1.bf16.msra.mxu0 0
  %2607 = vmatprep.subr.bf16.mxu0 0
  %2608 = vmatpush1.bf16.msra.mxu0 0
  %2609 = vmatprep.subr.bf16.mxu0 0
  %2610 = vmatpush1.bf16.msra.mxu0 0
  %2611 = vmatprep.mubr.bf16.mxu0 0
  %2612 = vmatmul.mubr.bf16.gmra.mrb[0].mxu0 %v2537
  %v2613 = vpop.f32.mrb[0].mxu0
  %v2614 = vadd.f32 0.0, %v2613
  %v2615 = vpop.f32.mrb[0].mxu0
  %v2616 = vadd.f32 0.0, %v2615
  %v2617 = vpop.f32.mrb[0].mxu0
  %v2618 = vpop.f32.mrb[0].mxu0
  %2619 = vdwg.mxu0
  %v2620 = vadd.f32 %v2533, %v2573
  %v2621 = vadd.f32 %v2534, %v2575
  %v2622 = vadd.f32 %v2535, %v2614
  %v2623 = vadd.f32 %v2536, %v2616
  %v2624 = vxor.u32 %v2620, 2147483648
  %v2625 = vmul.f32 %v2624, 1.442695
  %v2626 = vpow.pop %v2625
  %v2627 = vadd.f32 %v2626, 1.0
  %v2628 = vrcp.pop %v2627
  %v2629 = vmul.f32 1.0, %v2628
  %v2630 = vxor.u32 %v2621, 2147483648
  %v2631 = vmul.f32 %v2630, 1.442695
  %v2632 = vpow.pop %v2631
  %v2633 = vadd.f32 %v2632, 1.0
  %v2634 = vrcp.pop %v2633
  %v2635 = vmul.f32 1.0, %v2634
  %v2636 = vtanh.pop %v2622
  %v2637 = vxor.u32 %v2623, 2147483648
  %v2638 = vmul.f32 %v2637, 1.442695
  %v2639 = vpow.pop %v2638
  %v2640 = vadd.f32 %v2639, 1.0
  %v2641 = vrcp.pop %v2640
  %v2642 = vmul.f32 1.0, %v2641
  %v2643 = vmul.f32 %v2635, %v2529
  %v2644 = vmul.f32 %v2629, %v2636
  %v2645 = vadd.f32 %v2643, %v2644
  %v2646 = vtanh.pop %v2645
  %v2647 = vmul.f32 %v2642, %v2646
  %2648 = vst [vmem:[%s4 + $0x18] sm:$0xff] %v2647
  %v2649 = vld [vmem:[#allocation5 + $0x80] sm:$0xff]
  %v2650 = vld [vmem:[#allocation5 + $0x88] sm:$0xff]
  %v2651 = vld [vmem:[#allocation5 + $0x90] sm:$0xff]
  %v2652 = vld [vmem:[#allocation5 + $0x98] sm:$0xff]
  %v2653 = vpack.c.bf16 %v2647, %v2647
  %2654 = vmatprep.subr.bf16.mxu0 %v2127
  %2655 = vmatpush1.bf16.msra.mxu0 %v2126
  %2656 = vmatprep.subr.bf16.mxu0 %v2131
  %2657 = vmatpush1.bf16.msra.mxu0 %v2130
  %2658 = vmatprep.subr.bf16.mxu0 %v2135
  %2659 = vmatpush1.bf16.msra.mxu0 %v2134
  %2660 = vmatprep.subr.bf16.mxu0 %v2139
  %2661 = vmatpush1.bf16.msra.mxu0 %v2138
  %2662 = vmatprep.subr.bf16.mxu0 %v2143
  %2663 = vmatpush1.bf16.msra.mxu0 %v2142
  %2664 = vmatprep.subr.bf16.mxu0 %v2147
  %2665 = vmatpush1.bf16.msra.mxu0 %v2146
  %2666 = vmatprep.subr.bf16.mxu0 %v2151
  %2667 = vmatpush1.bf16.msra.mxu0 %v2150
  %2668 = vmatprep.subr.bf16.mxu0 %v2155
  %2669 = vmatpush1.bf16.msra.mxu0 %v2154
  %2670 = vmatprep.subr.bf16.mxu0 0
  %2671 = vmatpush1.bf16.msra.mxu0 0
  %2672 = vmatprep.subr.bf16.mxu0 0
  %2673 = vmatpush1.bf16.msra.mxu0 0
  %2674 = vmatprep.subr.bf16.mxu0 0
  %2675 = vmatpush1.bf16.msra.mxu0 0
  %2676 = vmatprep.subr.bf16.mxu0 0
  %2677 = vmatpush1.bf16.msra.mxu0 0
  %2678 = vmatprep.subr.bf16.mxu0 0
  %2679 = vmatpush1.bf16.msra.mxu0 0
  %2680 = vmatprep.subr.bf16.mxu0 0
  %2681 = vmatpush1.bf16.msra.mxu0 0
  %2682 = vmatprep.subr.bf16.mxu0 0
  %2683 = vmatpush1.bf16.msra.mxu0 0
  %2684 = vmatprep.subr.bf16.mxu0 0
  %2685 = vmatpush1.bf16.msra.mxu0 0
  %2686 = vmatprep.mubr.bf16.mxu0 0
  %2687 = vmatmul.mubr.bf16.gmra.mrb[0].mxu0 %v2653
  %v2688 = vpop.f32.mrb[0].mxu0
  %v2689 = vadd.f32 0.0, %v2688
  %v2690 = vpop.f32.mrb[0].mxu0
  %v2691 = vadd.f32 0.0, %v2690
  %v2692 = vpop.f32.mrb[0].mxu0
  %v2693 = vpop.f32.mrb[0].mxu0
  %2694 = vdwg.mxu0
  %2695 = vmatprep.subr.bf16.mxu0 %v2129
  %2696 = vmatpush1.bf16.msra.mxu0 %v2128
  %2697 = vmatprep.subr.bf16.mxu0 %v2133
  %2698 = vmatpush1.bf16.msra.mxu0 %v2132
  %2699 = vmatprep.subr.bf16.mxu0 %v2137
  %2700 = vmatpush1.bf16.msra.mxu0 %v2136
  %2701 = vmatprep.subr.bf16.mxu0 %v2141
  %2702 = vmatpush1.bf16.msra.mxu0 %v2140
  %2703 = vmatprep.subr.bf16.mxu0 %v2145
  %2704 = vmatpush1.bf16.msra.mxu0 %v2144
  %2705 = vmatprep.subr.bf16.mxu0 %v2149
  %2706 = vmatpush1.bf16.msra.mxu0 %v2148
  %2707 = vmatprep.subr.bf16.mxu0 %v2153
  %2708 = vmatpush1.bf16.msra.mxu0 %v2152
  %2709 = vmatprep.subr.bf16.mxu0 %v2157
  %2710 = vmatpush1.bf16.msra.mxu0 %v2156
  %2711 = vmatprep.subr.bf16.mxu0 0
  %2712 = vmatpush1.bf16.msra.mxu0 0
  %2713 = vmatprep.subr.bf16.mxu0 0
  %2714 = vmatpush1.bf16.msra.mxu0 0
  %2715 = vmatprep.subr.bf16.mxu0 0
  %2716 = vmatpush1.bf16.msra.mxu0 0
  %2717 = vmatprep.subr.bf16.mxu0 0
  %2718 = vmatpush1.bf16.msra.mxu0 0
  %2719 = vmatprep.subr.bf16.mxu0 0
  %2720 = vmatpush1.bf16.msra.mxu0 0
  %2721 = vmatprep.subr.bf16.mxu0 0
  %2722 = vmatpush1.bf16.msra.mxu0 0
  %2723 = vmatprep.subr.bf16.mxu0 0
  %2724 = vmatpush1.bf16.msra.mxu0 0
  %2725 = vmatprep.subr.bf16.mxu0 0
  %2726 = vmatpush1.bf16.msra.mxu0 0
  %2727 = vmatprep.mubr.bf16.mxu0 0
  %2728 = vmatmul.mubr.bf16.gmra.mrb[0].mxu0 %v2653
  %v2729 = vpop.f32.mrb[0].mxu0
  %v2730 = vadd.f32 0.0, %v2729
  %v2731 = vpop.f32.mrb[0].mxu0
  %v2732 = vadd.f32 0.0, %v2731
  %v2733 = vpop.f32.mrb[0].mxu0
  %v2734 = vpop.f32.mrb[0].mxu0
  %2735 = vdwg.mxu0
  %v2736 = vadd.f32 %v2649, %v2689
  %v2737 = vadd.f32 %v2650, %v2691
  %v2738 = vadd.f32 %v2651, %v2730
  %v2739 = vadd.f32 %v2652, %v2732
  %v2740 = vxor.u32 %v2736, 2147483648
  %v2741 = vmul.f32 %v2740, 1.442695
  %v2742 = vpow.pop %v2741
  %v2743 = vadd.f32 %v2742, 1.0
  %v2744 = vrcp.pop %v2743
  %v2745 = vmul.f32 1.0, %v2744
  %v2746 = vxor.u32 %v2737, 2147483648
  %v2747 = vmul.f32 %v2746, 1.442695
  %v2748 = vpow.pop %v2747
  %v2749 = vadd.f32 %v2748, 1.0
  %v2750 = vrcp.pop %v2749
  %v2751 = vmul.f32 1.0, %v2750
  %v2752 = vtanh.pop %v2738
  %v2753 = vxor.u32 %v2739, 2147483648
  %v2754 = vmul.f32 %v2753, 1.442695
  %v2755 = vpow.pop %v2754
  %v2756 = vadd.f32 %v2755, 1.0
  %v2757 = vrcp.pop %v2756
  %v2758 = vmul.f32 1.0, %v2757
  %v2759 = vmul.f32 %v2751, %v2645
  %v2760 = vmul.f32 %v2745, %v2752
  %v2761 = vadd.f32 %v2759, %v2760
  %v2762 = vtanh.pop %v2761
  %v2763 = vmul.f32 %v2758, %v2762
  %2764 = vst [vmem:[%s4 + $0x20] sm:$0xff] %v2763
  %v2765 = vld [vmem:[#allocation5 + $0xa0] sm:$0xff]
  %v2766 = vld [vmem:[#allocation5 + $0xa8] sm:$0xff]
  %v2767 = vld [vmem:[#allocation5 + $0xb0] sm:$0xff]
  %v2768 = vld [vmem:[#allocation5 + $0xb8] sm:$0xff]
  %v2769 = vpack.c.bf16 %v2763, %v2763
  %2770 = vmatprep.subr.bf16.mxu0 %v2127
  %2771 = vmatpush1.bf16.msra.mxu0 %v2126
  %2772 = vmatprep.subr.bf16.mxu0 %v2131
  %2773 = vmatpush1.bf16.msra.mxu0 %v2130
  %2774 = vmatprep.subr.bf16.mxu0 %v2135
  %2775 = vmatpush1.bf16.msra.mxu0 %v2134
  %2776 = vmatprep.subr.bf16.mxu0 %v2139
  %2777 = vmatpush1.bf16.msra.mxu0 %v2138
  %2778 = vmatprep.subr.bf16.mxu0 %v2143
  %2779 = vmatpush1.bf16.msra.mxu0 %v2142
  %2780 = vmatprep.subr.bf16.mxu0 %v2147
  %2781 = vmatpush1.bf16.msra.mxu0 %v2146
  %2782 = vmatprep.subr.bf16.mxu0 %v2151
  %2783 = vmatpush1.bf16.msra.mxu0 %v2150
  %2784 = vmatprep.subr.bf16.mxu0 %v2155
  %2785 = vmatpush1.bf16.msra.mxu0 %v2154
  %2786 = vmatprep.subr.bf16.mxu0 0
  %2787 = vmatpush1.bf16.msra.mxu0 0
  %2788 = vmatprep.subr.bf16.mxu0 0
  %2789 = vmatpush1.bf16.msra.mxu0 0
  %2790 = vmatprep.subr.bf16.mxu0 0
  %2791 = vmatpush1.bf16.msra.mxu0 0
  %2792 = vmatprep.subr.bf16.mxu0 0
  %2793 = vmatpush1.bf16.msra.mxu0 0
  %2794 = vmatprep.subr.bf16.mxu0 0
  %2795 = vmatpush1.bf16.msra.mxu0 0
  %2796 = vmatprep.subr.bf16.mxu0 0
  %2797 = vmatpush1.bf16.msra.mxu0 0
  %2798 = vmatprep.subr.bf16.mxu0 0
  %2799 = vmatpush1.bf16.msra.mxu0 0
  %2800 = vmatprep.subr.bf16.mxu0 0
  %2801 = vmatpush1.bf16.msra.mxu0 0
  %2802 = vmatprep.mubr.bf16.mxu0 0
  %2803 = vmatmul.mubr.bf16.gmra.mrb[0].mxu0 %v2769
  %v2804 = vpop.f32.mrb[0].mxu0
  %v2805 = vadd.f32 0.0, %v2804
  %v2806 = vpop.f32.mrb[0].mxu0
  %v2807 = vadd.f32 0.0, %v2806
  %v2808 = vpop.f32.mrb[0].mxu0
  %v2809 = vpop.f32.mrb[0].mxu0
  %2810 = vdwg.mxu0
  %2811 = vmatprep.subr.bf16.mxu0 %v2129
  %2812 = vmatpush1.bf16.msra.mxu0 %v2128
  %2813 = vmatprep.subr.bf16.mxu0 %v2133
  %2814 = vmatpush1.bf16.msra.mxu0 %v2132
  %2815 = vmatprep.subr.bf16.mxu0 %v2137
  %2816 = vmatpush1.bf16.msra.mxu0 %v2136
  %2817 = vmatprep.subr.bf16.mxu0 %v2141
  %2818 = vmatpush1.bf16.msra.mxu0 %v2140
  %2819 = vmatprep.subr.bf16.mxu0 %v2145
  %2820 = vmatpush1.bf16.msra.mxu0 %v2144
  %2821 = vmatprep.subr.bf16.mxu0 %v2149
  %2822 = vmatpush1.bf16.msra.mxu0 %v2148
  %2823 = vmatprep.subr.bf16.mxu0 %v2153
  %2824 = vmatpush1.bf16.msra.mxu0 %v2152
  %2825 = vmatprep.subr.bf16.mxu0 %v2157
  %2826 = vmatpush1.bf16.msra.mxu0 %v2156
  %2827 = vmatprep.subr.bf16.mxu0 0
  %2828 = vmatpush1.bf16.msra.mxu0 0
  %2829 = vmatprep.subr.bf16.mxu0 0
  %2830 = vmatpush1.bf16.msra.mxu0 0
  %2831 = vmatprep.subr.bf16.mxu0 0
  %2832 = vmatpush1.bf16.msra.mxu0 0
  %2833 = vmatprep.subr.bf16.mxu0 0
  %2834 = vmatpush1.bf16.msra.mxu0 0
  %2835 = vmatprep.subr.bf16.mxu0 0
  %2836 = vmatpush1.bf16.msra.mxu0 0
  %2837 = vmatprep.subr.bf16.mxu0 0
  %2838 = vmatpush1.bf16.msra.mxu0 0
  %2839 = vmatprep.subr.bf16.mxu0 0
  %2840 = vmatpush1.bf16.msra.mxu0 0
  %2841 = vmatprep.subr.bf16.mxu0 0
  %2842 = vmatpush1.bf16.msra.mxu0 0
  %2843 = vmatprep.mubr.bf16.mxu0 0
  %2844 = vmatmul.mubr.bf16.gmra.mrb[0].mxu0 %v2769
  %v2845 = vpop.f32.mrb[0].mxu0
  %v2846 = vadd.f32 0.0, %v2845
  %v2847 = vpop.f32.mrb[0].mxu0
  %v2848 = vadd.f32 0.0, %v2847
  %v2849 = vpop.f32.mrb[0].mxu0
  %v2850 = vpop.f32.mrb[0].mxu0
  %2851 = vdwg.mxu0
  %v2852 = vadd.f32 %v2765, %v2805
  %v2853 = vadd.f32 %v2766, %v2807
  %v2854 = vadd.f32 %v2767, %v2846
  %v2855 = vadd.f32 %v2768, %v2848
  %v2856 = vxor.u32 %v2852, 2147483648
  %v2857 = vmul.f32 %v2856, 1.442695
  %v2858 = vpow.pop %v2857
  %v2859 = vadd.f32 %v2858, 1.0
  %v2860 = vrcp.pop %v2859
  %v2861 = vmul.f32 1.0, %v2860
  %v2862 = vxor.u32 %v2853, 2147483648
  %v2863 = vmul.f32 %v2862, 1.442695
  %v2864 = vpow.pop %v2863
  %v2865 = vadd.f32 %v2864, 1.0
  %v2866 = vrcp.pop %v2865
  %v2867 = vmul.f32 1.0, %v2866
  %v2868 = vtanh.pop %v2854
  %v2869 = vxor.u32 %v2855, 2147483648
  %v2870 = vmul.f32 %v2869, 1.442695
  %v2871 = vpow.pop %v2870
  %v2872 = vadd.f32 %v2871, 1.0
  %v2873 = vrcp.pop %v2872
  %v2874 = vmul.f32 1.0, %v2873
  %v2875 = vmul.f32 %v2867, %v2761
  %v2876 = vmul.f32 %v2861, %v2868
  %v2877 = vadd.f32 %v2875, %v2876
  %v2878 = vtanh.pop %v2877
  %v2879 = vmul.f32 %v2874, %v2878
  %2880 = vst [vmem:[%s4 + $0x28] sm:$0xff] %v2879
  %v2881 = vld [vmem:[#allocation5 + $0xc0] sm:$0xff]
  %v2882 = vld [vmem:[#allocation5 + $0xc8] sm:$0xff]
  %v2883 = vld [vmem:[#allocation5 + $0xd0] sm:$0xff]
  %v2884 = vld [vmem:[#allocation5 + $0xd8] sm:$0xff]
  %v2885 = vpack.c.bf16 %v2879, %v2879
  %2886 = vmatprep.subr.bf16.mxu0 %v2127
  %2887 = vmatpush1.bf16.msra.mxu0 %v2126
  %2888 = vmatprep.subr.bf16.mxu0 %v2131
  %2889 = vmatpush1.bf16.msra.mxu0 %v2130
  %2890 = vmatprep.subr.bf16.mxu0 %v2135
  %2891 = vmatpush1.bf16.msra.mxu0 %v2134
  %2892 = vmatprep.subr.bf16.mxu0 %v2139
  %2893 = vmatpush1.bf16.msra.mxu0 %v2138
  %2894 = vmatprep.subr.bf16.mxu0 %v2143
  %2895 = vmatpush1.bf16.msra.mxu0 %v2142
  %2896 = vmatprep.subr.bf16.mxu0 %v2147
  %2897 = vmatpush1.bf16.msra.mxu0 %v2146
  %2898 = vmatprep.subr.bf16.mxu0 %v2151
  %2899 = vmatpush1.bf16.msra.mxu0 %v2150
  %2900 = vmatprep.subr.bf16.mxu0 %v2155
  %2901 = vmatpush1.bf16.msra.mxu0 %v2154
  %2902 = vmatprep.subr.bf16.mxu0 0
  %2903 = vmatpush1.bf16.msra.mxu0 0
  %2904 = vmatprep.subr.bf16.mxu0 0
  %2905 = vmatpush1.bf16.msra.mxu0 0
  %2906 = vmatprep.subr.bf16.mxu0 0
  %2907 = vmatpush1.bf16.msra.mxu0 0
  %2908 = vmatprep.subr.bf16.mxu0 0
  %2909 = vmatpush1.bf16.msra.mxu0 0
  %2910 = vmatprep.subr.bf16.mxu0 0
  %2911 = vmatpush1.bf16.msra.mxu0 0
  %2912 = vmatprep.subr.bf16.mxu0 0
  %2913 = vmatpush1.bf16.msra.mxu0 0
  %2914 = vmatprep.subr.bf16.mxu0 0
  %2915 = vmatpush1.bf16.msra.mxu0 0
  %2916 = vmatprep.subr.bf16.mxu0 0
  %2917 = vmatpush1.bf16.msra.mxu0 0
  %2918 = vmatprep.mubr.bf16.mxu0 0
  %2919 = vmatmul.mubr.bf16.gmra.mrb[0].mxu0 %v2885
  %v2920 = vpop.f32.mrb[0].mxu0
  %v2921 = vadd.f32 0.0, %v2920
  %v2922 = vpop.f32.mrb[0].mxu0
  %v2923 = vadd.f32 0.0, %v2922
  %v2924 = vpop.f32.mrb[0].mxu0
  %v2925 = vpop.f32.mrb[0].mxu0
  %2926 = vdwg.mxu0
  %2927 = vmatprep.subr.bf16.mxu0 %v2129
  %2928 = vmatpush1.bf16.msra.mxu0 %v2128
  %2929 = vmatprep.subr.bf16.mxu0 %v2133
  %2930 = vmatpush1.bf16.msra.mxu0 %v2132
  %2931 = vmatprep.subr.bf16.mxu0 %v2137
  %2932 = vmatpush1.bf16.msra.mxu0 %v2136
  %2933 = vmatprep.subr.bf16.mxu0 %v2141
  %2934 = vmatpush1.bf16.msra.mxu0 %v2140
  %2935 = vmatprep.subr.bf16.mxu0 %v2145
  %2936 = vmatpush1.bf16.msra.mxu0 %v2144
  %2937 = vmatprep.subr.bf16.mxu0 %v2149
  %2938 = vmatpush1.bf16.msra.mxu0 %v2148
  %2939 = vmatprep.subr.bf16.mxu0 %v2153
  %2940 = vmatpush1.bf16.msra.mxu0 %v2152
  %2941 = vmatprep.subr.bf16.mxu0 %v2157
  %2942 = vmatpush1.bf16.msra.mxu0 %v2156
  %2943 = vmatprep.subr.bf16.mxu0 0
  %2944 = vmatpush1.bf16.msra.mxu0 0
  %2945 = vmatprep.subr.bf16.mxu0 0
  %2946 = vmatpush1.bf16.msra.mxu0 0
  %2947 = vmatprep.subr.bf16.mxu0 0
  %2948 = vmatpush1.bf16.msra.mxu0 0
  %2949 = vmatprep.subr.bf16.mxu0 0
  %2950 = vmatpush1.bf16.msra.mxu0 0
  %2951 = vmatprep.subr.bf16.mxu0 0
  %2952 = vmatpush1.bf16.msra.mxu0 0
  %2953 = vmatprep.subr.bf16.mxu0 0
  %2954 = vmatpush1.bf16.msra.mxu0 0
  %2955 = vmatprep.subr.bf16.mxu0 0
  %2956 = vmatpush1.bf16.msra.mxu0 0
  %2957 = vmatprep.subr.bf16.mxu0 0
  %2958 = vmatpush1.bf16.msra.mxu0 0
  %2959 = vmatprep.mubr.bf16.mxu0 0
  %2960 = vmatmul.mubr.bf16.gmra.mrb[0].mxu0 %v2885
  %v2961 = vpop.f32.mrb[0].mxu0
  %v2962 = vadd.f32 0.0, %v2961
  %v2963 = vpop.f32.mrb[0].mxu0
  %v2964 = vadd.f32 0.0, %v2963
  %v2965 = vpop.f32.mrb[0].mxu0
  %v2966 = vpop.f32.mrb[0].mxu0
  %2967 = vdwg.mxu0
  %v2968 = vadd.f32 %v2881, %v2921
  %v2969 = vadd.f32 %v2882, %v2923
  %v2970 = vadd.f32 %v2883, %v2962
  %v2971 = vadd.f32 %v2884, %v2964
  %v2972 = vxor.u32 %v2968, 2147483648
  %v2973 = vmul.f32 %v2972, 1.442695
  %v2974 = vpow.pop %v2973
  %v2975 = vadd.f32 %v2974, 1.0
  %v2976 = vrcp.pop %v2975
  %v2977 = vmul.f32 1.0, %v2976
  %v2978 = vxor.u32 %v2969, 2147483648
  %v2979 = vmul.f32 %v2978, 1.442695
  %v2980 = vpow.pop %v2979
  %v2981 = vadd.f32 %v2980, 1.0
  %v2982 = vrcp.pop %v2981
  %v2983 = vmul.f32 1.0, %v2982
  %v2984 = vtanh.pop %v2970
  %v2985 = vxor.u32 %v2971, 2147483648
  %v2986 = vmul.f32 %v2985, 1.442695
  %v2987 = vpow.pop %v2986
  %v2988 = vadd.f32 %v2987, 1.0
  %v2989 = vrcp.pop %v2988
  %v2990 = vmul.f32 1.0, %v2989
  %v2991 = vmul.f32 %v2983, %v2877
  %v2992 = vmul.f32 %v2977, %v2984
  %v2993 = vadd.f32 %v2991, %v2992
  %v2994 = vtanh.pop %v2993
  %v2995 = vmul.f32 %v2990, %v2994
  %2996 = vst [vmem:[%s4 + $0x30] sm:$0xff] %v2995
  %v2997 = vld [vmem:[#allocation5 + $0xe0] sm:$0xff]
  %v2998 = vld [vmem:[#allocation5 + $0xe8] sm:$0xff]
  %v2999 = vld [vmem:[#allocation5 + $0xf0] sm:$0xff]
  %v3000 = vld [vmem:[#allocation5 + $0xf8] sm:$0xff]
  %v3001 = vpack.c.bf16 %v2995, %v2995
  %3002 = vmatprep.subr.bf16.mxu0 %v2127
  %3003 = vmatpush1.bf16.msra.mxu0 %v2126
  %3004 = vmatprep.subr.bf16.mxu0 %v2131
  %3005 = vmatpush1.bf16.msra.mxu0 %v2130
  %3006 = vmatprep.subr.bf16.mxu0 %v2135
  %3007 = vmatpush1.bf16.msra.mxu0 %v2134
  %3008 = vmatprep.subr.bf16.mxu0 %v2139
  %3009 = vmatpush1.bf16.msra.mxu0 %v2138
  %3010 = vmatprep.subr.bf16.mxu0 %v2143
  %3011 = vmatpush1.bf16.msra.mxu0 %v2142
  %3012 = vmatprep.subr.bf16.mxu0 %v2147
  %3013 = vmatpush1.bf16.msra.mxu0 %v2146
  %3014 = vmatprep.subr.bf16.mxu0 %v2151
  %3015 = vmatpush1.bf16.msra.mxu0 %v2150
  %3016 = vmatprep.subr.bf16.mxu0 %v2155
  %3017 = vmatpush1.bf16.msra.mxu0 %v2154
  %3018 = vmatprep.subr.bf16.mxu0 0
  %3019 = vmatpush1.bf16.msra.mxu0 0
  %3020 = vmatprep.subr.bf16.mxu0 0
  %3021 = vmatpush1.bf16.msra.mxu0 0
  %3022 = vmatprep.subr.bf16.mxu0 0
  %3023 = vmatpush1.bf16.msra.mxu0 0
  %3024 = vmatprep.subr.bf16.mxu0 0
  %3025 = vmatpush1.bf16.msra.mxu0 0
  %3026 = vmatprep.subr.bf16.mxu0 0
  %3027 = vmatpush1.bf16.msra.mxu0 0
  %3028 = vmatprep.subr.bf16.mxu0 0
  %3029 = vmatpush1.bf16.msra.mxu0 0
  %3030 = vmatprep.subr.bf16.mxu0 0
  %3031 = vmatpush1.bf16.msra.mxu0 0
  %3032 = vmatprep.subr.bf16.mxu0 0
  %3033 = vmatpush1.bf16.msra.mxu0 0
  %3034 = vmatprep.mubr.bf16.mxu0 0
  %3035 = vmatmul.mubr.bf16.gmra.mrb[0].mxu0 %v3001
  %v3036 = vpop.f32.mrb[0].mxu0
  %v3037 = vadd.f32 0.0, %v3036
  %v3038 = vpop.f32.mrb[0].mxu0
  %v3039 = vadd.f32 0.0, %v3038
  %v3040 = vpop.f32.mrb[0].mxu0
  %v3041 = vpop.f32.mrb[0].mxu0
  %3042 = vdwg.mxu0
  %3043 = vmatprep.subr.bf16.mxu0 %v2129
  %3044 = vmatpush1.bf16.msra.mxu0 %v2128
  %3045 = vmatprep.subr.bf16.mxu0 %v2133
  %3046 = vmatpush1.bf16.msra.mxu0 %v2132
  %3047 = vmatprep.subr.bf16.mxu0 %v2137
  %3048 = vmatpush1.bf16.msra.mxu0 %v2136
  %3049 = vmatprep.subr.bf16.mxu0 %v2141
  %3050 = vmatpush1.bf16.msra.mxu0 %v2140
  %3051 = vmatprep.subr.bf16.mxu0 %v2145
  %3052 = vmatpush1.bf16.msra.mxu0 %v2144
  %3053 = vmatprep.subr.bf16.mxu0 %v2149
  %3054 = vmatpush1.bf16.msra.mxu0 %v2148
  %3055 = vmatprep.subr.bf16.mxu0 %v2153
  %3056 = vmatpush1.bf16.msra.mxu0 %v2152
  %3057 = vmatprep.subr.bf16.mxu0 %v2157
  %3058 = vmatpush1.bf16.msra.mxu0 %v2156
  %3059 = vmatprep.subr.bf16.mxu0 0
  %3060 = vmatpush1.bf16.msra.mxu0 0
  %3061 = vmatprep.subr.bf16.mxu0 0
  %3062 = vmatpush1.bf16.msra.mxu0 0
  %3063 = vmatprep.subr.bf16.mxu0 0
  %3064 = vmatpush1.bf16.msra.mxu0 0
  %3065 = vmatprep.subr.bf16.mxu0 0
  %3066 = vmatpush1.bf16.msra.mxu0 0
  %3067 = vmatprep.subr.bf16.mxu0 0
  %3068 = vmatpush1.bf16.msra.mxu0 0
  %3069 = vmatprep.subr.bf16.mxu0 0
  %3070 = vmatpush1.bf16.msra.mxu0 0
  %3071 = vmatprep.subr.bf16.mxu0 0
  %3072 = vmatpush1.bf16.msra.mxu0 0
  %3073 = vmatprep.subr.bf16.mxu0 0
  %3074 = vmatpush1.bf16.msra.mxu0 0
  %3075 = vmatprep.mubr.bf16.mxu0 0
  %3076 = vmatmul.mubr.bf16.gmra.mrb[0].mxu0 %v3001
  %v3077 = vpop.f32.mrb[0].mxu0
  %v3078 = vadd.f32 0.0, %v3077
  %v3079 = vpop.f32.mrb[0].mxu0
  %v3080 = vadd.f32 0.0, %v3079
  %v3081 = vpop.f32.mrb[0].mxu0
  %v3082 = vpop.f32.mrb[0].mxu0
  %3083 = vdwg.mxu0
  %v3084 = vadd.f32 %v2997, %v3037
  %v3085 = vadd.f32 %v2998, %v3039
  %v3086 = vadd.f32 %v2999, %v3078
  %v3087 = vadd.f32 %v3000, %v3080
  %v3088 = vxor.u32 %v3084, 2147483648
  %v3089 = vmul.f32 %v3088, 1.442695
  %v3090 = vpow.pop %v3089
  %v3091 = vadd.f32 %v3090, 1.0
  %v3092 = vrcp.pop %v3091
  %v3093 = vmul.f32 1.0, %v3092
  %v3094 = vxor.u32 %v3085, 2147483648
  %v3095 = vmul.f32 %v3094, 1.442695
  %v3096 = vpow.pop %v3095
  %v3097 = vadd.f32 %v3096, 1.0
  %v3098 = vrcp.pop %v3097
  %v3099 = vmul.f32 1.0, %v3098
  %v3100 = vtanh.pop %v3086
  %v3101 = vxor.u32 %v3087, 2147483648
  %v3102 = vmul.f32 %v3101, 1.442695
  %v3103 = vpow.pop %v3102
  %v3104 = vadd.f32 %v3103, 1.0
  %v3105 = vrcp.pop %v3104
  %v3106 = vmul.f32 1.0, %v3105
  %v3107 = vmul.f32 %v3099, %v2993
  %v3108 = vmul.f32 %v3093, %v3100
  %v3109 = vadd.f32 %v3107, %v3108
  %v3110 = vtanh.pop %v3109
  %v3111 = vmul.f32 %v3106, %v3110
  %3112 = vst [vmem:[%s4 + $0x38] sm:$0xff] %v3111
  %3113 = vst [vmem:[%s2021] sm:$0xff] %v3111
  %3114 = vst [vmem:[%s2023] sm:$0xff] %v3109
  // Predicated region
  $region22: #{encoder_forward.1} parent=0 // pred_check
    %p3115 = pneg %p21
  $region23: #{encoder_forward.1} parent=0 // pred_check_branch
    %3117 = sbr.rel (%p3115) target = $region25
  $region24: #{encoder_forward.1} parent=0 // pred_region
    %v3118 = vld [vmem:[#allocation2] sm:$0xff]
    %v3119 = vld [vmem:[#allocation2 + $0x8] sm:$0xff]
    %3120 = vst [vmem:[%s5] sm:$0xff] %v3118
    %3121 = vst [vmem:[%s5 + $0x8] sm:$0xff] %v3119
    %v3122 = vld [vmem:[#allocation3] sm:$0xff]
    %v3123 = vld [vmem:[#allocation3 + $0x8] sm:$0xff]
    %3124 = vst [vmem:[%s6] sm:$0xff] %v3122
    %3125 = vst [vmem:[%s6 + $0x8] sm:$0xff] %v3123
  $region25: #{encoder_forward.1} parent=0 // pred_fallthru
    _
  // Predicated region
  $region26: #{encoder_forward.1} parent=0 // pred_check
    _
  $region27: #{encoder_forward.1} parent=0 // pred_check_branch
    %3127 = sbr.rel (0) target = $region29
  $region28: #{encoder_forward.1} parent=0 // pred_region
    _
  $region29: #{encoder_forward.1} parent=0 // pred_fallthru
    _
  // Predicated region
  $region30: #{encoder_forward.1} parent=0 // pred_check
    _
  $region31: #{encoder_forward.1} parent=0 // pred_check_branch
    %3129 = sbr.rel (0) target = $region33
  $region32: #{encoder_forward.1} parent=0 // pred_region
    _
  $region33: #{encoder_forward.1} parent=0 // pred_fallthru
    _
  // Predicated region
  $region34: #{encoder_forward.1} parent=0 // pred_check
    _
  $region35: #{encoder_forward.1} parent=0 // pred_check_branch
    %3131 = sbr.rel (0) target = $region37
  $region36: #{encoder_forward.1} parent=0 // pred_region
    _
  $region37: #{encoder_forward.1} parent=0 // pred_fallthru
    _
  // Predicated region
  $region38: #{encoder_forward.1} parent=0 // pred_check
    _
  $region39: #{encoder_forward.1} parent=0 // pred_check_branch
    %3133 = sbr.rel (0) target = $region41
  $region40: #{encoder_forward.1} parent=0 // pred_region
    _
  $region41: #{encoder_forward.1} parent=0 // pred_fallthru
    _
  // Predicated region
  $region42: #{encoder_forward.1} parent=0 // pred_check
    _
  $region43: #{encoder_forward.1} parent=0 // pred_check_branch
    %3135 = sbr.rel (0) target = $region45
  $region44: #{encoder_forward.1} parent=0 // pred_region
    _
  $region45: #{encoder_forward.1} parent=0 // pred_fallthru
    _
  // Predicated region
  $region46: #{encoder_forward.1} parent=0 // pred_check
    _
  $region47: #{encoder_forward.1} parent=0 // pred_check_branch
    %3137 = sbr.rel (0) target = $region49
  $region48: #{encoder_forward.1} parent=0 // pred_region
    _
  $region49: #{encoder_forward.1} parent=0 // pred_fallthru
    _

</llo_original>
